<compile_context>
chip_gen: v5e
topology: v5e:2x2
jax: 0.10.0
libtpu: 0.0.40
codegen_flags: <defaults>
</compile_context>

<pallas_src>
import functools

import jax
import jax.numpy as jnp
import numpy as np
from jax import lax
from jax.experimental import pallas as pl
from jax.experimental.pallas import tpu as pltpu  # noqa: F401  (TPU backend)

_HIGHEST = jax.lax.Precision.HIGHEST


# ----------------------------------------------------------------------------
# Trace-time (numpy) construction of the per-image 0/1 gather matrices.
# g[k, o, i] = 1  iff output position o reads input position i under tap k.
# Out-of-range taps simply match nothing -> exact zero padding.
# ----------------------------------------------------------------------------
@functools.lru_cache(maxsize=None)
def _gather_mats(hi, wi, ho, wo, stride, pad):
    g = np.zeros((9, ho * wo, hi * wi), np.float32)
    for kh in range(3):
        for kw in range(3):
            k = kh * 3 + kw
            for oh in range(ho):
                ih = oh * stride - pad + kh
                if not (0 <= ih < hi):
                    continue
                for ow in range(wo):
                    iw = ow * stride - pad + kw
                    if 0 <= iw < wi:
                        g[k, oh * wo + ow, ih * wi + iw] = 1.0
    return g


# ----------------------------------------------------------------------------
# Fused Pallas kernel: conv1 + relu + conv2 + BN + relu + conv3 + relu
# Activations live as 2-D (rows = image-major flattened (n, h, w), cols = C).
# ----------------------------------------------------------------------------
def _fused_encoder_kernel(p1_ref, w1_ref, b1_ref, w2_ref, g2_ref,
                          gamma_ref, beta_ref, w3_ref, g3_ref, b3_ref,
                          o_ref, *, n, s1, s2, s3, eps):
    f32 = jnp.float32

    def dot_w(a, b):            # real numerics: exact f32 path
        return jnp.dot(a, b, preferred_element_type=f32, precision=_HIGHEST)

    def dot_g(a, b):            # 0/1 gather: single bf16 MXU pass is enough
        return jnp.dot(a, b, preferred_element_type=f32)

    # ---- layer 1: Conv2d(1, 8, 3, s=2, p=1) + ReLU -----------------------
    # p1_ref: (n*s1, 9) im2col of the input (Cin == 1); w1_ref: (9, 8).
    y1 = jnp.maximum(dot_w(p1_ref[...], w1_ref[...]) + b1_ref[...], 0.0)

    # ---- conv as (one weight dot) + (9 per-tap gather dots per image) ----
    # Z = y @ concat_k(W_k): columns ordered (tap k, cout).  For each image
    # and tap, a precomputed (s_out, s_in) 0/1 matrix selects the shifted
    # rows of the matching lane slice of Z.  No reshapes, no iota math.
    def conv(y, wcat_ref, gs_ref, s_in, s_out):
        c_out = wcat_ref.shape[-1] // 9
        z = dot_w(y, wcat_ref[...])                       # (n*s_in, 9*c_out)
        outs = []
        for i in range(n):                                # static unroll (tiny n)
            zi = z[i * s_in:(i + 1) * s_in, :]            # (s_in, 9*c_out)
            acc = dot_g(gs_ref[0], zi[:, :c_out])
            for k in range(1, 9):
                acc = acc + dot_g(gs_ref[k], zi[:, k * c_out:(k + 1) * c_out])
            outs.append(acc)                              # (s_out, c_out)
        return outs

    # ---- layer 2: Conv2d(8, 16, 3, s=2, p=1) + BatchNorm2d(16) + ReLU ----
    a2 = jnp.concatenate(conv(y1, w2_ref, g2_ref, s1, s2), axis=0)  # (n*s2, 16)
    # Conv-2 bias omitted on purpose: cancelled exactly by the BN mean
    # subtraction.  BN (training mode, biased variance) folded to scale/shift.
    mu = jnp.mean(a2, axis=0, keepdims=True)
    var = jnp.mean(jnp.square(a2 - mu), axis=0, keepdims=True)
    scale = gamma_ref[...] * lax.rsqrt(var + eps)
    shift = beta_ref[...] - mu * scale
    y2 = jnp.maximum(a2 * scale + shift, 0.0)

    # ---- layer 3: Conv2d(16, d, 3, s=1, p=0) + ReLU -----------------------
    outs3 = conv(y2, w3_ref, g3_ref, s2, s3)
    for i in range(n):                                    # per-image store
        o_ref[i] = jnp.maximum(outs3[i] + b3_ref[...], 0.0)


# ----------------------------------------------------------------------------
# One-time weight packing (out of the per-call hot path).
# ----------------------------------------------------------------------------
def pack_params(params):
    """Pack torch-layout params into the kernel layouts. Call ONCE at init."""
    d = params["w3"].shape[0]
    w2cat = (jnp.transpose(params["w2"], (2, 3, 1, 0))      # (3,3,8,16)
             .reshape(9, 8, 16).transpose(1, 0, 2).reshape(8, 9 * 16))
    w3cat = (jnp.transpose(params["w3"], (2, 3, 1, 0))      # (3,3,16,d)
             .reshape(9, 16, d).transpose(1, 0, 2).reshape(16, 9 * d))
    return {
        "w1": params["w1"].reshape(8, 9).T,                  # (9, 8)
        "b1": params["b1"].reshape(1, 8),
        "w2": w2cat,                                         # (8, 144), cols (k, cout)
        "gamma": params["gamma"].reshape(1, 16),
        "beta": params["beta"].reshape(1, 16),
        "w3": w3cat,                                         # (16, 9*d), cols (k, cout)
        "b3": params["b3"].reshape(1, d),
    }


# ----------------------------------------------------------------------------
# Wrapper: layer-1 im2col (tiny, Cin=1), trace-time gather constants,
# single gridless pallas_call, one layout op back to NCHW.
# ----------------------------------------------------------------------------
def proto_encoder_forward(x, packed):
    """x: (N, 1, H, W) float32 NCHW  ->  (N, d, H3, W3) NCHW."""
    n, _, h, w = x.shape
    d = packed["b3"].shape[-1]
    oh1, ow1 = (h - 1) // 2 + 1, (w - 1) // 2 + 1        # 3x3, s=2, p=1
    oh2, ow2 = (oh1 - 1) // 2 + 1, (ow1 - 1) // 2 + 1    # 3x3, s=2, p=1
    oh3, ow3 = oh2 - 2, ow2 - 2                          # 3x3, s=1, p=0
    s1, s2, s3 = oh1 * ow1, oh2 * ow2, oh3 * ow3

    # Per-image 0/1 gather constants (numpy, trace time only -> jit constants).
    g2 = _gather_mats(oh1, ow1, oh2, ow2, 2, 1)          # (9, s2, s1)
    g3 = _gather_mats(oh2, ow2, oh3, ow3, 1, 0)          # (9, s3, s2)

    # Layer-1 im2col on the external input (Cin = 1): rows ordered (n, h1, w1),
    # cols ordered (kh, kw).  A handful of tiny fused XLA slices.
    xpad = jnp.pad(x[:, 0], ((0, 0), (1, 1), (1, 1)))
    cols = [xpad[:, kh:kh + 2 * oh1:2, kw:kw + 2 * ow1:2]
            for kh in range(3) for kw in range(3)]
    p1 = jnp.stack(cols, axis=-1).reshape(n * s1, 9)

    kernel = functools.partial(_fused_encoder_kernel,
                               n=n, s1=s1, s2=s2, s3=s3, eps=1e-5)

    out = pl.pallas_call(
        kernel,
        out_shape=jax.ShapeDtypeStruct((n, s3, d), jnp.float32),
        in_specs=[
            pl.BlockSpec((n * s1, 9), lambda: (0, 0)),
            pl.BlockSpec((9, 8), lambda: (0, 0)),
            pl.BlockSpec((1, 8), lambda: (0, 0)),
            pl.BlockSpec((8, 9 * 16), lambda: (0, 0)),
            pl.BlockSpec((9, s2, s1), lambda: (0, 0, 0)),
            pl.BlockSpec((1, 16), lambda: (0, 0)),
            pl.BlockSpec((1, 16), lambda: (0, 0)),
            pl.BlockSpec((16, 9 * d), lambda: (0, 0)),
            pl.BlockSpec((9, s3, s2), lambda: (0, 0, 0)),
            pl.BlockSpec((1, d), lambda: (0, 0)),
        ],
        out_specs=pl.BlockSpec((n, s3, d), lambda: (0, 0, 0)),
    )(p1, packed["w1"], packed["b1"], packed["w2"], g2,
      packed["gamma"], packed["beta"], packed["w3"], g3, packed["b3"])

    # Single tiny layout op back to the PyTorch NCHW convention.
    # TODO(synk): if d / spatial grow, emit a lane-dense output layout instead.
    return out.reshape(n, oh3, ow3, d).transpose(0, 3, 1, 2)


# ----------------------------------------------------------------------------
# Pure-JAX reference (f32, HIGHEST precision) for the correctness check.
# ----------------------------------------------------------------------------
def ref_forward(x, params):
    def conv(z, wgt, b, stride, pad):
        y = lax.conv_general_dilated(
            z, wgt, (stride, stride), [(pad, pad), (pad, pad)],
            dimension_numbers=("NCHW", "OIHW", "NCHW"),
            precision=_HIGHEST)
        return y + b.reshape(1, -1, 1, 1)

    y = jax.nn.relu(conv(x, params["w1"], params["b1"], 2, 1))
    y = conv(y, params["w2"], params["b2"], 2, 1)
    mean = y.mean(axis=(0, 2, 3), keepdims=True)
    var = jnp.square(y - mean).mean(axis=(0, 2, 3), keepdims=True)
    y = (y - mean) / jnp.sqrt(var + 1e-5)
    y = y * params["gamma"].reshape(1, -1, 1, 1) + params["beta"].reshape(1, -1, 1, 1)
    y = jax.nn.relu(y)
    y = jax.nn.relu(conv(y, params["w3"], params["b3"], 1, 0))
    return y


# ----------------------------------------------------------------------------
def init_params(key, encoded_space_dim):
    ks = jax.random.split(key, 6)

    def uinit(k, shape, fan_in):
        bound = 1.0 / np.sqrt(fan_in)
        return jax.random.uniform(k, shape, jnp.float32, -bound, bound)

    d = encoded_space_dim
    return {
        "w1": uinit(ks[0], (8, 1, 3, 3), 1 * 9),
        "b1": uinit(ks[1], (8,), 1 * 9),
        "w2": uinit(ks[2], (16, 8, 3, 3), 8 * 9),
        "b2": uinit(ks[3], (16,), 8 * 9),   # only used by the reference; BN cancels it
        "w3": uinit(ks[4], (d, 16, 3, 3), 16 * 9),
        "b3": uinit(ks[5], (d,), 16 * 9),
        "gamma": jnp.ones((16,), jnp.float32),   # BatchNorm2d default init
        "beta": jnp.zeros((16,), jnp.float32),
    }


if __name__ == "__main__":
    encoded_space_dim = 8
    key = jax.random.PRNGKey(0)
    k_x, k_p = jax.random.split(key)

    x = jax.random.normal(k_x, (2, 1, 16, 16), jnp.float32)  # NCHW, MNIST-like
    params = init_params(k_p, encoded_space_dim)
    packed = pack_params(params)          # one-time packing, outside the hot path

    out = jax.block_until_ready(jax.jit(proto_encoder_forward)(x, packed))

    ref = ref_forward(x, params)
    assert out.shape == ref.shape == (2, encoded_space_dim, 2, 2), out.shape
    # Weight matmuls are exact f32 (HIGHEST); the 0/1 gather matmuls run a
    # single bf16 MXU pass (review-sanctioned), so the gathered activations
    # carry <= 2^-9 relative rounding -> tolerance loosened accordingly.
    np.testing.assert_allclose(np.asarray(out), np.asarray(ref),
                               rtol=1e-2, atol=1e-2)

    print("KERNEL_OK")
</pallas_src>

<mosaic_0001>
module attributes {stable_mosaic.version = 11 : i64} {
  func.func @_fused_encoder_kernel(%arg0: memref<128x9xf32, #tpu.memory_space<vmem>>, %arg1: memref<9x8xf32, #tpu.memory_space<vmem>>, %arg2: memref<1x8xf32, #tpu.memory_space<vmem>>, %arg3: memref<8x144xf32, #tpu.memory_space<vmem>>, %arg4: memref<9x16x64xf32, #tpu.memory_space<vmem>>, %arg5: memref<1x16xf32, #tpu.memory_space<vmem>>, %arg6: memref<1x16xf32, #tpu.memory_space<vmem>>, %arg7: memref<16x72xf32, #tpu.memory_space<vmem>>, %arg8: memref<9x4x16xf32, #tpu.memory_space<vmem>>, %arg9: memref<1x8xf32, #tpu.memory_space<vmem>>, %arg10: memref<2x4x8xf32, #tpu.memory_space<vmem>>) attributes {dimension_semantics = [], scalar_prefetch = 0 : i64, scratch_operands = 0 : i64, tpu.core_type = #tpu.core_type<tc>} {
    %c0 = arith.constant 0 : index
    %c0_0 = arith.constant 0 : index
    %0 = vector.load %arg0[%c0, %c0_0] : memref<128x9xf32, #tpu.memory_space<vmem>>, vector<128x9xf32>
    %c0_1 = arith.constant 0 : index
    %c0_2 = arith.constant 0 : index
    %1 = vector.load %arg1[%c0_1, %c0_2] : memref<9x8xf32, #tpu.memory_space<vmem>>, vector<9x8xf32>
    %cst = arith.constant dense<0.000000e+00> : vector<128x8xf32>
    %2 = tpu.matmul %0, %1, %cst {dimension_numbers = #tpu.dot_dimension_numbers<[1], [0], [0], [1], [0, 0, 1, 1], [], []>, precision = #tpu.contract_precision<fp32>} : vector<128x9xf32>, vector<9x8xf32>, vector<128x8xf32> -> vector<128x8xf32>
    %c0_3 = arith.constant 0 : index
    %c0_4 = arith.constant 0 : index
    %3 = vector.load %arg2[%c0_3, %c0_4] : memref<1x8xf32, #tpu.memory_space<vmem>>, vector<1x8xf32>
    %4 = vector.broadcast %3 : vector<1x8xf32> to vector<128x8xf32>
    %5 = arith.addf %2, %4 : vector<128x8xf32>
    %cst_5 = arith.constant 0.000000e+00 : f32
    %6 = vector.broadcast %cst_5 : f32 to vector<128x8xf32>
    %7 = arith.maximumf %5, %6 : vector<128x8xf32>
    %c0_6 = arith.constant 0 : index
    %c0_7 = arith.constant 0 : index
    %8 = vector.load %arg3[%c0_6, %c0_7] : memref<8x144xf32, #tpu.memory_space<vmem>>, vector<8x144xf32>
    %cst_8 = arith.constant dense<0.000000e+00> : vector<128x144xf32>
    %9 = tpu.matmul %7, %8, %cst_8 {dimension_numbers = #tpu.dot_dimension_numbers<[1], [0], [0], [1], [0, 0, 1, 1], [], []>, precision = #tpu.contract_precision<fp32>} : vector<128x8xf32>, vector<8x144xf32>, vector<128x144xf32> -> vector<128x144xf32>
    %10 = vector.extract_strided_slice %9 {offsets = [0, 0], sizes = [64, 144], strides = [1, 1]} : vector<128x144xf32> to vector<64x144xf32>
    %c0_9 = arith.constant 0 : index
    %c0_10 = arith.constant 0 : index
    %c0_11 = arith.constant 0 : index
    %11 = vector.load %arg4[%c0_9, %c0_10, %c0_11] : memref<9x16x64xf32, #tpu.memory_space<vmem>>, vector<1x16x64xf32>
    %12 = vector.shape_cast %11 : vector<1x16x64xf32> to vector<16x64xf32>
    %13 = vector.extract_strided_slice %10 {offsets = [0, 0], sizes = [64, 16], strides = [1, 1]} : vector<64x144xf32> to vector<64x16xf32>
    %cst_12 = arith.constant dense<0.000000e+00> : vector<16x16xf32>
    %14 = tpu.matmul %12, %13, %cst_12 {dimension_numbers = #tpu.dot_dimension_numbers<[1], [0], [0], [1], [0, 0, 1, 1], [], []>} : vector<16x64xf32>, vector<64x16xf32>, vector<16x16xf32> -> vector<16x16xf32>
    %c1 = arith.constant 1 : index
    %c0_13 = arith.constant 0 : index
    %c0_14 = arith.constant 0 : index
    %15 = vector.load %arg4[%c1, %c0_13, %c0_14] : memref<9x16x64xf32, #tpu.memory_space<vmem>>, vector<1x16x64xf32>
    %16 = vector.shape_cast %15 : vector<1x16x64xf32> to vector<16x64xf32>
    %17 = vector.extract_strided_slice %10 {offsets = [0, 16], sizes = [64, 16], strides = [1, 1]} : vector<64x144xf32> to vector<64x16xf32>
    %cst_15 = arith.constant dense<0.000000e+00> : vector<16x16xf32>
    %18 = tpu.matmul %16, %17, %cst_15 {dimension_numbers = #tpu.dot_dimension_numbers<[1], [0], [0], [1], [0, 0, 1, 1], [], []>} : vector<16x64xf32>, vector<64x16xf32>, vector<16x16xf32> -> vector<16x16xf32>
    %19 = arith.addf %14, %18 : vector<16x16xf32>
    %c2 = arith.constant 2 : index
    %c0_16 = arith.constant 0 : index
    %c0_17 = arith.constant 0 : index
    %20 = vector.load %arg4[%c2, %c0_16, %c0_17] : memref<9x16x64xf32, #tpu.memory_space<vmem>>, vector<1x16x64xf32>
    %21 = vector.shape_cast %20 : vector<1x16x64xf32> to vector<16x64xf32>
    %22 = vector.extract_strided_slice %10 {offsets = [0, 32], sizes = [64, 16], strides = [1, 1]} : vector<64x144xf32> to vector<64x16xf32>
    %cst_18 = arith.constant dense<0.000000e+00> : vector<16x16xf32>
    %23 = tpu.matmul %21, %22, %cst_18 {dimension_numbers = #tpu.dot_dimension_numbers<[1], [0], [0], [1], [0, 0, 1, 1], [], []>} : vector<16x64xf32>, vector<64x16xf32>, vector<16x16xf32> -> vector<16x16xf32>
    %24 = arith.addf %19, %23 : vector<16x16xf32>
    %c3 = arith.constant 3 : index
    %c0_19 = arith.constant 0 : index
    %c0_20 = arith.constant 0 : index
    %25 = vector.load %arg4[%c3, %c0_19, %c0_20] : memref<9x16x64xf32, #tpu.memory_space<vmem>>, vector<1x16x64xf32>
    %26 = vector.shape_cast %25 : vector<1x16x64xf32> to vector<16x64xf32>
    %27 = vector.extract_strided_slice %10 {offsets = [0, 48], sizes = [64, 16], strides = [1, 1]} : vector<64x144xf32> to vector<64x16xf32>
    %cst_21 = arith.constant dense<0.000000e+00> : vector<16x16xf32>
    %28 = tpu.matmul %26, %27, %cst_21 {dimension_numbers = #tpu.dot_dimension_numbers<[1], [0], [0], [1], [0, 0, 1, 1], [], []>} : vector<16x64xf32>, vector<64x16xf32>, vector<16x16xf32> -> vector<16x16xf32>
    %29 = arith.addf %24, %28 : vector<16x16xf32>
    %c4 = arith.constant 4 : index
    %c0_22 = arith.constant 0 : index
    %c0_23 = arith.constant 0 : index
    %30 = vector.load %arg4[%c4, %c0_22, %c0_23] : memref<9x16x64xf32, #tpu.memory_space<vmem>>, vector<1x16x64xf32>
    %31 = vector.shape_cast %30 : vector<1x16x64xf32> to vector<16x64xf32>
    %32 = vector.extract_strided_slice %10 {offsets = [0, 64], sizes = [64, 16], strides = [1, 1]} : vector<64x144xf32> to vector<64x16xf32>
    %cst_24 = arith.constant dense<0.000000e+00> : vector<16x16xf32>
    %33 = tpu.matmul %31, %32, %cst_24 {dimension_numbers = #tpu.dot_dimension_numbers<[1], [0], [0], [1], [0, 0, 1, 1], [], []>} : vector<16x64xf32>, vector<64x16xf32>, vector<16x16xf32> -> vector<16x16xf32>
    %34 = arith.addf %29, %33 : vector<16x16xf32>
    %c5 = arith.constant 5 : index
    %c0_25 = arith.constant 0 : index
    %c0_26 = arith.constant 0 : index
    %35 = vector.load %arg4[%c5, %c0_25, %c0_26] : memref<9x16x64xf32, #tpu.memory_space<vmem>>, vector<1x16x64xf32>
    %36 = vector.shape_cast %35 : vector<1x16x64xf32> to vector<16x64xf32>
    %37 = vector.extract_strided_slice %10 {offsets = [0, 80], sizes = [64, 16], strides = [1, 1]} : vector<64x144xf32> to vector<64x16xf32>
    %cst_27 = arith.constant dense<0.000000e+00> : vector<16x16xf32>
    %38 = tpu.matmul %36, %37, %cst_27 {dimension_numbers = #tpu.dot_dimension_numbers<[1], [0], [0], [1], [0, 0, 1, 1], [], []>} : vector<16x64xf32>, vector<64x16xf32>, vector<16x16xf32> -> vector<16x16xf32>
    %39 = arith.addf %34, %38 : vector<16x16xf32>
    %c6 = arith.constant 6 : index
    %c0_28 = arith.constant 0 : index
    %c0_29 = arith.constant 0 : index
    %40 = vector.load %arg4[%c6, %c0_28, %c0_29] : memref<9x16x64xf32, #tpu.memory_space<vmem>>, vector<1x16x64xf32>
    %41 = vector.shape_cast %40 : vector<1x16x64xf32> to vector<16x64xf32>
    %42 = vector.extract_strided_slice %10 {offsets = [0, 96], sizes = [64, 16], strides = [1, 1]} : vector<64x144xf32> to vector<64x16xf32>
    %cst_30 = arith.constant dense<0.000000e+00> : vector<16x16xf32>
    %43 = tpu.matmul %41, %42, %cst_30 {dimension_numbers = #tpu.dot_dimension_numbers<[1], [0], [0], [1], [0, 0, 1, 1], [], []>} : vector<16x64xf32>, vector<64x16xf32>, vector<16x16xf32> -> vector<16x16xf32>
    %44 = arith.addf %39, %43 : vector<16x16xf32>
    %c7 = arith.constant 7 : index
    %c0_31 = arith.constant 0 : index
    %c0_32 = arith.constant 0 : index
    %45 = vector.load %arg4[%c7, %c0_31, %c0_32] : memref<9x16x64xf32, #tpu.memory_space<vmem>>, vector<1x16x64xf32>
    %46 = vector.shape_cast %45 : vector<1x16x64xf32> to vector<16x64xf32>
    %47 = vector.extract_strided_slice %10 {offsets = [0, 112], sizes = [64, 16], strides = [1, 1]} : vector<64x144xf32> to vector<64x16xf32>
    %cst_33 = arith.constant dense<0.000000e+00> : vector<16x16xf32>
    %48 = tpu.matmul %46, %47, %cst_33 {dimension_numbers = #tpu.dot_dimension_numbers<[1], [0], [0], [1], [0, 0, 1, 1], [], []>} : vector<16x64xf32>, vector<64x16xf32>, vector<16x16xf32> -> vector<16x16xf32>
    %49 = arith.addf %44, %48 : vector<16x16xf32>
    %c8 = arith.constant 8 : index
    %c0_34 = arith.constant 0 : index
    %c0_35 = arith.constant 0 : index
    %50 = vector.load %arg4[%c8, %c0_34, %c0_35] : memref<9x16x64xf32, #tpu.memory_space<vmem>>, vector<1x16x64xf32>
    %51 = vector.shape_cast %50 : vector<1x16x64xf32> to vector<16x64xf32>
    %52 = vector.extract_strided_slice %10 {offsets = [0, 128], sizes = [64, 16], strides = [1, 1]} : vector<64x144xf32> to vector<64x16xf32>
    %cst_36 = arith.constant dense<0.000000e+00> : vector<16x16xf32>
    %53 = tpu.matmul %51, %52, %cst_36 {dimension_numbers = #tpu.dot_dimension_numbers<[1], [0], [0], [1], [0, 0, 1, 1], [], []>} : vector<16x64xf32>, vector<64x16xf32>, vector<16x16xf32> -> vector<16x16xf32>
    %54 = arith.addf %49, %53 : vector<16x16xf32>
    %55 = vector.extract_strided_slice %9 {offsets = [64, 0], sizes = [64, 144], strides = [1, 1]} : vector<128x144xf32> to vector<64x144xf32>
    %c0_37 = arith.constant 0 : index
    %c0_38 = arith.constant 0 : index
    %c0_39 = arith.constant 0 : index
    %56 = vector.load %arg4[%c0_37, %c0_38, %c0_39] : memref<9x16x64xf32, #tpu.memory_space<vmem>>, vector<1x16x64xf32>
    %57 = vector.shape_cast %56 : vector<1x16x64xf32> to vector<16x64xf32>
    %58 = vector.extract_strided_slice %55 {offsets = [0, 0], sizes = [64, 16], strides = [1, 1]} : vector<64x144xf32> to vector<64x16xf32>
    %cst_40 = arith.constant dense<0.000000e+00> : vector<16x16xf32>
    %59 = tpu.matmul %57, %58, %cst_40 {dimension_numbers = #tpu.dot_dimension_numbers<[1], [0], [0], [1], [0, 0, 1, 1], [], []>} : vector<16x64xf32>, vector<64x16xf32>, vector<16x16xf32> -> vector<16x16xf32>
    %c1_41 = arith.constant 1 : index
    %c0_42 = arith.constant 0 : index
    %c0_43 = arith.constant 0 : index
    %60 = vector.load %arg4[%c1_41, %c0_42, %c0_43] : memref<9x16x64xf32, #tpu.memory_space<vmem>>, vector<1x16x64xf32>
    %61 = vector.shape_cast %60 : vector<1x16x64xf32> to vector<16x64xf32>
    %62 = vector.extract_strided_slice %55 {offsets = [0, 16], sizes = [64, 16], strides = [1, 1]} : vector<64x144xf32> to vector<64x16xf32>
    %cst_44 = arith.constant dense<0.000000e+00> : vector<16x16xf32>
    %63 = tpu.matmul %61, %62, %cst_44 {dimension_numbers = #tpu.dot_dimension_numbers<[1], [0], [0], [1], [0, 0, 1, 1], [], []>} : vector<16x64xf32>, vector<64x16xf32>, vector<16x16xf32> -> vector<16x16xf32>
    %64 = arith.addf %59, %63 : vector<16x16xf32>
    %c2_45 = arith.constant 2 : index
    %c0_46 = arith.constant 0 : index
    %c0_47 = arith.constant 0 : index
    %65 = vector.load %arg4[%c2_45, %c0_46, %c0_47] : memref<9x16x64xf32, #tpu.memory_space<vmem>>, vector<1x16x64xf32>
    %66 = vector.shape_cast %65 : vector<1x16x64xf32> to vector<16x64xf32>
    %67 = vector.extract_strided_slice %55 {offsets = [0, 32], sizes = [64, 16], strides = [1, 1]} : vector<64x144xf32> to vector<64x16xf32>
    %cst_48 = arith.constant dense<0.000000e+00> : vector<16x16xf32>
    %68 = tpu.matmul %66, %67, %cst_48 {dimension_numbers = #tpu.dot_dimension_numbers<[1], [0], [0], [1], [0, 0, 1, 1], [], []>} : vector<16x64xf32>, vector<64x16xf32>, vector<16x16xf32> -> vector<16x16xf32>
    %69 = arith.addf %64, %68 : vector<16x16xf32>
    %c3_49 = arith.constant 3 : index
    %c0_50 = arith.constant 0 : index
    %c0_51 = arith.constant 0 : index
    %70 = vector.load %arg4[%c3_49, %c0_50, %c0_51] : memref<9x16x64xf32, #tpu.memory_space<vmem>>, vector<1x16x64xf32>
    %71 = vector.shape_cast %70 : vector<1x16x64xf32> to vector<16x64xf32>
    %72 = vector.extract_strided_slice %55 {offsets = [0, 48], sizes = [64, 16], strides = [1, 1]} : vector<64x144xf32> to vector<64x16xf32>
    %cst_52 = arith.constant dense<0.000000e+00> : vector<16x16xf32>
    %73 = tpu.matmul %71, %72, %cst_52 {dimension_numbers = #tpu.dot_dimension_numbers<[1], [0], [0], [1], [0, 0, 1, 1], [], []>} : vector<16x64xf32>, vector<64x16xf32>, vector<16x16xf32> -> vector<16x16xf32>
    %74 = arith.addf %69, %73 : vector<16x16xf32>
    %c4_53 = arith.constant 4 : index
    %c0_54 = arith.constant 0 : index
    %c0_55 = arith.constant 0 : index
    %75 = vector.load %arg4[%c4_53, %c0_54, %c0_55] : memref<9x16x64xf32, #tpu.memory_space<vmem>>, vector<1x16x64xf32>
    %76 = vector.shape_cast %75 : vector<1x16x64xf32> to vector<16x64xf32>
    %77 = vector.extract_strided_slice %55 {offsets = [0, 64], sizes = [64, 16], strides = [1, 1]} : vector<64x144xf32> to vector<64x16xf32>
    %cst_56 = arith.constant dense<0.000000e+00> : vector<16x16xf32>
    %78 = tpu.matmul %76, %77, %cst_56 {dimension_numbers = #tpu.dot_dimension_numbers<[1], [0], [0], [1], [0, 0, 1, 1], [], []>} : vector<16x64xf32>, vector<64x16xf32>, vector<16x16xf32> -> vector<16x16xf32>
    %79 = arith.addf %74, %78 : vector<16x16xf32>
    %c5_57 = arith.constant 5 : index
    %c0_58 = arith.constant 0 : index
    %c0_59 = arith.constant 0 : index
    %80 = vector.load %arg4[%c5_57, %c0_58, %c0_59] : memref<9x16x64xf32, #tpu.memory_space<vmem>>, vector<1x16x64xf32>
    %81 = vector.shape_cast %80 : vector<1x16x64xf32> to vector<16x64xf32>
    %82 = vector.extract_strided_slice %55 {offsets = [0, 80], sizes = [64, 16], strides = [1, 1]} : vector<64x144xf32> to vector<64x16xf32>
    %cst_60 = arith.constant dense<0.000000e+00> : vector<16x16xf32>
    %83 = tpu.matmul %81, %82, %cst_60 {dimension_numbers = #tpu.dot_dimension_numbers<[1], [0], [0], [1], [0, 0, 1, 1], [], []>} : vector<16x64xf32>, vector<64x16xf32>, vector<16x16xf32> -> vector<16x16xf32>
    %84 = arith.addf %79, %83 : vector<16x16xf32>
    %c6_61 = arith.constant 6 : index
    %c0_62 = arith.constant 0 : index
    %c0_63 = arith.constant 0 : index
    %85 = vector.load %arg4[%c6_61, %c0_62, %c0_63] : memref<9x16x64xf32, #tpu.memory_space<vmem>>, vector<1x16x64xf32>
    %86 = vector.shape_cast %85 : vector<1x16x64xf32> to vector<16x64xf32>
    %87 = vector.extract_strided_slice %55 {offsets = [0, 96], sizes = [64, 16], strides = [1, 1]} : vector<64x144xf32> to vector<64x16xf32>
    %cst_64 = arith.constant dense<0.000000e+00> : vector<16x16xf32>
    %88 = tpu.matmul %86, %87, %cst_64 {dimension_numbers = #tpu.dot_dimension_numbers<[1], [0], [0], [1], [0, 0, 1, 1], [], []>} : vector<16x64xf32>, vector<64x16xf32>, vector<16x16xf32> -> vector<16x16xf32>
    %89 = arith.addf %84, %88 : vector<16x16xf32>
    %c7_65 = arith.constant 7 : index
    %c0_66 = arith.constant 0 : index
    %c0_67 = arith.constant 0 : index
    %90 = vector.load %arg4[%c7_65, %c0_66, %c0_67] : memref<9x16x64xf32, #tpu.memory_space<vmem>>, vector<1x16x64xf32>
    %91 = vector.shape_cast %90 : vector<1x16x64xf32> to vector<16x64xf32>
    %92 = vector.extract_strided_slice %55 {offsets = [0, 112], sizes = [64, 16], strides = [1, 1]} : vector<64x144xf32> to vector<64x16xf32>
    %cst_68 = arith.constant dense<0.000000e+00> : vector<16x16xf32>
    %93 = tpu.matmul %91, %92, %cst_68 {dimension_numbers = #tpu.dot_dimension_numbers<[1], [0], [0], [1], [0, 0, 1, 1], [], []>} : vector<16x64xf32>, vector<64x16xf32>, vector<16x16xf32> -> vector<16x16xf32>
    %94 = arith.addf %89, %93 : vector<16x16xf32>
    %c8_69 = arith.constant 8 : index
    %c0_70 = arith.constant 0 : index
    %c0_71 = arith.constant 0 : index
    %95 = vector.load %arg4[%c8_69, %c0_70, %c0_71] : memref<9x16x64xf32, #tpu.memory_space<vmem>>, vector<1x16x64xf32>
    %96 = vector.shape_cast %95 : vector<1x16x64xf32> to vector<16x64xf32>
    %97 = vector.extract_strided_slice %55 {offsets = [0, 128], sizes = [64, 16], strides = [1, 1]} : vector<64x144xf32> to vector<64x16xf32>
    %cst_72 = arith.constant dense<0.000000e+00> : vector<16x16xf32>
    %98 = tpu.matmul %96, %97, %cst_72 {dimension_numbers = #tpu.dot_dimension_numbers<[1], [0], [0], [1], [0, 0, 1, 1], [], []>} : vector<16x64xf32>, vector<64x16xf32>, vector<16x16xf32> -> vector<16x16xf32>
    %99 = arith.addf %94, %98 : vector<16x16xf32>
    %100 = tpu.concatenate %54, %99 in 0 : vector<16x16xf32>, vector<16x16xf32> -> vector<32x16xf32>
    %cst_73 = arith.constant dense<0.000000e+00> : vector<16xf32>
    %101 = vector.multi_reduction <add>, %100, %cst_73 [0] : vector<32x16xf32> to vector<16xf32>
    %102 = vector.shape_cast %101 : vector<16xf32> to vector<1x16xf32>
    %cst_74 = arith.constant 3.200000e+01 : f32
    %103 = vector.broadcast %cst_74 : f32 to vector<1x16xf32>
    %104 = arith.divf %102, %103 : vector<1x16xf32>
    %105 = vector.broadcast %104 : vector<1x16xf32> to vector<32x16xf32>
    %106 = arith.subf %100, %105 : vector<32x16xf32>
    %107 = arith.mulf %106, %106 : vector<32x16xf32>
    %cst_75 = arith.constant dense<0.000000e+00> : vector<16xf32>
    %108 = vector.multi_reduction <add>, %107, %cst_75 [0] : vector<32x16xf32> to vector<16xf32>
    %109 = vector.shape_cast %108 : vector<16xf32> to vector<1x16xf32>
    %cst_76 = arith.constant 3.200000e+01 : f32
    %110 = vector.broadcast %cst_76 : f32 to vector<1x16xf32>
    %111 = arith.divf %109, %110 : vector<1x16xf32>
    %c0_77 = arith.constant 0 : index
    %c0_78 = arith.constant 0 : index
    %112 = vector.load %arg5[%c0_77, %c0_78] : memref<1x16xf32, #tpu.memory_space<vmem>>, vector<1x16xf32>
    %cst_79 = arith.constant 9.99999974E-6 : f32
    %113 = vector.broadcast %cst_79 : f32 to vector<1x16xf32>
    %114 = arith.addf %111, %113 : vector<1x16xf32>
    %115 = math.rsqrt %114 : vector<1x16xf32>
    %116 = arith.mulf %112, %115 : vector<1x16xf32>
    %c0_80 = arith.constant 0 : index
    %c0_81 = arith.constant 0 : index
    %117 = vector.load %arg6[%c0_80, %c0_81] : memref<1x16xf32, #tpu.memory_space<vmem>>, vector<1x16xf32>
    %118 = arith.mulf %104, %116 : vector<1x16xf32>
    %119 = arith.subf %117, %118 : vector<1x16xf32>
    %120 = vector.broadcast %116 : vector<1x16xf32> to vector<32x16xf32>
    %121 = arith.mulf %100, %120 : vector<32x16xf32>
    %122 = vector.broadcast %119 : vector<1x16xf32> to vector<32x16xf32>
    %123 = arith.addf %121, %122 : vector<32x16xf32>
    %cst_82 = arith.constant 0.000000e+00 : f32
    %124 = vector.broadcast %cst_82 : f32 to vector<32x16xf32>
    %125 = arith.maximumf %123, %124 : vector<32x16xf32>
    %c0_83 = arith.constant 0 : index
    %c0_84 = arith.constant 0 : index
    %126 = vector.load %arg7[%c0_83, %c0_84] : memref<16x72xf32, #tpu.memory_space<vmem>>, vector<16x72xf32>
    %cst_85 = arith.constant dense<0.000000e+00> : vector<32x72xf32>
    %127 = tpu.matmul %125, %126, %cst_85 {dimension_numbers = #tpu.dot_dimension_numbers<[1], [0], [0], [1], [0, 0, 1, 1], [], []>, precision = #tpu.contract_precision<fp32>} : vector<32x16xf32>, vector<16x72xf32>, vector<32x72xf32> -> vector<32x72xf32>
    %128 = vector.extract_strided_slice %127 {offsets = [0, 0], sizes = [16, 72], strides = [1, 1]} : vector<32x72xf32> to vector<16x72xf32>
    %c0_86 = arith.constant 0 : index
    %c0_87 = arith.constant 0 : index
    %c0_88 = arith.constant 0 : index
    %129 = vector.load %arg8[%c0_86, %c0_87, %c0_88] : memref<9x4x16xf32, #tpu.memory_space<vmem>>, vector<1x4x16xf32>
    %130 = vector.shape_cast %129 : vector<1x4x16xf32> to vector<4x16xf32>
    %131 = vector.extract_strided_slice %128 {offsets = [0, 0], sizes = [16, 8], strides = [1, 1]} : vector<16x72xf32> to vector<16x8xf32>
    %cst_89 = arith.constant dense<0.000000e+00> : vector<4x8xf32>
    %132 = tpu.matmul %130, %131, %cst_89 {dimension_numbers = #tpu.dot_dimension_numbers<[1], [0], [0], [1], [0, 0, 1, 1], [], []>} : vector<4x16xf32>, vector<16x8xf32>, vector<4x8xf32> -> vector<4x8xf32>
    %c1_90 = arith.constant 1 : index
    %c0_91 = arith.constant 0 : index
    %c0_92 = arith.constant 0 : index
    %133 = vector.load %arg8[%c1_90, %c0_91, %c0_92] : memref<9x4x16xf32, #tpu.memory_space<vmem>>, vector<1x4x16xf32>
    %134 = vector.shape_cast %133 : vector<1x4x16xf32> to vector<4x16xf32>
    %135 = vector.extract_strided_slice %128 {offsets = [0, 8], sizes = [16, 8], strides = [1, 1]} : vector<16x72xf32> to vector<16x8xf32>
    %cst_93 = arith.constant dense<0.000000e+00> : vector<4x8xf32>
    %136 = tpu.matmul %134, %135, %cst_93 {dimension_numbers = #tpu.dot_dimension_numbers<[1], [0], [0], [1], [0, 0, 1, 1], [], []>} : vector<4x16xf32>, vector<16x8xf32>, vector<4x8xf32> -> vector<4x8xf32>
    %137 = arith.addf %132, %136 : vector<4x8xf32>
    %c2_94 = arith.constant 2 : index
    %c0_95 = arith.constant 0 : index
    %c0_96 = arith.constant 0 : index
    %138 = vector.load %arg8[%c2_94, %c0_95, %c0_96] : memref<9x4x16xf32, #tpu.memory_space<vmem>>, vector<1x4x16xf32>
    %139 = vector.shape_cast %138 : vector<1x4x16xf32> to vector<4x16xf32>
    %140 = vector.extract_strided_slice %128 {offsets = [0, 16], sizes = [16, 8], strides = [1, 1]} : vector<16x72xf32> to vector<16x8xf32>
    %cst_97 = arith.constant dense<0.000000e+00> : vector<4x8xf32>
    %141 = tpu.matmul %139, %140, %cst_97 {dimension_numbers = #tpu.dot_dimension_numbers<[1], [0], [0], [1], [0, 0, 1, 1], [], []>} : vector<4x16xf32>, vector<16x8xf32>, vector<4x8xf32> -> vector<4x8xf32>
    %142 = arith.addf %137, %141 : vector<4x8xf32>
    %c3_98 = arith.constant 3 : index
    %c0_99 = arith.constant 0 : index
    %c0_100 = arith.constant 0 : index
    %143 = vector.load %arg8[%c3_98, %c0_99, %c0_100] : memref<9x4x16xf32, #tpu.memory_space<vmem>>, vector<1x4x16xf32>
    %144 = vector.shape_cast %143 : vector<1x4x16xf32> to vector<4x16xf32>
    %145 = vector.extract_strided_slice %128 {offsets = [0, 24], sizes = [16, 8], strides = [1, 1]} : vector<16x72xf32> to vector<16x8xf32>
    %cst_101 = arith.constant dense<0.000000e+00> : vector<4x8xf32>
    %146 = tpu.matmul %144, %145, %cst_101 {dimension_numbers = #tpu.dot_dimension_numbers<[1], [0], [0], [1], [0, 0, 1, 1], [], []>} : vector<4x16xf32>, vector<16x8xf32>, vector<4x8xf32> -> vector<4x8xf32>
    %147 = arith.addf %142, %146 : vector<4x8xf32>
    %c4_102 = arith.constant 4 : index
    %c0_103 = arith.constant 0 : index
    %c0_104 = arith.constant 0 : index
    %148 = vector.load %arg8[%c4_102, %c0_103, %c0_104] : memref<9x4x16xf32, #tpu.memory_space<vmem>>, vector<1x4x16xf32>
    %149 = vector.shape_cast %148 : vector<1x4x16xf32> to vector<4x16xf32>
    %150 = vector.extract_strided_slice %128 {offsets = [0, 32], sizes = [16, 8], strides = [1, 1]} : vector<16x72xf32> to vector<16x8xf32>
    %cst_105 = arith.constant dense<0.000000e+00> : vector<4x8xf32>
    %151 = tpu.matmul %149, %150, %cst_105 {dimension_numbers = #tpu.dot_dimension_numbers<[1], [0], [0], [1], [0, 0, 1, 1], [], []>} : vector<4x16xf32>, vector<16x8xf32>, vector<4x8xf32> -> vector<4x8xf32>
    %152 = arith.addf %147, %151 : vector<4x8xf32>
    %c5_106 = arith.constant 5 : index
    %c0_107 = arith.constant 0 : index
    %c0_108 = arith.constant 0 : index
    %153 = vector.load %arg8[%c5_106, %c0_107, %c0_108] : memref<9x4x16xf32, #tpu.memory_space<vmem>>, vector<1x4x16xf32>
    %154 = vector.shape_cast %153 : vector<1x4x16xf32> to vector<4x16xf32>
    %155 = vector.extract_strided_slice %128 {offsets = [0, 40], sizes = [16, 8], strides = [1, 1]} : vector<16x72xf32> to vector<16x8xf32>
    %cst_109 = arith.constant dense<0.000000e+00> : vector<4x8xf32>
    %156 = tpu.matmul %154, %155, %cst_109 {dimension_numbers = #tpu.dot_dimension_numbers<[1], [0], [0], [1], [0, 0, 1, 1], [], []>} : vector<4x16xf32>, vector<16x8xf32>, vector<4x8xf32> -> vector<4x8xf32>
    %157 = arith.addf %152, %156 : vector<4x8xf32>
    %c6_110 = arith.constant 6 : index
    %c0_111 = arith.constant 0 : index
    %c0_112 = arith.constant 0 : index
    %158 = vector.load %arg8[%c6_110, %c0_111, %c0_112] : memref<9x4x16xf32, #tpu.memory_space<vmem>>, vector<1x4x16xf32>
    %159 = vector.shape_cast %158 : vector<1x4x16xf32> to vector<4x16xf32>
    %160 = vector.extract_strided_slice %128 {offsets = [0, 48], sizes = [16, 8], strides = [1, 1]} : vector<16x72xf32> to vector<16x8xf32>
    %cst_113 = arith.constant dense<0.000000e+00> : vector<4x8xf32>
    %161 = tpu.matmul %159, %160, %cst_113 {dimension_numbers = #tpu.dot_dimension_numbers<[1], [0], [0], [1], [0, 0, 1, 1], [], []>} : vector<4x16xf32>, vector<16x8xf32>, vector<4x8xf32> -> vector<4x8xf32>
    %162 = arith.addf %157, %161 : vector<4x8xf32>
    %c7_114 = arith.constant 7 : index
    %c0_115 = arith.constant 0 : index
    %c0_116 = arith.constant 0 : index
    %163 = vector.load %arg8[%c7_114, %c0_115, %c0_116] : memref<9x4x16xf32, #tpu.memory_space<vmem>>, vector<1x4x16xf32>
    %164 = vector.shape_cast %163 : vector<1x4x16xf32> to vector<4x16xf32>
    %165 = vector.extract_strided_slice %128 {offsets = [0, 56], sizes = [16, 8], strides = [1, 1]} : vector<16x72xf32> to vector<16x8xf32>
    %cst_117 = arith.constant dense<0.000000e+00> : vector<4x8xf32>
    %166 = tpu.matmul %164, %165, %cst_117 {dimension_numbers = #tpu.dot_dimension_numbers<[1], [0], [0], [1], [0, 0, 1, 1], [], []>} : vector<4x16xf32>, vector<16x8xf32>, vector<4x8xf32> -> vector<4x8xf32>
    %167 = arith.addf %162, %166 : vector<4x8xf32>
    %c8_118 = arith.constant 8 : index
    %c0_119 = arith.constant 0 : index
    %c0_120 = arith.constant 0 : index
    %168 = vector.load %arg8[%c8_118, %c0_119, %c0_120] : memref<9x4x16xf32, #tpu.memory_space<vmem>>, vector<1x4x16xf32>
    %169 = vector.shape_cast %168 : vector<1x4x16xf32> to vector<4x16xf32>
    %170 = vector.extract_strided_slice %128 {offsets = [0, 64], sizes = [16, 8], strides = [1, 1]} : vector<16x72xf32> to vector<16x8xf32>
    %cst_121 = arith.constant dense<0.000000e+00> : vector<4x8xf32>
    %171 = tpu.matmul %169, %170, %cst_121 {dimension_numbers = #tpu.dot_dimension_numbers<[1], [0], [0], [1], [0, 0, 1, 1], [], []>} : vector<4x16xf32>, vector<16x8xf32>, vector<4x8xf32> -> vector<4x8xf32>
    %172 = arith.addf %167, %171 : vector<4x8xf32>
    %173 = vector.extract_strided_slice %127 {offsets = [16, 0], sizes = [16, 72], strides = [1, 1]} : vector<32x72xf32> to vector<16x72xf32>
    %c0_122 = arith.constant 0 : index
    %c0_123 = arith.constant 0 : index
    %c0_124 = arith.constant 0 : index
    %174 = vector.load %arg8[%c0_122, %c0_123, %c0_124] : memref<9x4x16xf32, #tpu.memory_space<vmem>>, vector<1x4x16xf32>
    %175 = vector.shape_cast %174 : vector<1x4x16xf32> to vector<4x16xf32>
    %176 = vector.extract_strided_slice %173 {offsets = [0, 0], sizes = [16, 8], strides = [1, 1]} : vector<16x72xf32> to vector<16x8xf32>
    %cst_125 = arith.constant dense<0.000000e+00> : vector<4x8xf32>
    %177 = tpu.matmul %175, %176, %cst_125 {dimension_numbers = #tpu.dot_dimension_numbers<[1], [0], [0], [1], [0, 0, 1, 1], [], []>} : vector<4x16xf32>, vector<16x8xf32>, vector<4x8xf32> -> vector<4x8xf32>
    %c1_126 = arith.constant 1 : index
    %c0_127 = arith.constant 0 : index
    %c0_128 = arith.constant 0 : index
    %178 = vector.load %arg8[%c1_126, %c0_127, %c0_128] : memref<9x4x16xf32, #tpu.memory_space<vmem>>, vector<1x4x16xf32>
    %179 = vector.shape_cast %178 : vector<1x4x16xf32> to vector<4x16xf32>
    %180 = vector.extract_strided_slice %173 {offsets = [0, 8], sizes = [16, 8], strides = [1, 1]} : vector<16x72xf32> to vector<16x8xf32>
    %cst_129 = arith.constant dense<0.000000e+00> : vector<4x8xf32>
    %181 = tpu.matmul %179, %180, %cst_129 {dimension_numbers = #tpu.dot_dimension_numbers<[1], [0], [0], [1], [0, 0, 1, 1], [], []>} : vector<4x16xf32>, vector<16x8xf32>, vector<4x8xf32> -> vector<4x8xf32>
    %182 = arith.addf %177, %181 : vector<4x8xf32>
    %c2_130 = arith.constant 2 : index
    %c0_131 = arith.constant 0 : index
    %c0_132 = arith.constant 0 : index
    %183 = vector.load %arg8[%c2_130, %c0_131, %c0_132] : memref<9x4x16xf32, #tpu.memory_space<vmem>>, vector<1x4x16xf32>
    %184 = vector.shape_cast %183 : vector<1x4x16xf32> to vector<4x16xf32>
    %185 = vector.extract_strided_slice %173 {offsets = [0, 16], sizes = [16, 8], strides = [1, 1]} : vector<16x72xf32> to vector<16x8xf32>
    %cst_133 = arith.constant dense<0.000000e+00> : vector<4x8xf32>
    %186 = tpu.matmul %184, %185, %cst_133 {dimension_numbers = #tpu.dot_dimension_numbers<[1], [0], [0], [1], [0, 0, 1, 1], [], []>} : vector<4x16xf32>, vector<16x8xf32>, vector<4x8xf32> -> vector<4x8xf32>
    %187 = arith.addf %182, %186 : vector<4x8xf32>
    %c3_134 = arith.constant 3 : index
    %c0_135 = arith.constant 0 : index
    %c0_136 = arith.constant 0 : index
    %188 = vector.load %arg8[%c3_134, %c0_135, %c0_136] : memref<9x4x16xf32, #tpu.memory_space<vmem>>, vector<1x4x16xf32>
    %189 = vector.shape_cast %188 : vector<1x4x16xf32> to vector<4x16xf32>
    %190 = vector.extract_strided_slice %173 {offsets = [0, 24], sizes = [16, 8], strides = [1, 1]} : vector<16x72xf32> to vector<16x8xf32>
    %cst_137 = arith.constant dense<0.000000e+00> : vector<4x8xf32>
    %191 = tpu.matmul %189, %190, %cst_137 {dimension_numbers = #tpu.dot_dimension_numbers<[1], [0], [0], [1], [0, 0, 1, 1], [], []>} : vector<4x16xf32>, vector<16x8xf32>, vector<4x8xf32> -> vector<4x8xf32>
    %192 = arith.addf %187, %191 : vector<4x8xf32>
    %c4_138 = arith.constant 4 : index
    %c0_139 = arith.constant 0 : index
    %c0_140 = arith.constant 0 : index
    %193 = vector.load %arg8[%c4_138, %c0_139, %c0_140] : memref<9x4x16xf32, #tpu.memory_space<vmem>>, vector<1x4x16xf32>
    %194 = vector.shape_cast %193 : vector<1x4x16xf32> to vector<4x16xf32>
    %195 = vector.extract_strided_slice %173 {offsets = [0, 32], sizes = [16, 8], strides = [1, 1]} : vector<16x72xf32> to vector<16x8xf32>
    %cst_141 = arith.constant dense<0.000000e+00> : vector<4x8xf32>
    %196 = tpu.matmul %194, %195, %cst_141 {dimension_numbers = #tpu.dot_dimension_numbers<[1], [0], [0], [1], [0, 0, 1, 1], [], []>} : vector<4x16xf32>, vector<16x8xf32>, vector<4x8xf32> -> vector<4x8xf32>
    %197 = arith.addf %192, %196 : vector<4x8xf32>
    %c5_142 = arith.constant 5 : index
    %c0_143 = arith.constant 0 : index
    %c0_144 = arith.constant 0 : index
    %198 = vector.load %arg8[%c5_142, %c0_143, %c0_144] : memref<9x4x16xf32, #tpu.memory_space<vmem>>, vector<1x4x16xf32>
    %199 = vector.shape_cast %198 : vector<1x4x16xf32> to vector<4x16xf32>
    %200 = vector.extract_strided_slice %173 {offsets = [0, 40], sizes = [16, 8], strides = [1, 1]} : vector<16x72xf32> to vector<16x8xf32>
    %cst_145 = arith.constant dense<0.000000e+00> : vector<4x8xf32>
    %201 = tpu.matmul %199, %200, %cst_145 {dimension_numbers = #tpu.dot_dimension_numbers<[1], [0], [0], [1], [0, 0, 1, 1], [], []>} : vector<4x16xf32>, vector<16x8xf32>, vector<4x8xf32> -> vector<4x8xf32>
    %202 = arith.addf %197, %201 : vector<4x8xf32>
    %c6_146 = arith.constant 6 : index
    %c0_147 = arith.constant 0 : index
    %c0_148 = arith.constant 0 : index
    %203 = vector.load %arg8[%c6_146, %c0_147, %c0_148] : memref<9x4x16xf32, #tpu.memory_space<vmem>>, vector<1x4x16xf32>
    %204 = vector.shape_cast %203 : vector<1x4x16xf32> to vector<4x16xf32>
    %205 = vector.extract_strided_slice %173 {offsets = [0, 48], sizes = [16, 8], strides = [1, 1]} : vector<16x72xf32> to vector<16x8xf32>
    %cst_149 = arith.constant dense<0.000000e+00> : vector<4x8xf32>
    %206 = tpu.matmul %204, %205, %cst_149 {dimension_numbers = #tpu.dot_dimension_numbers<[1], [0], [0], [1], [0, 0, 1, 1], [], []>} : vector<4x16xf32>, vector<16x8xf32>, vector<4x8xf32> -> vector<4x8xf32>
    %207 = arith.addf %202, %206 : vector<4x8xf32>
    %c7_150 = arith.constant 7 : index
    %c0_151 = arith.constant 0 : index
    %c0_152 = arith.constant 0 : index
    %208 = vector.load %arg8[%c7_150, %c0_151, %c0_152] : memref<9x4x16xf32, #tpu.memory_space<vmem>>, vector<1x4x16xf32>
    %209 = vector.shape_cast %208 : vector<1x4x16xf32> to vector<4x16xf32>
    %210 = vector.extract_strided_slice %173 {offsets = [0, 56], sizes = [16, 8], strides = [1, 1]} : vector<16x72xf32> to vector<16x8xf32>
    %cst_153 = arith.constant dense<0.000000e+00> : vector<4x8xf32>
    %211 = tpu.matmul %209, %210, %cst_153 {dimension_numbers = #tpu.dot_dimension_numbers<[1], [0], [0], [1], [0, 0, 1, 1], [], []>} : vector<4x16xf32>, vector<16x8xf32>, vector<4x8xf32> -> vector<4x8xf32>
    %212 = arith.addf %207, %211 : vector<4x8xf32>
    %c8_154 = arith.constant 8 : index
    %c0_155 = arith.constant 0 : index
    %c0_156 = arith.constant 0 : index
    %213 = vector.load %arg8[%c8_154, %c0_155, %c0_156] : memref<9x4x16xf32, #tpu.memory_space<vmem>>, vector<1x4x16xf32>
    %214 = vector.shape_cast %213 : vector<1x4x16xf32> to vector<4x16xf32>
    %215 = vector.extract_strided_slice %173 {offsets = [0, 64], sizes = [16, 8], strides = [1, 1]} : vector<16x72xf32> to vector<16x8xf32>
    %cst_157 = arith.constant dense<0.000000e+00> : vector<4x8xf32>
    %216 = tpu.matmul %214, %215, %cst_157 {dimension_numbers = #tpu.dot_dimension_numbers<[1], [0], [0], [1], [0, 0, 1, 1], [], []>} : vector<4x16xf32>, vector<16x8xf32>, vector<4x8xf32> -> vector<4x8xf32>
    %217 = arith.addf %212, %216 : vector<4x8xf32>
    %c0_158 = arith.constant 0 : index
    %c0_159 = arith.constant 0 : index
    %218 = vector.load %arg9[%c0_158, %c0_159] : memref<1x8xf32, #tpu.memory_space<vmem>>, vector<1x8xf32>
    %219 = vector.broadcast %218 : vector<1x8xf32> to vector<4x8xf32>
    %220 = arith.addf %172, %219 : vector<4x8xf32>
    %cst_160 = arith.constant 0.000000e+00 : f32
    %221 = vector.broadcast %cst_160 : f32 to vector<4x8xf32>
    %222 = arith.maximumf %220, %221 : vector<4x8xf32>
    %c0_161 = arith.constant 0 : index
    %c0_162 = arith.constant 0 : index
    %c0_163 = arith.constant 0 : index
    %223 = vector.load %arg10[%c0_161, %c0_162, %c0_163] : memref<2x4x8xf32, #tpu.memory_space<vmem>>, vector<1x4x8xf32>
    %224 = vector.shape_cast %223 : vector<1x4x8xf32> to vector<4x8xf32>
    %225 = vector.shape_cast %222 : vector<4x8xf32> to vector<1x4x8xf32>
    tpu.vector_store %arg10[%c0_161, %c0_162, %c0_163], %225 {strides = array<i32>} : memref<2x4x8xf32, #tpu.memory_space<vmem>>, vector<1x4x8xf32>,
    %c0_164 = arith.constant 0 : index
    %c0_165 = arith.constant 0 : index
    %226 = vector.load %arg9[%c0_164, %c0_165] : memref<1x8xf32, #tpu.memory_space<vmem>>, vector<1x8xf32>
    %227 = vector.broadcast %226 : vector<1x8xf32> to vector<4x8xf32>
    %228 = arith.addf %217, %227 : vector<4x8xf32>
    %cst_166 = arith.constant 0.000000e+00 : f32
    %229 = vector.broadcast %cst_166 : f32 to vector<4x8xf32>
    %230 = arith.maximumf %228, %229 : vector<4x8xf32>
    %c1_167 = arith.constant 1 : index
    %c0_168 = arith.constant 0 : index
    %c0_169 = arith.constant 0 : index
    %231 = vector.load %arg10[%c1_167, %c0_168, %c0_169] : memref<2x4x8xf32, #tpu.memory_space<vmem>>, vector<1x4x8xf32>
    %232 = vector.shape_cast %231 : vector<1x4x8xf32> to vector<4x8xf32>
    %233 = vector.shape_cast %230 : vector<4x8xf32> to vector<1x4x8xf32>
    tpu.vector_store %arg10[%c1_167, %c0_168, %c0_169], %233 {strides = array<i32>} : memref<2x4x8xf32, #tpu.memory_space<vmem>>, vector<1x4x8xf32>,
    return
  }
}

</mosaic_0001>

<llo_original>
// kernel: proto_encoder_forward.1
$region0: #{proto_encoder_forward.1}
  #allocation0 [shape = 'u32[]', space=smem, size = 0x4, offset = 0x4, fixed_abs, tag = 'smem constant byte address 0x4 - core index']
  #allocation1 [shape = 'u32[72,128]{1,0:T(1,128)}', space=vmem, size = 0x9000, scoped, tag = 'internal scratch']
  %s0 = inlined_call_operand.vmem [shape: f32[128,9], index: 0, kind: input, shape index: {}]
  %s1 = inlined_call_operand.vmem [shape: f32[9,8], index: 1, kind: input, shape index: {}]
  %s2 = inlined_call_operand.vmem [shape: f32[1,8], index: 2, kind: input, shape index: {}]
  %s3 = inlined_call_operand.vmem [shape: f32[8,144], index: 3, kind: input, shape index: {}]
  %s4 = inlined_call_operand.vmem [shape: f32[9,16,64], index: 4, kind: input, shape index: {}]
  %s5 = inlined_call_operand.vmem [shape: f32[1,16], index: 5, kind: input, shape index: {}]
  %s6 = inlined_call_operand.vmem [shape: f32[1,16], index: 6, kind: input, shape index: {}]
  %s7 = inlined_call_operand.vmem [shape: f32[16,72], index: 7, kind: input, shape index: {}]
  %s8 = inlined_call_operand.vmem [shape: f32[9,4,16], index: 8, kind: input, shape index: {}]
  %s9 = inlined_call_operand.vmem [shape: f32[1,8], index: 9, kind: input, shape index: {}]
  %s10 = inlined_call_operand.hbm [shape: f32[2,4,8], index: 10, kind: output, shape index: {}]
  %s11 = sld [smem:[#allocation0]]
  $region50: #{proto_encoder_forward.1} parent=0
    _
  %s13 = ssub.s32 1, %s11
  %s14 = scalar_select 0, %s13, %s11
  $region1: #{proto_encoder_forward.1} parent=0
    #allocation2 [shape = 'u8[4096]{0}', space=vmem, size = 0x1000, scoped, tag = 'output window, operand 0, single buffered']
    #allocation3 [shape = 's32[1]{0}', space=sflag, size = 0x4, scoped, tag = 'scoped memory for proto_encoder_forward.1']
    %15 = vsyncpa [#allocation3], 0
    // Predicated region
    $region2: #{proto_encoder_forward.1} parent=1 // pred_check
      _
    $region3: #{proto_encoder_forward.1} parent=1 // pred_check_branch
      %17 = sbr.rel (0) target = $region5
    $region4: #{proto_encoder_forward.1} parent=1 // pred_region
      _
    $region5: #{proto_encoder_forward.1} parent=1 // pred_fallthru
      _
    // Predicated region
    $region6: #{proto_encoder_forward.1} parent=1 // pred_check
      _
    $region7: #{proto_encoder_forward.1} parent=1 // pred_check_branch
      %19 = sbr.rel (0) target = $region9
    $region8: #{proto_encoder_forward.1} parent=1 // pred_region
      _
    $region9: #{proto_encoder_forward.1} parent=1 // pred_fallthru
      _
    // Predicated region
    $region10: #{proto_encoder_forward.1} parent=1 // pred_check
      _
    $region11: #{proto_encoder_forward.1} parent=1 // pred_check_branch
      %21 = sbr.rel (0) target = $region13
    $region12: #{proto_encoder_forward.1} parent=1 // pred_region
      _
    $region13: #{proto_encoder_forward.1} parent=1 // pred_fallthru
      _
    // Predicated region
    $region14: #{proto_encoder_forward.1} parent=1 // pred_check
      _
    $region15: #{proto_encoder_forward.1} parent=1 // pred_check_branch
      %23 = sbr.rel (0) target = $region17
    $region16: #{proto_encoder_forward.1} parent=1 // pred_region
      _
    $region17: #{proto_encoder_forward.1} parent=1 // pred_fallthru
      _
    // Predicated region
    $region18: #{proto_encoder_forward.1} parent=1 // pred_check
      _
    $region19: #{proto_encoder_forward.1} parent=1 // pred_check_branch
      %25 = sbr.rel (0) target = $region21
    $region20: #{proto_encoder_forward.1} parent=1 // pred_region
      _
    $region21: #{proto_encoder_forward.1} parent=1 // pred_fallthru
      _
    // Predicated region
    $region22: #{proto_encoder_forward.1} parent=1 // pred_check
      _
    $region23: #{proto_encoder_forward.1} parent=1 // pred_check_branch
      %27 = sbr.rel (0) target = $region25
    $region24: #{proto_encoder_forward.1} parent=1 // pred_region
      _
    $region25: #{proto_encoder_forward.1} parent=1 // pred_fallthru
      _
    // Predicated region
    $region26: #{proto_encoder_forward.1} parent=1 // pred_check
      _
    $region27: #{proto_encoder_forward.1} parent=1 // pred_check_branch
      %29 = sbr.rel (0) target = $region29
    $region28: #{proto_encoder_forward.1} parent=1 // pred_region
      _
    $region29: #{proto_encoder_forward.1} parent=1 // pred_fallthru
      _
    // Predicated region
    $region30: #{proto_encoder_forward.1} parent=1 // pred_check
      _
    $region31: #{proto_encoder_forward.1} parent=1 // pred_check_branch
      %31 = sbr.rel (0) target = $region33
    $region32: #{proto_encoder_forward.1} parent=1 // pred_region
      _
    $region33: #{proto_encoder_forward.1} parent=1 // pred_fallthru
      _
    // Predicated region
    $region34: #{proto_encoder_forward.1} parent=1 // pred_check
      _
    $region35: #{proto_encoder_forward.1} parent=1 // pred_check_branch
      %33 = sbr.rel (0) target = $region37
    $region36: #{proto_encoder_forward.1} parent=1 // pred_region
      _
    $region37: #{proto_encoder_forward.1} parent=1 // pred_fallthru
      _
    // Predicated region
    $region38: #{proto_encoder_forward.1} parent=1 // pred_check
      _
    $region39: #{proto_encoder_forward.1} parent=1 // pred_check_branch
      %35 = sbr.rel (0) target = $region41
    $region40: #{proto_encoder_forward.1} parent=1 // pred_region
      _
    $region41: #{proto_encoder_forward.1} parent=1 // pred_fallthru
      _
    %v36 = vld [vmem:[%s0] sm:$0xff]
    %v37 = vld [vmem:[%s0 + $0x8] sm:$0xff]
    %v38 = vld [vmem:[%s0 + $0x10] sm:$0xff]
    %v39 = vld [vmem:[%s0 + $0x18] sm:$0xff]
    %v40 = vld [vmem:[%s0 + $0x20] sm:$0xff]
    %v41 = vld [vmem:[%s0 + $0x28] sm:$0xff]
    %v42 = vld [vmem:[%s0 + $0x30] sm:$0xff]
    %v43 = vld [vmem:[%s0 + $0x38] sm:$0xff]
    %v44 = vld [vmem:[%s0 + $0x40] sm:$0xff]
    %v45 = vld [vmem:[%s0 + $0x48] sm:$0xff]
    %v46 = vld [vmem:[%s0 + $0x50] sm:$0xff]
    %v47 = vld [vmem:[%s0 + $0x58] sm:$0xff]
    %v48 = vld [vmem:[%s0 + $0x60] sm:$0xff]
    %v49 = vld [vmem:[%s0 + $0x68] sm:$0xff]
    %v50 = vld [vmem:[%s0 + $0x70] sm:$0xff]
    %v51 = vld [vmem:[%s0 + $0x78] sm:$0xff]
    %v52 = vld [vmem:[%s1] sm:$0xff]
    %v53 = vld [vmem:[%s1 + $0x8] sm:$0x1]
    %v54 = vld [vmem:[%s2] sm:$0x1]
    %v56 = vperm.slane %v54, 0
    %vm58 = vcmask 72704
    %v60 = vsel %vm58, %v36, 0
    %v63 = vsel %vm58, %v37, 0
    %v66 = vsel %vm58, %v38, 0
    %v69 = vsel %vm58, %v39, 0
    %v72 = vsel %vm58, %v40, 0
    %v75 = vsel %vm58, %v41, 0
    %v78 = vsel %vm58, %v42, 0
    %v81 = vsel %vm58, %v43, 0
    %v84 = vsel %vm58, %v44, 0
    %v87 = vsel %vm58, %v45, 0
    %v90 = vsel %vm58, %v46, 0
    %v93 = vsel %vm58, %v47, 0
    %v96 = vsel %vm58, %v48, 0
    %v99 = vsel %vm58, %v49, 0
    %v102 = vsel %vm58, %v50, 0
    %v105 = vsel %vm58, %v51, 0
    %vm107 = vcmask 1040384
    %v109 = vsel %vm107, %v53, 0
    %111 = vmatpush.msra.mxu0 0.0
    %112 = vmatpush.msra.mxu0 0.0
    %113 = vmatpush.msra.mxu0 0.0
    %114 = vmatpush.msra.mxu0 0.0
    %115 = vmatpush.msra.mxu0 0.0
    %116 = vmatpush.msra.mxu0 0.0
    %117 = vmatpush.msra.mxu0 0.0
    %118 = vmatpush.msra.mxu0 0.0
    %119 = vmatpush.msra.mxu0 0.0
    %120 = vmatpush.msra.mxu0 0.0
    %121 = vmatpush.msra.mxu0 0.0
    %122 = vmatpush.msra.mxu0 0.0
    %123 = vmatpush.msra.mxu0 0.0
    %124 = vmatpush.msra.mxu0 0.0
    %v125 = vand.u32 %v109, 4294901760
    %126 = vmatpush.msra.mxu0 %v125
    %v127 = vand.u32 %v52, 4294901760
    %128 = vmatpush.msra.mxu0 %v127
    %v129 = vand.u32 %v60, 4294901760
    %v130 = vsub.f32 %v60, %v129
    %v131 = vand.u32 %v130, 4294901760
    %v132 = vsub.f32 %v130, %v131
    %v133 = vand.u32 %v132, 4294901760
    %134 = vmatmul.f32.gmra.mxu0 %v133
    %v135 = vpop.f32.mrf.mxu0
    %v136 = vadd.f32 %v56, %v135
    %v137 = vand.u32 %v63, 4294901760
    %v138 = vsub.f32 %v63, %v137
    %v139 = vand.u32 %v138, 4294901760
    %v140 = vsub.f32 %v138, %v139
    %v141 = vand.u32 %v140, 4294901760
    %142 = vmatmul.f32.gmra.mxu0 %v141
    %v143 = vpop.f32.mrf.mxu0
    %v144 = vadd.f32 %v56, %v143
    %v145 = vand.u32 %v66, 4294901760
    %v146 = vsub.f32 %v66, %v145
    %v147 = vand.u32 %v146, 4294901760
    %v148 = vsub.f32 %v146, %v147
    %v149 = vand.u32 %v148, 4294901760
    %150 = vmatmul.f32.gmra.mxu0 %v149
    %v151 = vpop.f32.mrf.mxu0
    %v152 = vadd.f32 %v56, %v151
    %v153 = vand.u32 %v69, 4294901760
    %v154 = vsub.f32 %v69, %v153
    %v155 = vand.u32 %v154, 4294901760
    %v156 = vsub.f32 %v154, %v155
    %v157 = vand.u32 %v156, 4294901760
    %158 = vmatmul.f32.gmra.mxu0 %v157
    %v159 = vpop.f32.mrf.mxu0
    %v160 = vadd.f32 %v56, %v159
    %v161 = vand.u32 %v72, 4294901760
    %v162 = vsub.f32 %v72, %v161
    %v163 = vand.u32 %v162, 4294901760
    %v164 = vsub.f32 %v162, %v163
    %v165 = vand.u32 %v164, 4294901760
    %166 = vmatmul.f32.gmra.mxu0 %v165
    %v167 = vpop.f32.mrf.mxu0
    %v168 = vadd.f32 %v56, %v167
    %v169 = vand.u32 %v75, 4294901760
    %v170 = vsub.f32 %v75, %v169
    %v171 = vand.u32 %v170, 4294901760
    %v172 = vsub.f32 %v170, %v171
    %v173 = vand.u32 %v172, 4294901760
    %174 = vmatmul.f32.gmra.mxu0 %v173
    %v175 = vpop.f32.mrf.mxu0
    %v176 = vadd.f32 %v56, %v175
    %v177 = vand.u32 %v78, 4294901760
    %v178 = vsub.f32 %v78, %v177
    %v179 = vand.u32 %v178, 4294901760
    %v180 = vsub.f32 %v178, %v179
    %v181 = vand.u32 %v180, 4294901760
    %182 = vmatmul.f32.gmra.mxu0 %v181
    %v183 = vpop.f32.mrf.mxu0
    %v184 = vadd.f32 %v56, %v183
    %v185 = vand.u32 %v81, 4294901760
    %v186 = vsub.f32 %v81, %v185
    %v187 = vand.u32 %v186, 4294901760
    %v188 = vsub.f32 %v186, %v187
    %v189 = vand.u32 %v188, 4294901760
    %190 = vmatmul.f32.gmra.mxu0 %v189
    %v191 = vpop.f32.mrf.mxu0
    %v192 = vadd.f32 %v56, %v191
    %v193 = vand.u32 %v84, 4294901760
    %v194 = vsub.f32 %v84, %v193
    %v195 = vand.u32 %v194, 4294901760
    %v196 = vsub.f32 %v194, %v195
    %v197 = vand.u32 %v196, 4294901760
    %198 = vmatmul.f32.gmra.mxu0 %v197
    %v199 = vpop.f32.mrf.mxu0
    %v200 = vadd.f32 %v56, %v199
    %v201 = vand.u32 %v87, 4294901760
    %v202 = vsub.f32 %v87, %v201
    %v203 = vand.u32 %v202, 4294901760
    %v204 = vsub.f32 %v202, %v203
    %v205 = vand.u32 %v204, 4294901760
    %206 = vmatmul.f32.gmra.mxu0 %v205
    %v207 = vpop.f32.mrf.mxu0
    %v208 = vadd.f32 %v56, %v207
    %v209 = vand.u32 %v90, 4294901760
    %v210 = vsub.f32 %v90, %v209
    %v211 = vand.u32 %v210, 4294901760
    %v212 = vsub.f32 %v210, %v211
    %v213 = vand.u32 %v212, 4294901760
    %214 = vmatmul.f32.gmra.mxu0 %v213
    %v215 = vpop.f32.mrf.mxu0
    %v216 = vadd.f32 %v56, %v215
    %v217 = vand.u32 %v93, 4294901760
    %v218 = vsub.f32 %v93, %v217
    %v219 = vand.u32 %v218, 4294901760
    %v220 = vsub.f32 %v218, %v219
    %v221 = vand.u32 %v220, 4294901760
    %222 = vmatmul.f32.gmra.mxu0 %v221
    %v223 = vpop.f32.mrf.mxu0
    %v224 = vadd.f32 %v56, %v223
    %v225 = vand.u32 %v96, 4294901760
    %v226 = vsub.f32 %v96, %v225
    %v227 = vand.u32 %v226, 4294901760
    %v228 = vsub.f32 %v226, %v227
    %v229 = vand.u32 %v228, 4294901760
    %230 = vmatmul.f32.gmra.mxu0 %v229
    %v231 = vpop.f32.mrf.mxu0
    %v232 = vadd.f32 %v56, %v231
    %v233 = vand.u32 %v99, 4294901760
    %v234 = vsub.f32 %v99, %v233
    %v235 = vand.u32 %v234, 4294901760
    %v236 = vsub.f32 %v234, %v235
    %v237 = vand.u32 %v236, 4294901760
    %238 = vmatmul.f32.gmra.mxu0 %v237
    %v239 = vpop.f32.mrf.mxu0
    %v240 = vadd.f32 %v56, %v239
    %v241 = vand.u32 %v102, 4294901760
    %v242 = vsub.f32 %v102, %v241
    %v243 = vand.u32 %v242, 4294901760
    %v244 = vsub.f32 %v242, %v243
    %v245 = vand.u32 %v244, 4294901760
    %246 = vmatmul.f32.gmra.mxu0 %v245
    %v247 = vpop.f32.mrf.mxu0
    %v248 = vadd.f32 %v56, %v247
    %v249 = vand.u32 %v105, 4294901760
    %v250 = vsub.f32 %v105, %v249
    %v251 = vand.u32 %v250, 4294901760
    %v252 = vsub.f32 %v250, %v251
    %v253 = vand.u32 %v252, 4294901760
    %254 = vmatmul.f32.gmra.mxu0 %v253
    %v255 = vpop.f32.mrf.mxu0
    %v256 = vadd.f32 %v56, %v255
    %257 = vdwg.mxu0
    %258 = vmatpush.msra.mxu0 0.0
    %259 = vmatpush.msra.mxu0 0.0
    %260 = vmatpush.msra.mxu0 0.0
    %261 = vmatpush.msra.mxu0 0.0
    %262 = vmatpush.msra.mxu0 0.0
    %263 = vmatpush.msra.mxu0 0.0
    %264 = vmatpush.msra.mxu0 0.0
    %265 = vmatpush.msra.mxu0 0.0
    %266 = vmatpush.msra.mxu0 0.0
    %267 = vmatpush.msra.mxu0 0.0
    %268 = vmatpush.msra.mxu0 0.0
    %269 = vmatpush.msra.mxu0 0.0
    %270 = vmatpush.msra.mxu0 0.0
    %271 = vmatpush.msra.mxu0 0.0
    %v272 = vand.u32 %v109, 4294901760
    %v273 = vsub.f32 %v109, %v272
    %v274 = vand.u32 %v273, 4294901760
    %v275 = vsub.f32 %v273, %v274
    %v276 = vand.u32 %v275, 4294901760
    %277 = vmatpush.msra.mxu0 %v276
    %v278 = vand.u32 %v52, 4294901760
    %v279 = vsub.f32 %v52, %v278
    %v280 = vand.u32 %v279, 4294901760
    %v281 = vsub.f32 %v279, %v280
    %v282 = vand.u32 %v281, 4294901760
    %283 = vmatpush.msra.mxu0 %v282
    %v284 = vand.u32 %v60, 4294901760
    %285 = vmatmul.f32.gmra.mxu0 %v284
    %v286 = vpop.f32.mrf.mxu0
    %v287 = vadd.f32 %v136, %v286
    %v288 = vand.u32 %v63, 4294901760
    %289 = vmatmul.f32.gmra.mxu0 %v288
    %v290 = vpop.f32.mrf.mxu0
    %v291 = vadd.f32 %v144, %v290
    %v292 = vand.u32 %v66, 4294901760
    %293 = vmatmul.f32.gmra.mxu0 %v292
    %v294 = vpop.f32.mrf.mxu0
    %v295 = vadd.f32 %v152, %v294
    %v296 = vand.u32 %v69, 4294901760
    %297 = vmatmul.f32.gmra.mxu0 %v296
    %v298 = vpop.f32.mrf.mxu0
    %v299 = vadd.f32 %v160, %v298
    %v300 = vand.u32 %v72, 4294901760
    %301 = vmatmul.f32.gmra.mxu0 %v300
    %v302 = vpop.f32.mrf.mxu0
    %v303 = vadd.f32 %v168, %v302
    %v304 = vand.u32 %v75, 4294901760
    %305 = vmatmul.f32.gmra.mxu0 %v304
    %v306 = vpop.f32.mrf.mxu0
    %v307 = vadd.f32 %v176, %v306
    %v308 = vand.u32 %v78, 4294901760
    %309 = vmatmul.f32.gmra.mxu0 %v308
    %v310 = vpop.f32.mrf.mxu0
    %v311 = vadd.f32 %v184, %v310
    %v312 = vand.u32 %v81, 4294901760
    %313 = vmatmul.f32.gmra.mxu0 %v312
    %v314 = vpop.f32.mrf.mxu0
    %v315 = vadd.f32 %v192, %v314
    %v316 = vand.u32 %v84, 4294901760
    %317 = vmatmul.f32.gmra.mxu0 %v316
    %v318 = vpop.f32.mrf.mxu0
    %v319 = vadd.f32 %v200, %v318
    %v320 = vand.u32 %v87, 4294901760
    %321 = vmatmul.f32.gmra.mxu0 %v320
    %v322 = vpop.f32.mrf.mxu0
    %v323 = vadd.f32 %v208, %v322
    %v324 = vand.u32 %v90, 4294901760
    %325 = vmatmul.f32.gmra.mxu0 %v324
    %v326 = vpop.f32.mrf.mxu0
    %v327 = vadd.f32 %v216, %v326
    %v328 = vand.u32 %v93, 4294901760
    %329 = vmatmul.f32.gmra.mxu0 %v328
    %v330 = vpop.f32.mrf.mxu0
    %v331 = vadd.f32 %v224, %v330
    %v332 = vand.u32 %v96, 4294901760
    %333 = vmatmul.f32.gmra.mxu0 %v332
    %v334 = vpop.f32.mrf.mxu0
    %v335 = vadd.f32 %v232, %v334
    %v336 = vand.u32 %v99, 4294901760
    %337 = vmatmul.f32.gmra.mxu0 %v336
    %v338 = vpop.f32.mrf.mxu0
    %v339 = vadd.f32 %v240, %v338
    %v340 = vand.u32 %v102, 4294901760
    %341 = vmatmul.f32.gmra.mxu0 %v340
    %v342 = vpop.f32.mrf.mxu0
    %v343 = vadd.f32 %v248, %v342
    %v344 = vand.u32 %v105, 4294901760
    %345 = vmatmul.f32.gmra.mxu0 %v344
    %v346 = vpop.f32.mrf.mxu0
    %v347 = vadd.f32 %v256, %v346
    %348 = vdwg.mxu0
    %349 = vmatpush.msra.mxu0 0.0
    %350 = vmatpush.msra.mxu0 0.0
    %351 = vmatpush.msra.mxu0 0.0
    %352 = vmatpush.msra.mxu0 0.0
    %353 = vmatpush.msra.mxu0 0.0
    %354 = vmatpush.msra.mxu0 0.0
    %355 = vmatpush.msra.mxu0 0.0
    %356 = vmatpush.msra.mxu0 0.0
    %357 = vmatpush.msra.mxu0 0.0
    %358 = vmatpush.msra.mxu0 0.0
    %359 = vmatpush.msra.mxu0 0.0
    %360 = vmatpush.msra.mxu0 0.0
    %361 = vmatpush.msra.mxu0 0.0
    %362 = vmatpush.msra.mxu0 0.0
    %v363 = vand.u32 %v109, 4294901760
    %v364 = vsub.f32 %v109, %v363
    %365 = vmatpush.msra.mxu0 %v364
    %v366 = vand.u32 %v52, 4294901760
    %v367 = vsub.f32 %v52, %v366
    %368 = vmatpush.msra.mxu0 %v367
    %v369 = vand.u32 %v60, 4294901760
    %v370 = vsub.f32 %v60, %v369
    %371 = vmatmul.f32.gmra.mxu0 %v370
    %v372 = vpop.f32.mrf.mxu0
    %v373 = vadd.f32 %v287, %v372
    %v374 = vand.u32 %v63, 4294901760
    %v375 = vsub.f32 %v63, %v374
    %376 = vmatmul.f32.gmra.mxu0 %v375
    %v377 = vpop.f32.mrf.mxu0
    %v378 = vadd.f32 %v291, %v377
    %v379 = vand.u32 %v66, 4294901760
    %v380 = vsub.f32 %v66, %v379
    %381 = vmatmul.f32.gmra.mxu0 %v380
    %v382 = vpop.f32.mrf.mxu0
    %v383 = vadd.f32 %v295, %v382
    %v384 = vand.u32 %v69, 4294901760
    %v385 = vsub.f32 %v69, %v384
    %386 = vmatmul.f32.gmra.mxu0 %v385
    %v387 = vpop.f32.mrf.mxu0
    %v388 = vadd.f32 %v299, %v387
    %v389 = vand.u32 %v72, 4294901760
    %v390 = vsub.f32 %v72, %v389
    %391 = vmatmul.f32.gmra.mxu0 %v390
    %v392 = vpop.f32.mrf.mxu0
    %v393 = vadd.f32 %v303, %v392
    %v394 = vand.u32 %v75, 4294901760
    %v395 = vsub.f32 %v75, %v394
    %396 = vmatmul.f32.gmra.mxu0 %v395
    %v397 = vpop.f32.mrf.mxu0
    %v398 = vadd.f32 %v307, %v397
    %v399 = vand.u32 %v78, 4294901760
    %v400 = vsub.f32 %v78, %v399
    %401 = vmatmul.f32.gmra.mxu0 %v400
    %v402 = vpop.f32.mrf.mxu0
    %v403 = vadd.f32 %v311, %v402
    %v404 = vand.u32 %v81, 4294901760
    %v405 = vsub.f32 %v81, %v404
    %406 = vmatmul.f32.gmra.mxu0 %v405
    %v407 = vpop.f32.mrf.mxu0
    %v408 = vadd.f32 %v315, %v407
    %v409 = vand.u32 %v84, 4294901760
    %v410 = vsub.f32 %v84, %v409
    %411 = vmatmul.f32.gmra.mxu0 %v410
    %v412 = vpop.f32.mrf.mxu0
    %v413 = vadd.f32 %v319, %v412
    %v414 = vand.u32 %v87, 4294901760
    %v415 = vsub.f32 %v87, %v414
    %416 = vmatmul.f32.gmra.mxu0 %v415
    %v417 = vpop.f32.mrf.mxu0
    %v418 = vadd.f32 %v323, %v417
    %v419 = vand.u32 %v90, 4294901760
    %v420 = vsub.f32 %v90, %v419
    %421 = vmatmul.f32.gmra.mxu0 %v420
    %v422 = vpop.f32.mrf.mxu0
    %v423 = vadd.f32 %v327, %v422
    %v424 = vand.u32 %v93, 4294901760
    %v425 = vsub.f32 %v93, %v424
    %426 = vmatmul.f32.gmra.mxu0 %v425
    %v427 = vpop.f32.mrf.mxu0
    %v428 = vadd.f32 %v331, %v427
    %v429 = vand.u32 %v96, 4294901760
    %v430 = vsub.f32 %v96, %v429
    %431 = vmatmul.f32.gmra.mxu0 %v430
    %v432 = vpop.f32.mrf.mxu0
    %v433 = vadd.f32 %v335, %v432
    %v434 = vand.u32 %v99, 4294901760
    %v435 = vsub.f32 %v99, %v434
    %436 = vmatmul.f32.gmra.mxu0 %v435
    %v437 = vpop.f32.mrf.mxu0
    %v438 = vadd.f32 %v339, %v437
    %v439 = vand.u32 %v102, 4294901760
    %v440 = vsub.f32 %v102, %v439
    %441 = vmatmul.f32.gmra.mxu0 %v440
    %v442 = vpop.f32.mrf.mxu0
    %v443 = vadd.f32 %v343, %v442
    %v444 = vand.u32 %v105, 4294901760
    %v445 = vsub.f32 %v105, %v444
    %446 = vmatmul.f32.gmra.mxu0 %v445
    %v447 = vpop.f32.mrf.mxu0
    %v448 = vadd.f32 %v347, %v447
    %449 = vdwg.mxu0
    %450 = vmatpush.msra.mxu0 0.0
    %451 = vmatpush.msra.mxu0 0.0
    %452 = vmatpush.msra.mxu0 0.0
    %453 = vmatpush.msra.mxu0 0.0
    %454 = vmatpush.msra.mxu0 0.0
    %455 = vmatpush.msra.mxu0 0.0
    %456 = vmatpush.msra.mxu0 0.0
    %457 = vmatpush.msra.mxu0 0.0
    %458 = vmatpush.msra.mxu0 0.0
    %459 = vmatpush.msra.mxu0 0.0
    %460 = vmatpush.msra.mxu0 0.0
    %461 = vmatpush.msra.mxu0 0.0
    %462 = vmatpush.msra.mxu0 0.0
    %463 = vmatpush.msra.mxu0 0.0
    %v464 = vand.u32 %v109, 4294901760
    %465 = vmatpush.msra.mxu0 %v464
    %v466 = vand.u32 %v52, 4294901760
    %467 = vmatpush.msra.mxu0 %v466
    %v468 = vand.u32 %v60, 4294901760
    %v469 = vsub.f32 %v60, %v468
    %v470 = vand.u32 %v469, 4294901760
    %471 = vmatmul.f32.gmra.mxu0 %v470
    %v472 = vpop.f32.mrf.mxu0
    %v473 = vadd.f32 %v373, %v472
    %v474 = vand.u32 %v63, 4294901760
    %v475 = vsub.f32 %v63, %v474
    %v476 = vand.u32 %v475, 4294901760
    %477 = vmatmul.f32.gmra.mxu0 %v476
    %v478 = vpop.f32.mrf.mxu0
    %v479 = vadd.f32 %v378, %v478
    %v480 = vand.u32 %v66, 4294901760
    %v481 = vsub.f32 %v66, %v480
    %v482 = vand.u32 %v481, 4294901760
    %483 = vmatmul.f32.gmra.mxu0 %v482
    %v484 = vpop.f32.mrf.mxu0
    %v485 = vadd.f32 %v383, %v484
    %v486 = vand.u32 %v69, 4294901760
    %v487 = vsub.f32 %v69, %v486
    %v488 = vand.u32 %v487, 4294901760
    %489 = vmatmul.f32.gmra.mxu0 %v488
    %v490 = vpop.f32.mrf.mxu0
    %v491 = vadd.f32 %v388, %v490
    %v492 = vand.u32 %v72, 4294901760
    %v493 = vsub.f32 %v72, %v492
    %v494 = vand.u32 %v493, 4294901760
    %495 = vmatmul.f32.gmra.mxu0 %v494
    %v496 = vpop.f32.mrf.mxu0
    %v497 = vadd.f32 %v393, %v496
    %v498 = vand.u32 %v75, 4294901760
    %v499 = vsub.f32 %v75, %v498
    %v500 = vand.u32 %v499, 4294901760
    %501 = vmatmul.f32.gmra.mxu0 %v500
    %v502 = vpop.f32.mrf.mxu0
    %v503 = vadd.f32 %v398, %v502
    %v504 = vand.u32 %v78, 4294901760
    %v505 = vsub.f32 %v78, %v504
    %v506 = vand.u32 %v505, 4294901760
    %507 = vmatmul.f32.gmra.mxu0 %v506
    %v508 = vpop.f32.mrf.mxu0
    %v509 = vadd.f32 %v403, %v508
    %v510 = vand.u32 %v81, 4294901760
    %v511 = vsub.f32 %v81, %v510
    %v512 = vand.u32 %v511, 4294901760
    %513 = vmatmul.f32.gmra.mxu0 %v512
    %v514 = vpop.f32.mrf.mxu0
    %v515 = vadd.f32 %v408, %v514
    %v516 = vand.u32 %v84, 4294901760
    %v517 = vsub.f32 %v84, %v516
    %v518 = vand.u32 %v517, 4294901760
    %519 = vmatmul.f32.gmra.mxu0 %v518
    %v520 = vpop.f32.mrf.mxu0
    %v521 = vadd.f32 %v413, %v520
    %v522 = vand.u32 %v87, 4294901760
    %v523 = vsub.f32 %v87, %v522
    %v524 = vand.u32 %v523, 4294901760
    %525 = vmatmul.f32.gmra.mxu0 %v524
    %v526 = vpop.f32.mrf.mxu0
    %v527 = vadd.f32 %v418, %v526
    %v528 = vand.u32 %v90, 4294901760
    %v529 = vsub.f32 %v90, %v528
    %v530 = vand.u32 %v529, 4294901760
    %531 = vmatmul.f32.gmra.mxu0 %v530
    %v532 = vpop.f32.mrf.mxu0
    %v533 = vadd.f32 %v423, %v532
    %v534 = vand.u32 %v93, 4294901760
    %v535 = vsub.f32 %v93, %v534
    %v536 = vand.u32 %v535, 4294901760
    %537 = vmatmul.f32.gmra.mxu0 %v536
    %v538 = vpop.f32.mrf.mxu0
    %v539 = vadd.f32 %v428, %v538
    %v540 = vand.u32 %v96, 4294901760
    %v541 = vsub.f32 %v96, %v540
    %v542 = vand.u32 %v541, 4294901760
    %543 = vmatmul.f32.gmra.mxu0 %v542
    %v544 = vpop.f32.mrf.mxu0
    %v545 = vadd.f32 %v433, %v544
    %v546 = vand.u32 %v99, 4294901760
    %v547 = vsub.f32 %v99, %v546
    %v548 = vand.u32 %v547, 4294901760
    %549 = vmatmul.f32.gmra.mxu0 %v548
    %v550 = vpop.f32.mrf.mxu0
    %v551 = vadd.f32 %v438, %v550
    %v552 = vand.u32 %v102, 4294901760
    %v553 = vsub.f32 %v102, %v552
    %v554 = vand.u32 %v553, 4294901760
    %555 = vmatmul.f32.gmra.mxu0 %v554
    %v556 = vpop.f32.mrf.mxu0
    %v557 = vadd.f32 %v443, %v556
    %v558 = vand.u32 %v105, 4294901760
    %v559 = vsub.f32 %v105, %v558
    %v560 = vand.u32 %v559, 4294901760
    %561 = vmatmul.f32.gmra.mxu0 %v560
    %v562 = vpop.f32.mrf.mxu0
    %v563 = vadd.f32 %v448, %v562
    %564 = vdwg.mxu0
    %565 = vmatpush.msra.mxu0 0.0
    %566 = vmatpush.msra.mxu0 0.0
    %567 = vmatpush.msra.mxu0 0.0
    %568 = vmatpush.msra.mxu0 0.0
    %569 = vmatpush.msra.mxu0 0.0
    %570 = vmatpush.msra.mxu0 0.0
    %571 = vmatpush.msra.mxu0 0.0
    %572 = vmatpush.msra.mxu0 0.0
    %573 = vmatpush.msra.mxu0 0.0
    %574 = vmatpush.msra.mxu0 0.0
    %575 = vmatpush.msra.mxu0 0.0
    %576 = vmatpush.msra.mxu0 0.0
    %577 = vmatpush.msra.mxu0 0.0
    %578 = vmatpush.msra.mxu0 0.0
    %v579 = vand.u32 %v109, 4294901760
    %v580 = vsub.f32 %v109, %v579
    %v581 = vand.u32 %v580, 4294901760
    %582 = vmatpush.msra.mxu0 %v581
    %v583 = vand.u32 %v52, 4294901760
    %v584 = vsub.f32 %v52, %v583
    %v585 = vand.u32 %v584, 4294901760
    %586 = vmatpush.msra.mxu0 %v585
    %v587 = vand.u32 %v60, 4294901760
    %588 = vmatmul.f32.gmra.mxu0 %v587
    %v589 = vpop.f32.mrf.mxu0
    %v590 = vadd.f32 %v473, %v589
    %v591 = vand.u32 %v63, 4294901760
    %592 = vmatmul.f32.gmra.mxu0 %v591
    %v593 = vpop.f32.mrf.mxu0
    %v594 = vadd.f32 %v479, %v593
    %v595 = vand.u32 %v66, 4294901760
    %596 = vmatmul.f32.gmra.mxu0 %v595
    %v597 = vpop.f32.mrf.mxu0
    %v598 = vadd.f32 %v485, %v597
    %v599 = vand.u32 %v69, 4294901760
    %600 = vmatmul.f32.gmra.mxu0 %v599
    %v601 = vpop.f32.mrf.mxu0
    %v602 = vadd.f32 %v491, %v601
    %v603 = vand.u32 %v72, 4294901760
    %604 = vmatmul.f32.gmra.mxu0 %v603
    %v605 = vpop.f32.mrf.mxu0
    %v606 = vadd.f32 %v497, %v605
    %v607 = vand.u32 %v75, 4294901760
    %608 = vmatmul.f32.gmra.mxu0 %v607
    %v609 = vpop.f32.mrf.mxu0
    %v610 = vadd.f32 %v503, %v609
    %v611 = vand.u32 %v78, 4294901760
    %612 = vmatmul.f32.gmra.mxu0 %v611
    %v613 = vpop.f32.mrf.mxu0
    %v614 = vadd.f32 %v509, %v613
    %v615 = vand.u32 %v81, 4294901760
    %616 = vmatmul.f32.gmra.mxu0 %v615
    %v617 = vpop.f32.mrf.mxu0
    %v618 = vadd.f32 %v515, %v617
    %v619 = vand.u32 %v84, 4294901760
    %620 = vmatmul.f32.gmra.mxu0 %v619
    %v621 = vpop.f32.mrf.mxu0
    %v622 = vadd.f32 %v521, %v621
    %v623 = vand.u32 %v87, 4294901760
    %624 = vmatmul.f32.gmra.mxu0 %v623
    %v625 = vpop.f32.mrf.mxu0
    %v626 = vadd.f32 %v527, %v625
    %v627 = vand.u32 %v90, 4294901760
    %628 = vmatmul.f32.gmra.mxu0 %v627
    %v629 = vpop.f32.mrf.mxu0
    %v630 = vadd.f32 %v533, %v629
    %v631 = vand.u32 %v93, 4294901760
    %632 = vmatmul.f32.gmra.mxu0 %v631
    %v633 = vpop.f32.mrf.mxu0
    %v634 = vadd.f32 %v539, %v633
    %v635 = vand.u32 %v96, 4294901760
    %636 = vmatmul.f32.gmra.mxu0 %v635
    %v637 = vpop.f32.mrf.mxu0
    %v638 = vadd.f32 %v545, %v637
    %v639 = vand.u32 %v99, 4294901760
    %640 = vmatmul.f32.gmra.mxu0 %v639
    %v641 = vpop.f32.mrf.mxu0
    %v642 = vadd.f32 %v551, %v641
    %v643 = vand.u32 %v102, 4294901760
    %644 = vmatmul.f32.gmra.mxu0 %v643
    %v645 = vpop.f32.mrf.mxu0
    %v646 = vadd.f32 %v557, %v645
    %v647 = vand.u32 %v105, 4294901760
    %648 = vmatmul.f32.gmra.mxu0 %v647
    %v649 = vpop.f32.mrf.mxu0
    %v650 = vadd.f32 %v563, %v649
    %651 = vdwg.mxu0
    %652 = vmatpush.msra.mxu0 0.0
    %653 = vmatpush.msra.mxu0 0.0
    %654 = vmatpush.msra.mxu0 0.0
    %655 = vmatpush.msra.mxu0 0.0
    %656 = vmatpush.msra.mxu0 0.0
    %657 = vmatpush.msra.mxu0 0.0
    %658 = vmatpush.msra.mxu0 0.0
    %659 = vmatpush.msra.mxu0 0.0
    %660 = vmatpush.msra.mxu0 0.0
    %661 = vmatpush.msra.mxu0 0.0
    %662 = vmatpush.msra.mxu0 0.0
    %663 = vmatpush.msra.mxu0 0.0
    %664 = vmatpush.msra.mxu0 0.0
    %665 = vmatpush.msra.mxu0 0.0
    %v666 = vand.u32 %v109, 4294901760
    %667 = vmatpush.msra.mxu0 %v666
    %v668 = vand.u32 %v52, 4294901760
    %669 = vmatpush.msra.mxu0 %v668
    %v670 = vand.u32 %v60, 4294901760
    %671 = vmatmul.f32.gmra.mxu0 %v670
    %v672 = vpop.f32.mrf.mxu0
    %v673 = vadd.f32 %v590, %v672
    %v674 = vand.u32 %v63, 4294901760
    %675 = vmatmul.f32.gmra.mxu0 %v674
    %v676 = vpop.f32.mrf.mxu0
    %v677 = vadd.f32 %v594, %v676
    %v678 = vand.u32 %v66, 4294901760
    %679 = vmatmul.f32.gmra.mxu0 %v678
    %v680 = vpop.f32.mrf.mxu0
    %v681 = vadd.f32 %v598, %v680
    %v682 = vand.u32 %v69, 4294901760
    %683 = vmatmul.f32.gmra.mxu0 %v682
    %v684 = vpop.f32.mrf.mxu0
    %v685 = vadd.f32 %v602, %v684
    %v686 = vand.u32 %v72, 4294901760
    %687 = vmatmul.f32.gmra.mxu0 %v686
    %v688 = vpop.f32.mrf.mxu0
    %v689 = vadd.f32 %v606, %v688
    %v690 = vand.u32 %v75, 4294901760
    %691 = vmatmul.f32.gmra.mxu0 %v690
    %v692 = vpop.f32.mrf.mxu0
    %v693 = vadd.f32 %v610, %v692
    %v694 = vand.u32 %v78, 4294901760
    %695 = vmatmul.f32.gmra.mxu0 %v694
    %v696 = vpop.f32.mrf.mxu0
    %v697 = vadd.f32 %v614, %v696
    %v698 = vand.u32 %v81, 4294901760
    %699 = vmatmul.f32.gmra.mxu0 %v698
    %v700 = vpop.f32.mrf.mxu0
    %v701 = vadd.f32 %v618, %v700
    %v702 = vand.u32 %v84, 4294901760
    %703 = vmatmul.f32.gmra.mxu0 %v702
    %v704 = vpop.f32.mrf.mxu0
    %v705 = vadd.f32 %v622, %v704
    %v706 = vand.u32 %v87, 4294901760
    %707 = vmatmul.f32.gmra.mxu0 %v706
    %v708 = vpop.f32.mrf.mxu0
    %v709 = vadd.f32 %v626, %v708
    %v710 = vand.u32 %v90, 4294901760
    %711 = vmatmul.f32.gmra.mxu0 %v710
    %v712 = vpop.f32.mrf.mxu0
    %v713 = vadd.f32 %v630, %v712
    %v714 = vand.u32 %v93, 4294901760
    %715 = vmatmul.f32.gmra.mxu0 %v714
    %v716 = vpop.f32.mrf.mxu0
    %v717 = vadd.f32 %v634, %v716
    %v718 = vand.u32 %v96, 4294901760
    %719 = vmatmul.f32.gmra.mxu0 %v718
    %v720 = vpop.f32.mrf.mxu0
    %v721 = vadd.f32 %v638, %v720
    %v722 = vand.u32 %v99, 4294901760
    %723 = vmatmul.f32.gmra.mxu0 %v722
    %v724 = vpop.f32.mrf.mxu0
    %v725 = vadd.f32 %v642, %v724
    %v726 = vand.u32 %v102, 4294901760
    %727 = vmatmul.f32.gmra.mxu0 %v726
    %v728 = vpop.f32.mrf.mxu0
    %v729 = vadd.f32 %v646, %v728
    %v730 = vand.u32 %v105, 4294901760
    %731 = vmatmul.f32.gmra.mxu0 %v730
    %v732 = vpop.f32.mrf.mxu0
    %v733 = vadd.f32 %v650, %v732
    %734 = vdwg.mxu0
    %v735 = vmax.f32 %v673, 0.0
    %v736 = vmax.f32 %v677, 0.0
    %v737 = vmax.f32 %v681, 0.0
    %v738 = vmax.f32 %v685, 0.0
    %v739 = vmax.f32 %v689, 0.0
    %v740 = vmax.f32 %v693, 0.0
    %v741 = vmax.f32 %v697, 0.0
    %v742 = vmax.f32 %v701, 0.0
    %v743 = vmax.f32 %v705, 0.0
    %v744 = vmax.f32 %v709, 0.0
    %v745 = vmax.f32 %v713, 0.0
    %v746 = vmax.f32 %v717, 0.0
    %v747 = vmax.f32 %v721, 0.0
    %v748 = vmax.f32 %v725, 0.0
    %v749 = vmax.f32 %v729, 0.0
    %v750 = vmax.f32 %v733, 0.0
    %v751 = vld [vmem:[%s3] sm:$0xff]
    %v752 = vld [vmem:[%s3 + $0x8] sm:$0xff]
    %vm753 = vcmask 64512
    %v755 = vsel %vm753, %v735, 0
    %v758 = vsel %vm753, %v736, 0
    %v761 = vsel %vm753, %v737, 0
    %v764 = vsel %vm753, %v738, 0
    %v767 = vsel %vm753, %v739, 0
    %v770 = vsel %vm753, %v740, 0
    %v773 = vsel %vm753, %v741, 0
    %v776 = vsel %vm753, %v742, 0
    %v779 = vsel %vm753, %v743, 0
    %v782 = vsel %vm753, %v744, 0
    %v785 = vsel %vm753, %v745, 0
    %v788 = vsel %vm753, %v746, 0
    %v791 = vsel %vm753, %v747, 0
    %v794 = vsel %vm753, %v748, 0
    %v797 = vsel %vm753, %v749, 0
    %v800 = vsel %vm753, %v750, 0
    %802 = vmatpush.msra.mxu0 0.0
    %803 = vmatpush.msra.mxu0 0.0
    %804 = vmatpush.msra.mxu0 0.0
    %805 = vmatpush.msra.mxu0 0.0
    %806 = vmatpush.msra.mxu0 0.0
    %807 = vmatpush.msra.mxu0 0.0
    %808 = vmatpush.msra.mxu0 0.0
    %809 = vmatpush.msra.mxu0 0.0
    %810 = vmatpush.msra.mxu0 0.0
    %811 = vmatpush.msra.mxu0 0.0
    %812 = vmatpush.msra.mxu0 0.0
    %813 = vmatpush.msra.mxu0 0.0
    %814 = vmatpush.msra.mxu0 0.0
    %815 = vmatpush.msra.mxu0 0.0
    %816 = vmatpush.msra.mxu0 0.0
    %v817 = vand.u32 %v751, 4294901760
    %818 = vmatpush.msra.mxu0 %v817
    %v819 = vand.u32 %v755, 4294901760
    %v820 = vsub.f32 %v755, %v819
    %v821 = vand.u32 %v820, 4294901760
    %v822 = vsub.f32 %v820, %v821
    %v823 = vand.u32 %v822, 4294901760
    %824 = vmatmul.f32.gmra.mxu0 %v823
    %v825 = vpop.f32.mrf.mxu0
    %v826 = vadd.f32 0.0, %v825
    %v827 = vand.u32 %v758, 4294901760
    %v828 = vsub.f32 %v758, %v827
    %v829 = vand.u32 %v828, 4294901760
    %v830 = vsub.f32 %v828, %v829
    %v831 = vand.u32 %v830, 4294901760
    %832 = vmatmul.f32.gmra.mxu0 %v831
    %v833 = vpop.f32.mrf.mxu0
    %v834 = vadd.f32 0.0, %v833
    %v835 = vand.u32 %v761, 4294901760
    %v836 = vsub.f32 %v761, %v835
    %v837 = vand.u32 %v836, 4294901760
    %v838 = vsub.f32 %v836, %v837
    %v839 = vand.u32 %v838, 4294901760
    %840 = vmatmul.f32.gmra.mxu0 %v839
    %v841 = vpop.f32.mrf.mxu0
    %v842 = vadd.f32 0.0, %v841
    %v843 = vand.u32 %v764, 4294901760
    %v844 = vsub.f32 %v764, %v843
    %v845 = vand.u32 %v844, 4294901760
    %v846 = vsub.f32 %v844, %v845
    %v847 = vand.u32 %v846, 4294901760
    %848 = vmatmul.f32.gmra.mxu0 %v847
    %v849 = vpop.f32.mrf.mxu0
    %v850 = vadd.f32 0.0, %v849
    %v851 = vand.u32 %v767, 4294901760
    %v852 = vsub.f32 %v767, %v851
    %v853 = vand.u32 %v852, 4294901760
    %v854 = vsub.f32 %v852, %v853
    %v855 = vand.u32 %v854, 4294901760
    %856 = vmatmul.f32.gmra.mxu0 %v855
    %v857 = vpop.f32.mrf.mxu0
    %v858 = vadd.f32 0.0, %v857
    %v859 = vand.u32 %v770, 4294901760
    %v860 = vsub.f32 %v770, %v859
    %v861 = vand.u32 %v860, 4294901760
    %v862 = vsub.f32 %v860, %v861
    %v863 = vand.u32 %v862, 4294901760
    %864 = vmatmul.f32.gmra.mxu0 %v863
    %v865 = vpop.f32.mrf.mxu0
    %v866 = vadd.f32 0.0, %v865
    %v867 = vand.u32 %v773, 4294901760
    %v868 = vsub.f32 %v773, %v867
    %v869 = vand.u32 %v868, 4294901760
    %v870 = vsub.f32 %v868, %v869
    %v871 = vand.u32 %v870, 4294901760
    %872 = vmatmul.f32.gmra.mxu0 %v871
    %v873 = vpop.f32.mrf.mxu0
    %v874 = vadd.f32 0.0, %v873
    %v875 = vand.u32 %v776, 4294901760
    %v876 = vsub.f32 %v776, %v875
    %v877 = vand.u32 %v876, 4294901760
    %v878 = vsub.f32 %v876, %v877
    %v879 = vand.u32 %v878, 4294901760
    %880 = vmatmul.f32.gmra.mxu0 %v879
    %v881 = vpop.f32.mrf.mxu0
    %v882 = vadd.f32 0.0, %v881
    %v883 = vand.u32 %v779, 4294901760
    %v884 = vsub.f32 %v779, %v883
    %v885 = vand.u32 %v884, 4294901760
    %v886 = vsub.f32 %v884, %v885
    %v887 = vand.u32 %v886, 4294901760
    %888 = vmatmul.f32.gmra.mxu0 %v887
    %v889 = vpop.f32.mrf.mxu0
    %v890 = vadd.f32 0.0, %v889
    %v891 = vand.u32 %v782, 4294901760
    %v892 = vsub.f32 %v782, %v891
    %v893 = vand.u32 %v892, 4294901760
    %v894 = vsub.f32 %v892, %v893
    %v895 = vand.u32 %v894, 4294901760
    %896 = vmatmul.f32.gmra.mxu0 %v895
    %v897 = vpop.f32.mrf.mxu0
    %v898 = vadd.f32 0.0, %v897
    %v899 = vand.u32 %v785, 4294901760
    %v900 = vsub.f32 %v785, %v899
    %v901 = vand.u32 %v900, 4294901760
    %v902 = vsub.f32 %v900, %v901
    %v903 = vand.u32 %v902, 4294901760
    %904 = vmatmul.f32.gmra.mxu0 %v903
    %v905 = vpop.f32.mrf.mxu0
    %v906 = vadd.f32 0.0, %v905
    %v907 = vand.u32 %v788, 4294901760
    %v908 = vsub.f32 %v788, %v907
    %v909 = vand.u32 %v908, 4294901760
    %v910 = vsub.f32 %v908, %v909
    %v911 = vand.u32 %v910, 4294901760
    %912 = vmatmul.f32.gmra.mxu0 %v911
    %v913 = vpop.f32.mrf.mxu0
    %v914 = vadd.f32 0.0, %v913
    %v915 = vand.u32 %v791, 4294901760
    %v916 = vsub.f32 %v791, %v915
    %v917 = vand.u32 %v916, 4294901760
    %v918 = vsub.f32 %v916, %v917
    %v919 = vand.u32 %v918, 4294901760
    %920 = vmatmul.f32.gmra.mxu0 %v919
    %v921 = vpop.f32.mrf.mxu0
    %v922 = vadd.f32 0.0, %v921
    %v923 = vand.u32 %v794, 4294901760
    %v924 = vsub.f32 %v794, %v923
    %v925 = vand.u32 %v924, 4294901760
    %v926 = vsub.f32 %v924, %v925
    %v927 = vand.u32 %v926, 4294901760
    %928 = vmatmul.f32.gmra.mxu0 %v927
    %v929 = vpop.f32.mrf.mxu0
    %v930 = vadd.f32 0.0, %v929
    %v931 = vand.u32 %v797, 4294901760
    %v932 = vsub.f32 %v797, %v931
    %v933 = vand.u32 %v932, 4294901760
    %v934 = vsub.f32 %v932, %v933
    %v935 = vand.u32 %v934, 4294901760
    %936 = vmatmul.f32.gmra.mxu0 %v935
    %v937 = vpop.f32.mrf.mxu0
    %v938 = vadd.f32 0.0, %v937
    %v939 = vand.u32 %v800, 4294901760
    %v940 = vsub.f32 %v800, %v939
    %v941 = vand.u32 %v940, 4294901760
    %v942 = vsub.f32 %v940, %v941
    %v943 = vand.u32 %v942, 4294901760
    %944 = vmatmul.f32.gmra.mxu0 %v943
    %v945 = vpop.f32.mrf.mxu0
    %v946 = vadd.f32 0.0, %v945
    %947 = vdwg.mxu0
    %948 = vmatpush.msra.mxu0 0.0
    %949 = vmatpush.msra.mxu0 0.0
    %950 = vmatpush.msra.mxu0 0.0
    %951 = vmatpush.msra.mxu0 0.0
    %952 = vmatpush.msra.mxu0 0.0
    %953 = vmatpush.msra.mxu0 0.0
    %954 = vmatpush.msra.mxu0 0.0
    %955 = vmatpush.msra.mxu0 0.0
    %956 = vmatpush.msra.mxu0 0.0
    %957 = vmatpush.msra.mxu0 0.0
    %958 = vmatpush.msra.mxu0 0.0
    %959 = vmatpush.msra.mxu0 0.0
    %960 = vmatpush.msra.mxu0 0.0
    %961 = vmatpush.msra.mxu0 0.0
    %962 = vmatpush.msra.mxu0 0.0
    %v963 = vand.u32 %v751, 4294901760
    %v964 = vsub.f32 %v751, %v963
    %v965 = vand.u32 %v964, 4294901760
    %v966 = vsub.f32 %v964, %v965
    %v967 = vand.u32 %v966, 4294901760
    %968 = vmatpush.msra.mxu0 %v967
    %v969 = vand.u32 %v755, 4294901760
    %970 = vmatmul.f32.gmra.mxu0 %v969
    %v971 = vpop.f32.mrf.mxu0
    %v972 = vadd.f32 %v826, %v971
    %v973 = vand.u32 %v758, 4294901760
    %974 = vmatmul.f32.gmra.mxu0 %v973
    %v975 = vpop.f32.mrf.mxu0
    %v976 = vadd.f32 %v834, %v975
    %v977 = vand.u32 %v761, 4294901760
    %978 = vmatmul.f32.gmra.mxu0 %v977
    %v979 = vpop.f32.mrf.mxu0
    %v980 = vadd.f32 %v842, %v979
    %v981 = vand.u32 %v764, 4294901760
    %982 = vmatmul.f32.gmra.mxu0 %v981
    %v983 = vpop.f32.mrf.mxu0
    %v984 = vadd.f32 %v850, %v983
    %v985 = vand.u32 %v767, 4294901760
    %986 = vmatmul.f32.gmra.mxu0 %v985
    %v987 = vpop.f32.mrf.mxu0
    %v988 = vadd.f32 %v858, %v987
    %v989 = vand.u32 %v770, 4294901760
    %990 = vmatmul.f32.gmra.mxu0 %v989
    %v991 = vpop.f32.mrf.mxu0
    %v992 = vadd.f32 %v866, %v991
    %v993 = vand.u32 %v773, 4294901760
    %994 = vmatmul.f32.gmra.mxu0 %v993
    %v995 = vpop.f32.mrf.mxu0
    %v996 = vadd.f32 %v874, %v995
    %v997 = vand.u32 %v776, 4294901760
    %998 = vmatmul.f32.gmra.mxu0 %v997
    %v999 = vpop.f32.mrf.mxu0
    %v1000 = vadd.f32 %v882, %v999
    %v1001 = vand.u32 %v779, 4294901760
    %1002 = vmatmul.f32.gmra.mxu0 %v1001
    %v1003 = vpop.f32.mrf.mxu0
    %v1004 = vadd.f32 %v890, %v1003
    %v1005 = vand.u32 %v782, 4294901760
    %1006 = vmatmul.f32.gmra.mxu0 %v1005
    %v1007 = vpop.f32.mrf.mxu0
    %v1008 = vadd.f32 %v898, %v1007
    %v1009 = vand.u32 %v785, 4294901760
    %1010 = vmatmul.f32.gmra.mxu0 %v1009
    %v1011 = vpop.f32.mrf.mxu0
    %v1012 = vadd.f32 %v906, %v1011
    %v1013 = vand.u32 %v788, 4294901760
    %1014 = vmatmul.f32.gmra.mxu0 %v1013
    %v1015 = vpop.f32.mrf.mxu0
    %v1016 = vadd.f32 %v914, %v1015
    %v1017 = vand.u32 %v791, 4294901760
    %1018 = vmatmul.f32.gmra.mxu0 %v1017
    %v1019 = vpop.f32.mrf.mxu0
    %v1020 = vadd.f32 %v922, %v1019
    %v1021 = vand.u32 %v794, 4294901760
    %1022 = vmatmul.f32.gmra.mxu0 %v1021
    %v1023 = vpop.f32.mrf.mxu0
    %v1024 = vadd.f32 %v930, %v1023
    %v1025 = vand.u32 %v797, 4294901760
    %1026 = vmatmul.f32.gmra.mxu0 %v1025
    %v1027 = vpop.f32.mrf.mxu0
    %v1028 = vadd.f32 %v938, %v1027
    %v1029 = vand.u32 %v800, 4294901760
    %1030 = vmatmul.f32.gmra.mxu0 %v1029
    %v1031 = vpop.f32.mrf.mxu0
    %v1032 = vadd.f32 %v946, %v1031
    %1033 = vdwg.mxu0
    %1034 = vmatpush.msra.mxu0 0.0
    %1035 = vmatpush.msra.mxu0 0.0
    %1036 = vmatpush.msra.mxu0 0.0
    %1037 = vmatpush.msra.mxu0 0.0
    %1038 = vmatpush.msra.mxu0 0.0
    %1039 = vmatpush.msra.mxu0 0.0
    %1040 = vmatpush.msra.mxu0 0.0
    %1041 = vmatpush.msra.mxu0 0.0
    %1042 = vmatpush.msra.mxu0 0.0
    %1043 = vmatpush.msra.mxu0 0.0
    %1044 = vmatpush.msra.mxu0 0.0
    %1045 = vmatpush.msra.mxu0 0.0
    %1046 = vmatpush.msra.mxu0 0.0
    %1047 = vmatpush.msra.mxu0 0.0
    %1048 = vmatpush.msra.mxu0 0.0
    %v1049 = vand.u32 %v751, 4294901760
    %v1050 = vsub.f32 %v751, %v1049
    %1051 = vmatpush.msra.mxu0 %v1050
    %v1052 = vand.u32 %v755, 4294901760
    %v1053 = vsub.f32 %v755, %v1052
    %1054 = vmatmul.f32.gmra.mxu0 %v1053
    %v1055 = vpop.f32.mrf.mxu0
    %v1056 = vadd.f32 %v972, %v1055
    %v1057 = vand.u32 %v758, 4294901760
    %v1058 = vsub.f32 %v758, %v1057
    %1059 = vmatmul.f32.gmra.mxu0 %v1058
    %v1060 = vpop.f32.mrf.mxu0
    %v1061 = vadd.f32 %v976, %v1060
    %v1062 = vand.u32 %v761, 4294901760
    %v1063 = vsub.f32 %v761, %v1062
    %1064 = vmatmul.f32.gmra.mxu0 %v1063
    %v1065 = vpop.f32.mrf.mxu0
    %v1066 = vadd.f32 %v980, %v1065
    %v1067 = vand.u32 %v764, 4294901760
    %v1068 = vsub.f32 %v764, %v1067
    %1069 = vmatmul.f32.gmra.mxu0 %v1068
    %v1070 = vpop.f32.mrf.mxu0
    %v1071 = vadd.f32 %v984, %v1070
    %v1072 = vand.u32 %v767, 4294901760
    %v1073 = vsub.f32 %v767, %v1072
    %1074 = vmatmul.f32.gmra.mxu0 %v1073
    %v1075 = vpop.f32.mrf.mxu0
    %v1076 = vadd.f32 %v988, %v1075
    %v1077 = vand.u32 %v770, 4294901760
    %v1078 = vsub.f32 %v770, %v1077
    %1079 = vmatmul.f32.gmra.mxu0 %v1078
    %v1080 = vpop.f32.mrf.mxu0
    %v1081 = vadd.f32 %v992, %v1080
    %v1082 = vand.u32 %v773, 4294901760
    %v1083 = vsub.f32 %v773, %v1082
    %1084 = vmatmul.f32.gmra.mxu0 %v1083
    %v1085 = vpop.f32.mrf.mxu0
    %v1086 = vadd.f32 %v996, %v1085
    %v1087 = vand.u32 %v776, 4294901760
    %v1088 = vsub.f32 %v776, %v1087
    %1089 = vmatmul.f32.gmra.mxu0 %v1088
    %v1090 = vpop.f32.mrf.mxu0
    %v1091 = vadd.f32 %v1000, %v1090
    %v1092 = vand.u32 %v779, 4294901760
    %v1093 = vsub.f32 %v779, %v1092
    %1094 = vmatmul.f32.gmra.mxu0 %v1093
    %v1095 = vpop.f32.mrf.mxu0
    %v1096 = vadd.f32 %v1004, %v1095
    %v1097 = vand.u32 %v782, 4294901760
    %v1098 = vsub.f32 %v782, %v1097
    %1099 = vmatmul.f32.gmra.mxu0 %v1098
    %v1100 = vpop.f32.mrf.mxu0
    %v1101 = vadd.f32 %v1008, %v1100
    %v1102 = vand.u32 %v785, 4294901760
    %v1103 = vsub.f32 %v785, %v1102
    %1104 = vmatmul.f32.gmra.mxu0 %v1103
    %v1105 = vpop.f32.mrf.mxu0
    %v1106 = vadd.f32 %v1012, %v1105
    %v1107 = vand.u32 %v788, 4294901760
    %v1108 = vsub.f32 %v788, %v1107
    %1109 = vmatmul.f32.gmra.mxu0 %v1108
    %v1110 = vpop.f32.mrf.mxu0
    %v1111 = vadd.f32 %v1016, %v1110
    %v1112 = vand.u32 %v791, 4294901760
    %v1113 = vsub.f32 %v791, %v1112
    %1114 = vmatmul.f32.gmra.mxu0 %v1113
    %v1115 = vpop.f32.mrf.mxu0
    %v1116 = vadd.f32 %v1020, %v1115
    %v1117 = vand.u32 %v794, 4294901760
    %v1118 = vsub.f32 %v794, %v1117
    %1119 = vmatmul.f32.gmra.mxu0 %v1118
    %v1120 = vpop.f32.mrf.mxu0
    %v1121 = vadd.f32 %v1024, %v1120
    %v1122 = vand.u32 %v797, 4294901760
    %v1123 = vsub.f32 %v797, %v1122
    %1124 = vmatmul.f32.gmra.mxu0 %v1123
    %v1125 = vpop.f32.mrf.mxu0
    %v1126 = vadd.f32 %v1028, %v1125
    %v1127 = vand.u32 %v800, 4294901760
    %v1128 = vsub.f32 %v800, %v1127
    %1129 = vmatmul.f32.gmra.mxu0 %v1128
    %v1130 = vpop.f32.mrf.mxu0
    %v1131 = vadd.f32 %v1032, %v1130
    %1132 = vdwg.mxu0
    %1133 = vmatpush.msra.mxu0 0.0
    %1134 = vmatpush.msra.mxu0 0.0
    %1135 = vmatpush.msra.mxu0 0.0
    %1136 = vmatpush.msra.mxu0 0.0
    %1137 = vmatpush.msra.mxu0 0.0
    %1138 = vmatpush.msra.mxu0 0.0
    %1139 = vmatpush.msra.mxu0 0.0
    %1140 = vmatpush.msra.mxu0 0.0
    %1141 = vmatpush.msra.mxu0 0.0
    %1142 = vmatpush.msra.mxu0 0.0
    %1143 = vmatpush.msra.mxu0 0.0
    %1144 = vmatpush.msra.mxu0 0.0
    %1145 = vmatpush.msra.mxu0 0.0
    %1146 = vmatpush.msra.mxu0 0.0
    %1147 = vmatpush.msra.mxu0 0.0
    %v1148 = vand.u32 %v751, 4294901760
    %1149 = vmatpush.msra.mxu0 %v1148
    %v1150 = vand.u32 %v755, 4294901760
    %v1151 = vsub.f32 %v755, %v1150
    %v1152 = vand.u32 %v1151, 4294901760
    %1153 = vmatmul.f32.gmra.mxu0 %v1152
    %v1154 = vpop.f32.mrf.mxu0
    %v1155 = vadd.f32 %v1056, %v1154
    %v1156 = vand.u32 %v758, 4294901760
    %v1157 = vsub.f32 %v758, %v1156
    %v1158 = vand.u32 %v1157, 4294901760
    %1159 = vmatmul.f32.gmra.mxu0 %v1158
    %v1160 = vpop.f32.mrf.mxu0
    %v1161 = vadd.f32 %v1061, %v1160
    %v1162 = vand.u32 %v761, 4294901760
    %v1163 = vsub.f32 %v761, %v1162
    %v1164 = vand.u32 %v1163, 4294901760
    %1165 = vmatmul.f32.gmra.mxu0 %v1164
    %v1166 = vpop.f32.mrf.mxu0
    %v1167 = vadd.f32 %v1066, %v1166
    %v1168 = vand.u32 %v764, 4294901760
    %v1169 = vsub.f32 %v764, %v1168
    %v1170 = vand.u32 %v1169, 4294901760
    %1171 = vmatmul.f32.gmra.mxu0 %v1170
    %v1172 = vpop.f32.mrf.mxu0
    %v1173 = vadd.f32 %v1071, %v1172
    %v1174 = vand.u32 %v767, 4294901760
    %v1175 = vsub.f32 %v767, %v1174
    %v1176 = vand.u32 %v1175, 4294901760
    %1177 = vmatmul.f32.gmra.mxu0 %v1176
    %v1178 = vpop.f32.mrf.mxu0
    %v1179 = vadd.f32 %v1076, %v1178
    %v1180 = vand.u32 %v770, 4294901760
    %v1181 = vsub.f32 %v770, %v1180
    %v1182 = vand.u32 %v1181, 4294901760
    %1183 = vmatmul.f32.gmra.mxu0 %v1182
    %v1184 = vpop.f32.mrf.mxu0
    %v1185 = vadd.f32 %v1081, %v1184
    %v1186 = vand.u32 %v773, 4294901760
    %v1187 = vsub.f32 %v773, %v1186
    %v1188 = vand.u32 %v1187, 4294901760
    %1189 = vmatmul.f32.gmra.mxu0 %v1188
    %v1190 = vpop.f32.mrf.mxu0
    %v1191 = vadd.f32 %v1086, %v1190
    %v1192 = vand.u32 %v776, 4294901760
    %v1193 = vsub.f32 %v776, %v1192
    %v1194 = vand.u32 %v1193, 4294901760
    %1195 = vmatmul.f32.gmra.mxu0 %v1194
    %v1196 = vpop.f32.mrf.mxu0
    %v1197 = vadd.f32 %v1091, %v1196
    %v1198 = vand.u32 %v779, 4294901760
    %v1199 = vsub.f32 %v779, %v1198
    %v1200 = vand.u32 %v1199, 4294901760
    %1201 = vmatmul.f32.gmra.mxu0 %v1200
    %v1202 = vpop.f32.mrf.mxu0
    %v1203 = vadd.f32 %v1096, %v1202
    %v1204 = vand.u32 %v782, 4294901760
    %v1205 = vsub.f32 %v782, %v1204
    %v1206 = vand.u32 %v1205, 4294901760
    %1207 = vmatmul.f32.gmra.mxu0 %v1206
    %v1208 = vpop.f32.mrf.mxu0
    %v1209 = vadd.f32 %v1101, %v1208
    %v1210 = vand.u32 %v785, 4294901760
    %v1211 = vsub.f32 %v785, %v1210
    %v1212 = vand.u32 %v1211, 4294901760
    %1213 = vmatmul.f32.gmra.mxu0 %v1212
    %v1214 = vpop.f32.mrf.mxu0
    %v1215 = vadd.f32 %v1106, %v1214
    %v1216 = vand.u32 %v788, 4294901760
    %v1217 = vsub.f32 %v788, %v1216
    %v1218 = vand.u32 %v1217, 4294901760
    %1219 = vmatmul.f32.gmra.mxu0 %v1218
    %v1220 = vpop.f32.mrf.mxu0
    %v1221 = vadd.f32 %v1111, %v1220
    %v1222 = vand.u32 %v791, 4294901760
    %v1223 = vsub.f32 %v791, %v1222
    %v1224 = vand.u32 %v1223, 4294901760
    %1225 = vmatmul.f32.gmra.mxu0 %v1224
    %v1226 = vpop.f32.mrf.mxu0
    %v1227 = vadd.f32 %v1116, %v1226
    %v1228 = vand.u32 %v794, 4294901760
    %v1229 = vsub.f32 %v794, %v1228
    %v1230 = vand.u32 %v1229, 4294901760
    %1231 = vmatmul.f32.gmra.mxu0 %v1230
    %v1232 = vpop.f32.mrf.mxu0
    %v1233 = vadd.f32 %v1121, %v1232
    %v1234 = vand.u32 %v797, 4294901760
    %v1235 = vsub.f32 %v797, %v1234
    %v1236 = vand.u32 %v1235, 4294901760
    %1237 = vmatmul.f32.gmra.mxu0 %v1236
    %v1238 = vpop.f32.mrf.mxu0
    %v1239 = vadd.f32 %v1126, %v1238
    %v1240 = vand.u32 %v800, 4294901760
    %v1241 = vsub.f32 %v800, %v1240
    %v1242 = vand.u32 %v1241, 4294901760
    %1243 = vmatmul.f32.gmra.mxu0 %v1242
    %v1244 = vpop.f32.mrf.mxu0
    %v1245 = vadd.f32 %v1131, %v1244
    %1246 = vdwg.mxu0
    %1247 = vmatpush.msra.mxu0 0.0
    %1248 = vmatpush.msra.mxu0 0.0
    %1249 = vmatpush.msra.mxu0 0.0
    %1250 = vmatpush.msra.mxu0 0.0
    %1251 = vmatpush.msra.mxu0 0.0
    %1252 = vmatpush.msra.mxu0 0.0
    %1253 = vmatpush.msra.mxu0 0.0
    %1254 = vmatpush.msra.mxu0 0.0
    %1255 = vmatpush.msra.mxu0 0.0
    %1256 = vmatpush.msra.mxu0 0.0
    %1257 = vmatpush.msra.mxu0 0.0
    %1258 = vmatpush.msra.mxu0 0.0
    %1259 = vmatpush.msra.mxu0 0.0
    %1260 = vmatpush.msra.mxu0 0.0
    %1261 = vmatpush.msra.mxu0 0.0
    %v1262 = vand.u32 %v751, 4294901760
    %v1263 = vsub.f32 %v751, %v1262
    %v1264 = vand.u32 %v1263, 4294901760
    %1265 = vmatpush.msra.mxu0 %v1264
    %v1266 = vand.u32 %v755, 4294901760
    %1267 = vmatmul.f32.gmra.mxu0 %v1266
    %v1268 = vpop.f32.mrf.mxu0
    %v1269 = vadd.f32 %v1155, %v1268
    %v1270 = vand.u32 %v758, 4294901760
    %1271 = vmatmul.f32.gmra.mxu0 %v1270
    %v1272 = vpop.f32.mrf.mxu0
    %v1273 = vadd.f32 %v1161, %v1272
    %v1274 = vand.u32 %v761, 4294901760
    %1275 = vmatmul.f32.gmra.mxu0 %v1274
    %v1276 = vpop.f32.mrf.mxu0
    %v1277 = vadd.f32 %v1167, %v1276
    %v1278 = vand.u32 %v764, 4294901760
    %1279 = vmatmul.f32.gmra.mxu0 %v1278
    %v1280 = vpop.f32.mrf.mxu0
    %v1281 = vadd.f32 %v1173, %v1280
    %v1282 = vand.u32 %v767, 4294901760
    %1283 = vmatmul.f32.gmra.mxu0 %v1282
    %v1284 = vpop.f32.mrf.mxu0
    %v1285 = vadd.f32 %v1179, %v1284
    %v1286 = vand.u32 %v770, 4294901760
    %1287 = vmatmul.f32.gmra.mxu0 %v1286
    %v1288 = vpop.f32.mrf.mxu0
    %v1289 = vadd.f32 %v1185, %v1288
    %v1290 = vand.u32 %v773, 4294901760
    %1291 = vmatmul.f32.gmra.mxu0 %v1290
    %v1292 = vpop.f32.mrf.mxu0
    %v1293 = vadd.f32 %v1191, %v1292
    %v1294 = vand.u32 %v776, 4294901760
    %1295 = vmatmul.f32.gmra.mxu0 %v1294
    %v1296 = vpop.f32.mrf.mxu0
    %v1297 = vadd.f32 %v1197, %v1296
    %v1298 = vand.u32 %v779, 4294901760
    %1299 = vmatmul.f32.gmra.mxu0 %v1298
    %v1300 = vpop.f32.mrf.mxu0
    %v1301 = vadd.f32 %v1203, %v1300
    %v1302 = vand.u32 %v782, 4294901760
    %1303 = vmatmul.f32.gmra.mxu0 %v1302
    %v1304 = vpop.f32.mrf.mxu0
    %v1305 = vadd.f32 %v1209, %v1304
    %v1306 = vand.u32 %v785, 4294901760
    %1307 = vmatmul.f32.gmra.mxu0 %v1306
    %v1308 = vpop.f32.mrf.mxu0
    %v1309 = vadd.f32 %v1215, %v1308
    %v1310 = vand.u32 %v788, 4294901760
    %1311 = vmatmul.f32.gmra.mxu0 %v1310
    %v1312 = vpop.f32.mrf.mxu0
    %v1313 = vadd.f32 %v1221, %v1312
    %v1314 = vand.u32 %v791, 4294901760
    %1315 = vmatmul.f32.gmra.mxu0 %v1314
    %v1316 = vpop.f32.mrf.mxu0
    %v1317 = vadd.f32 %v1227, %v1316
    %v1318 = vand.u32 %v794, 4294901760
    %1319 = vmatmul.f32.gmra.mxu0 %v1318
    %v1320 = vpop.f32.mrf.mxu0
    %v1321 = vadd.f32 %v1233, %v1320
    %v1322 = vand.u32 %v797, 4294901760
    %1323 = vmatmul.f32.gmra.mxu0 %v1322
    %v1324 = vpop.f32.mrf.mxu0
    %v1325 = vadd.f32 %v1239, %v1324
    %v1326 = vand.u32 %v800, 4294901760
    %1327 = vmatmul.f32.gmra.mxu0 %v1326
    %v1328 = vpop.f32.mrf.mxu0
    %v1329 = vadd.f32 %v1245, %v1328
    %1330 = vdwg.mxu0
    %1331 = vmatpush.msra.mxu0 0.0
    %1332 = vmatpush.msra.mxu0 0.0
    %1333 = vmatpush.msra.mxu0 0.0
    %1334 = vmatpush.msra.mxu0 0.0
    %1335 = vmatpush.msra.mxu0 0.0
    %1336 = vmatpush.msra.mxu0 0.0
    %1337 = vmatpush.msra.mxu0 0.0
    %1338 = vmatpush.msra.mxu0 0.0
    %1339 = vmatpush.msra.mxu0 0.0
    %1340 = vmatpush.msra.mxu0 0.0
    %1341 = vmatpush.msra.mxu0 0.0
    %1342 = vmatpush.msra.mxu0 0.0
    %1343 = vmatpush.msra.mxu0 0.0
    %1344 = vmatpush.msra.mxu0 0.0
    %1345 = vmatpush.msra.mxu0 0.0
    %v1346 = vand.u32 %v751, 4294901760
    %1347 = vmatpush.msra.mxu0 %v1346
    %v1348 = vand.u32 %v755, 4294901760
    %1349 = vmatmul.f32.gmra.mxu0 %v1348
    %v1350 = vpop.f32.mrf.mxu0
    %v1351 = vadd.f32 %v1269, %v1350
    %v1352 = vand.u32 %v758, 4294901760
    %1353 = vmatmul.f32.gmra.mxu0 %v1352
    %v1354 = vpop.f32.mrf.mxu0
    %v1355 = vadd.f32 %v1273, %v1354
    %v1356 = vand.u32 %v761, 4294901760
    %1357 = vmatmul.f32.gmra.mxu0 %v1356
    %v1358 = vpop.f32.mrf.mxu0
    %v1359 = vadd.f32 %v1277, %v1358
    %v1360 = vand.u32 %v764, 4294901760
    %1361 = vmatmul.f32.gmra.mxu0 %v1360
    %v1362 = vpop.f32.mrf.mxu0
    %v1363 = vadd.f32 %v1281, %v1362
    %v1364 = vand.u32 %v767, 4294901760
    %1365 = vmatmul.f32.gmra.mxu0 %v1364
    %v1366 = vpop.f32.mrf.mxu0
    %v1367 = vadd.f32 %v1285, %v1366
    %v1368 = vand.u32 %v770, 4294901760
    %1369 = vmatmul.f32.gmra.mxu0 %v1368
    %v1370 = vpop.f32.mrf.mxu0
    %v1371 = vadd.f32 %v1289, %v1370
    %v1372 = vand.u32 %v773, 4294901760
    %1373 = vmatmul.f32.gmra.mxu0 %v1372
    %v1374 = vpop.f32.mrf.mxu0
    %v1375 = vadd.f32 %v1293, %v1374
    %v1376 = vand.u32 %v776, 4294901760
    %1377 = vmatmul.f32.gmra.mxu0 %v1376
    %v1378 = vpop.f32.mrf.mxu0
    %v1379 = vadd.f32 %v1297, %v1378
    %v1380 = vand.u32 %v779, 4294901760
    %1381 = vmatmul.f32.gmra.mxu0 %v1380
    %v1382 = vpop.f32.mrf.mxu0
    %v1383 = vadd.f32 %v1301, %v1382
    %v1384 = vand.u32 %v782, 4294901760
    %1385 = vmatmul.f32.gmra.mxu0 %v1384
    %v1386 = vpop.f32.mrf.mxu0
    %v1387 = vadd.f32 %v1305, %v1386
    %v1388 = vand.u32 %v785, 4294901760
    %1389 = vmatmul.f32.gmra.mxu0 %v1388
    %v1390 = vpop.f32.mrf.mxu0
    %v1391 = vadd.f32 %v1309, %v1390
    %v1392 = vand.u32 %v788, 4294901760
    %1393 = vmatmul.f32.gmra.mxu0 %v1392
    %v1394 = vpop.f32.mrf.mxu0
    %v1395 = vadd.f32 %v1313, %v1394
    %v1396 = vand.u32 %v791, 4294901760
    %1397 = vmatmul.f32.gmra.mxu0 %v1396
    %v1398 = vpop.f32.mrf.mxu0
    %v1399 = vadd.f32 %v1317, %v1398
    %v1400 = vand.u32 %v794, 4294901760
    %1401 = vmatmul.f32.gmra.mxu0 %v1400
    %v1402 = vpop.f32.mrf.mxu0
    %v1403 = vadd.f32 %v1321, %v1402
    %v1404 = vand.u32 %v797, 4294901760
    %1405 = vmatmul.f32.gmra.mxu0 %v1404
    %v1406 = vpop.f32.mrf.mxu0
    %v1407 = vadd.f32 %v1325, %v1406
    %v1408 = vand.u32 %v800, 4294901760
    %1409 = vmatmul.f32.gmra.mxu0 %v1408
    %v1410 = vpop.f32.mrf.mxu0
    %v1411 = vadd.f32 %v1329, %v1410
    %1412 = vdwg.mxu0
    %1413 = vmatpush.msra.mxu0 0.0
    %1414 = vmatpush.msra.mxu0 0.0
    %1415 = vmatpush.msra.mxu0 0.0
    %1416 = vmatpush.msra.mxu0 0.0
    %1417 = vmatpush.msra.mxu0 0.0
    %1418 = vmatpush.msra.mxu0 0.0
    %1419 = vmatpush.msra.mxu0 0.0
    %1420 = vmatpush.msra.mxu0 0.0
    %1421 = vmatpush.msra.mxu0 0.0
    %1422 = vmatpush.msra.mxu0 0.0
    %1423 = vmatpush.msra.mxu0 0.0
    %1424 = vmatpush.msra.mxu0 0.0
    %1425 = vmatpush.msra.mxu0 0.0
    %1426 = vmatpush.msra.mxu0 0.0
    %1427 = vmatpush.msra.mxu0 0.0
    %v1428 = vand.u32 %v752, 4294901760
    %1429 = vmatpush.msra.mxu0 %v1428
    %v1430 = vand.u32 %v755, 4294901760
    %v1431 = vsub.f32 %v755, %v1430
    %v1432 = vand.u32 %v1431, 4294901760
    %v1433 = vsub.f32 %v1431, %v1432
    %v1434 = vand.u32 %v1433, 4294901760
    %1435 = vmatmul.f32.gmra.mxu0 %v1434
    %v1436 = vpop.f32.mrf.mxu0
    %v1437 = vadd.f32 0.0, %v1436
    %v1438 = vand.u32 %v758, 4294901760
    %v1439 = vsub.f32 %v758, %v1438
    %v1440 = vand.u32 %v1439, 4294901760
    %v1441 = vsub.f32 %v1439, %v1440
    %v1442 = vand.u32 %v1441, 4294901760
    %1443 = vmatmul.f32.gmra.mxu0 %v1442
    %v1444 = vpop.f32.mrf.mxu0
    %v1445 = vadd.f32 0.0, %v1444
    %v1446 = vand.u32 %v761, 4294901760
    %v1447 = vsub.f32 %v761, %v1446
    %v1448 = vand.u32 %v1447, 4294901760
    %v1449 = vsub.f32 %v1447, %v1448
    %v1450 = vand.u32 %v1449, 4294901760
    %1451 = vmatmul.f32.gmra.mxu0 %v1450
    %v1452 = vpop.f32.mrf.mxu0
    %v1453 = vadd.f32 0.0, %v1452
    %v1454 = vand.u32 %v764, 4294901760
    %v1455 = vsub.f32 %v764, %v1454
    %v1456 = vand.u32 %v1455, 4294901760
    %v1457 = vsub.f32 %v1455, %v1456
    %v1458 = vand.u32 %v1457, 4294901760
    %1459 = vmatmul.f32.gmra.mxu0 %v1458
    %v1460 = vpop.f32.mrf.mxu0
    %v1461 = vadd.f32 0.0, %v1460
    %v1462 = vand.u32 %v767, 4294901760
    %v1463 = vsub.f32 %v767, %v1462
    %v1464 = vand.u32 %v1463, 4294901760
    %v1465 = vsub.f32 %v1463, %v1464
    %v1466 = vand.u32 %v1465, 4294901760
    %1467 = vmatmul.f32.gmra.mxu0 %v1466
    %v1468 = vpop.f32.mrf.mxu0
    %v1469 = vadd.f32 0.0, %v1468
    %v1470 = vand.u32 %v770, 4294901760
    %v1471 = vsub.f32 %v770, %v1470
    %v1472 = vand.u32 %v1471, 4294901760
    %v1473 = vsub.f32 %v1471, %v1472
    %v1474 = vand.u32 %v1473, 4294901760
    %1475 = vmatmul.f32.gmra.mxu0 %v1474
    %v1476 = vpop.f32.mrf.mxu0
    %v1477 = vadd.f32 0.0, %v1476
    %v1478 = vand.u32 %v773, 4294901760
    %v1479 = vsub.f32 %v773, %v1478
    %v1480 = vand.u32 %v1479, 4294901760
    %v1481 = vsub.f32 %v1479, %v1480
    %v1482 = vand.u32 %v1481, 4294901760
    %1483 = vmatmul.f32.gmra.mxu0 %v1482
    %v1484 = vpop.f32.mrf.mxu0
    %v1485 = vadd.f32 0.0, %v1484
    %v1486 = vand.u32 %v776, 4294901760
    %v1487 = vsub.f32 %v776, %v1486
    %v1488 = vand.u32 %v1487, 4294901760
    %v1489 = vsub.f32 %v1487, %v1488
    %v1490 = vand.u32 %v1489, 4294901760
    %1491 = vmatmul.f32.gmra.mxu0 %v1490
    %v1492 = vpop.f32.mrf.mxu0
    %v1493 = vadd.f32 0.0, %v1492
    %v1494 = vand.u32 %v779, 4294901760
    %v1495 = vsub.f32 %v779, %v1494
    %v1496 = vand.u32 %v1495, 4294901760
    %v1497 = vsub.f32 %v1495, %v1496
    %v1498 = vand.u32 %v1497, 4294901760
    %1499 = vmatmul.f32.gmra.mxu0 %v1498
    %v1500 = vpop.f32.mrf.mxu0
    %v1501 = vadd.f32 0.0, %v1500
    %v1502 = vand.u32 %v782, 4294901760
    %v1503 = vsub.f32 %v782, %v1502
    %v1504 = vand.u32 %v1503, 4294901760
    %v1505 = vsub.f32 %v1503, %v1504
    %v1506 = vand.u32 %v1505, 4294901760
    %1507 = vmatmul.f32.gmra.mxu0 %v1506
    %v1508 = vpop.f32.mrf.mxu0
    %v1509 = vadd.f32 0.0, %v1508
    %v1510 = vand.u32 %v785, 4294901760
    %v1511 = vsub.f32 %v785, %v1510
    %v1512 = vand.u32 %v1511, 4294901760
    %v1513 = vsub.f32 %v1511, %v1512
    %v1514 = vand.u32 %v1513, 4294901760
    %1515 = vmatmul.f32.gmra.mxu0 %v1514
    %v1516 = vpop.f32.mrf.mxu0
    %v1517 = vadd.f32 0.0, %v1516
    %v1518 = vand.u32 %v788, 4294901760
    %v1519 = vsub.f32 %v788, %v1518
    %v1520 = vand.u32 %v1519, 4294901760
    %v1521 = vsub.f32 %v1519, %v1520
    %v1522 = vand.u32 %v1521, 4294901760
    %1523 = vmatmul.f32.gmra.mxu0 %v1522
    %v1524 = vpop.f32.mrf.mxu0
    %v1525 = vadd.f32 0.0, %v1524
    %v1526 = vand.u32 %v791, 4294901760
    %v1527 = vsub.f32 %v791, %v1526
    %v1528 = vand.u32 %v1527, 4294901760
    %v1529 = vsub.f32 %v1527, %v1528
    %v1530 = vand.u32 %v1529, 4294901760
    %1531 = vmatmul.f32.gmra.mxu0 %v1530
    %v1532 = vpop.f32.mrf.mxu0
    %v1533 = vadd.f32 0.0, %v1532
    %v1534 = vand.u32 %v794, 4294901760
    %v1535 = vsub.f32 %v794, %v1534
    %v1536 = vand.u32 %v1535, 4294901760
    %v1537 = vsub.f32 %v1535, %v1536
    %v1538 = vand.u32 %v1537, 4294901760
    %1539 = vmatmul.f32.gmra.mxu0 %v1538
    %v1540 = vpop.f32.mrf.mxu0
    %v1541 = vadd.f32 0.0, %v1540
    %v1542 = vand.u32 %v797, 4294901760
    %v1543 = vsub.f32 %v797, %v1542
    %v1544 = vand.u32 %v1543, 4294901760
    %v1545 = vsub.f32 %v1543, %v1544
    %v1546 = vand.u32 %v1545, 4294901760
    %1547 = vmatmul.f32.gmra.mxu0 %v1546
    %v1548 = vpop.f32.mrf.mxu0
    %v1549 = vadd.f32 0.0, %v1548
    %v1550 = vand.u32 %v800, 4294901760
    %v1551 = vsub.f32 %v800, %v1550
    %v1552 = vand.u32 %v1551, 4294901760
    %v1553 = vsub.f32 %v1551, %v1552
    %v1554 = vand.u32 %v1553, 4294901760
    %1555 = vmatmul.f32.gmra.mxu0 %v1554
    %v1556 = vpop.f32.mrf.mxu0
    %v1557 = vadd.f32 0.0, %v1556
    %1558 = vdwg.mxu0
    %1559 = vmatpush.msra.mxu0 0.0
    %1560 = vmatpush.msra.mxu0 0.0
    %1561 = vmatpush.msra.mxu0 0.0
    %1562 = vmatpush.msra.mxu0 0.0
    %1563 = vmatpush.msra.mxu0 0.0
    %1564 = vmatpush.msra.mxu0 0.0
    %1565 = vmatpush.msra.mxu0 0.0
    %1566 = vmatpush.msra.mxu0 0.0
    %1567 = vmatpush.msra.mxu0 0.0
    %1568 = vmatpush.msra.mxu0 0.0
    %1569 = vmatpush.msra.mxu0 0.0
    %1570 = vmatpush.msra.mxu0 0.0
    %1571 = vmatpush.msra.mxu0 0.0
    %1572 = vmatpush.msra.mxu0 0.0
    %1573 = vmatpush.msra.mxu0 0.0
    %v1574 = vand.u32 %v752, 4294901760
    %v1575 = vsub.f32 %v752, %v1574
    %v1576 = vand.u32 %v1575, 4294901760
    %v1577 = vsub.f32 %v1575, %v1576
    %v1578 = vand.u32 %v1577, 4294901760
    %1579 = vmatpush.msra.mxu0 %v1578
    %v1580 = vand.u32 %v755, 4294901760
    %1581 = vmatmul.f32.gmra.mxu0 %v1580
    %v1582 = vpop.f32.mrf.mxu0
    %v1583 = vadd.f32 %v1437, %v1582
    %v1584 = vand.u32 %v758, 4294901760
    %1585 = vmatmul.f32.gmra.mxu0 %v1584
    %v1586 = vpop.f32.mrf.mxu0
    %v1587 = vadd.f32 %v1445, %v1586
    %v1588 = vand.u32 %v761, 4294901760
    %1589 = vmatmul.f32.gmra.mxu0 %v1588
    %v1590 = vpop.f32.mrf.mxu0
    %v1591 = vadd.f32 %v1453, %v1590
    %v1592 = vand.u32 %v764, 4294901760
    %1593 = vmatmul.f32.gmra.mxu0 %v1592
    %v1594 = vpop.f32.mrf.mxu0
    %v1595 = vadd.f32 %v1461, %v1594
    %v1596 = vand.u32 %v767, 4294901760
    %1597 = vmatmul.f32.gmra.mxu0 %v1596
    %v1598 = vpop.f32.mrf.mxu0
    %v1599 = vadd.f32 %v1469, %v1598
    %v1600 = vand.u32 %v770, 4294901760
    %1601 = vmatmul.f32.gmra.mxu0 %v1600
    %v1602 = vpop.f32.mrf.mxu0
    %v1603 = vadd.f32 %v1477, %v1602
    %v1604 = vand.u32 %v773, 4294901760
    %1605 = vmatmul.f32.gmra.mxu0 %v1604
    %v1606 = vpop.f32.mrf.mxu0
    %v1607 = vadd.f32 %v1485, %v1606
    %v1608 = vand.u32 %v776, 4294901760
    %1609 = vmatmul.f32.gmra.mxu0 %v1608
    %v1610 = vpop.f32.mrf.mxu0
    %v1611 = vadd.f32 %v1493, %v1610
    %v1612 = vand.u32 %v779, 4294901760
    %1613 = vmatmul.f32.gmra.mxu0 %v1612
    %v1614 = vpop.f32.mrf.mxu0
    %v1615 = vadd.f32 %v1501, %v1614
    %v1616 = vand.u32 %v782, 4294901760
    %1617 = vmatmul.f32.gmra.mxu0 %v1616
    %v1618 = vpop.f32.mrf.mxu0
    %v1619 = vadd.f32 %v1509, %v1618
    %v1620 = vand.u32 %v785, 4294901760
    %1621 = vmatmul.f32.gmra.mxu0 %v1620
    %v1622 = vpop.f32.mrf.mxu0
    %v1623 = vadd.f32 %v1517, %v1622
    %v1624 = vand.u32 %v788, 4294901760
    %1625 = vmatmul.f32.gmra.mxu0 %v1624
    %v1626 = vpop.f32.mrf.mxu0
    %v1627 = vadd.f32 %v1525, %v1626
    %v1628 = vand.u32 %v791, 4294901760
    %1629 = vmatmul.f32.gmra.mxu0 %v1628
    %v1630 = vpop.f32.mrf.mxu0
    %v1631 = vadd.f32 %v1533, %v1630
    %v1632 = vand.u32 %v794, 4294901760
    %1633 = vmatmul.f32.gmra.mxu0 %v1632
    %v1634 = vpop.f32.mrf.mxu0
    %v1635 = vadd.f32 %v1541, %v1634
    %v1636 = vand.u32 %v797, 4294901760
    %1637 = vmatmul.f32.gmra.mxu0 %v1636
    %v1638 = vpop.f32.mrf.mxu0
    %v1639 = vadd.f32 %v1549, %v1638
    %v1640 = vand.u32 %v800, 4294901760
    %1641 = vmatmul.f32.gmra.mxu0 %v1640
    %v1642 = vpop.f32.mrf.mxu0
    %v1643 = vadd.f32 %v1557, %v1642
    %1644 = vdwg.mxu0
    %1645 = vmatpush.msra.mxu0 0.0
    %1646 = vmatpush.msra.mxu0 0.0
    %1647 = vmatpush.msra.mxu0 0.0
    %1648 = vmatpush.msra.mxu0 0.0
    %1649 = vmatpush.msra.mxu0 0.0
    %1650 = vmatpush.msra.mxu0 0.0
    %1651 = vmatpush.msra.mxu0 0.0
    %1652 = vmatpush.msra.mxu0 0.0
    %1653 = vmatpush.msra.mxu0 0.0
    %1654 = vmatpush.msra.mxu0 0.0
    %1655 = vmatpush.msra.mxu0 0.0
    %1656 = vmatpush.msra.mxu0 0.0
    %1657 = vmatpush.msra.mxu0 0.0
    %1658 = vmatpush.msra.mxu0 0.0
    %1659 = vmatpush.msra.mxu0 0.0
    %v1660 = vand.u32 %v752, 4294901760
    %v1661 = vsub.f32 %v752, %v1660
    %1662 = vmatpush.msra.mxu0 %v1661
    %v1663 = vand.u32 %v755, 4294901760
    %v1664 = vsub.f32 %v755, %v1663
    %1665 = vmatmul.f32.gmra.mxu0 %v1664
    %v1666 = vpop.f32.mrf.mxu0
    %v1667 = vadd.f32 %v1583, %v1666
    %v1668 = vand.u32 %v758, 4294901760
    %v1669 = vsub.f32 %v758, %v1668
    %1670 = vmatmul.f32.gmra.mxu0 %v1669
    %v1671 = vpop.f32.mrf.mxu0
    %v1672 = vadd.f32 %v1587, %v1671
    %v1673 = vand.u32 %v761, 4294901760
    %v1674 = vsub.f32 %v761, %v1673
    %1675 = vmatmul.f32.gmra.mxu0 %v1674
    %v1676 = vpop.f32.mrf.mxu0
    %v1677 = vadd.f32 %v1591, %v1676
    %v1678 = vand.u32 %v764, 4294901760
    %v1679 = vsub.f32 %v764, %v1678
    %1680 = vmatmul.f32.gmra.mxu0 %v1679
    %v1681 = vpop.f32.mrf.mxu0
    %v1682 = vadd.f32 %v1595, %v1681
    %v1683 = vand.u32 %v767, 4294901760
    %v1684 = vsub.f32 %v767, %v1683
    %1685 = vmatmul.f32.gmra.mxu0 %v1684
    %v1686 = vpop.f32.mrf.mxu0
    %v1687 = vadd.f32 %v1599, %v1686
    %v1688 = vand.u32 %v770, 4294901760
    %v1689 = vsub.f32 %v770, %v1688
    %1690 = vmatmul.f32.gmra.mxu0 %v1689
    %v1691 = vpop.f32.mrf.mxu0
    %v1692 = vadd.f32 %v1603, %v1691
    %v1693 = vand.u32 %v773, 4294901760
    %v1694 = vsub.f32 %v773, %v1693
    %1695 = vmatmul.f32.gmra.mxu0 %v1694
    %v1696 = vpop.f32.mrf.mxu0
    %v1697 = vadd.f32 %v1607, %v1696
    %v1698 = vand.u32 %v776, 4294901760
    %v1699 = vsub.f32 %v776, %v1698
    %1700 = vmatmul.f32.gmra.mxu0 %v1699
    %v1701 = vpop.f32.mrf.mxu0
    %v1702 = vadd.f32 %v1611, %v1701
    %v1703 = vand.u32 %v779, 4294901760
    %v1704 = vsub.f32 %v779, %v1703
    %1705 = vmatmul.f32.gmra.mxu0 %v1704
    %v1706 = vpop.f32.mrf.mxu0
    %v1707 = vadd.f32 %v1615, %v1706
    %v1708 = vand.u32 %v782, 4294901760
    %v1709 = vsub.f32 %v782, %v1708
    %1710 = vmatmul.f32.gmra.mxu0 %v1709
    %v1711 = vpop.f32.mrf.mxu0
    %v1712 = vadd.f32 %v1619, %v1711
    %v1713 = vand.u32 %v785, 4294901760
    %v1714 = vsub.f32 %v785, %v1713
    %1715 = vmatmul.f32.gmra.mxu0 %v1714
    %v1716 = vpop.f32.mrf.mxu0
    %v1717 = vadd.f32 %v1623, %v1716
    %v1718 = vand.u32 %v788, 4294901760
    %v1719 = vsub.f32 %v788, %v1718
    %1720 = vmatmul.f32.gmra.mxu0 %v1719
    %v1721 = vpop.f32.mrf.mxu0
    %v1722 = vadd.f32 %v1627, %v1721
    %v1723 = vand.u32 %v791, 4294901760
    %v1724 = vsub.f32 %v791, %v1723
    %1725 = vmatmul.f32.gmra.mxu0 %v1724
    %v1726 = vpop.f32.mrf.mxu0
    %v1727 = vadd.f32 %v1631, %v1726
    %v1728 = vand.u32 %v794, 4294901760
    %v1729 = vsub.f32 %v794, %v1728
    %1730 = vmatmul.f32.gmra.mxu0 %v1729
    %v1731 = vpop.f32.mrf.mxu0
    %v1732 = vadd.f32 %v1635, %v1731
    %v1733 = vand.u32 %v797, 4294901760
    %v1734 = vsub.f32 %v797, %v1733
    %1735 = vmatmul.f32.gmra.mxu0 %v1734
    %v1736 = vpop.f32.mrf.mxu0
    %v1737 = vadd.f32 %v1639, %v1736
    %v1738 = vand.u32 %v800, 4294901760
    %v1739 = vsub.f32 %v800, %v1738
    %1740 = vmatmul.f32.gmra.mxu0 %v1739
    %v1741 = vpop.f32.mrf.mxu0
    %v1742 = vadd.f32 %v1643, %v1741
    %1743 = vdwg.mxu0
    %1744 = vmatpush.msra.mxu0 0.0
    %1745 = vmatpush.msra.mxu0 0.0
    %1746 = vmatpush.msra.mxu0 0.0
    %1747 = vmatpush.msra.mxu0 0.0
    %1748 = vmatpush.msra.mxu0 0.0
    %1749 = vmatpush.msra.mxu0 0.0
    %1750 = vmatpush.msra.mxu0 0.0
    %1751 = vmatpush.msra.mxu0 0.0
    %1752 = vmatpush.msra.mxu0 0.0
    %1753 = vmatpush.msra.mxu0 0.0
    %1754 = vmatpush.msra.mxu0 0.0
    %1755 = vmatpush.msra.mxu0 0.0
    %1756 = vmatpush.msra.mxu0 0.0
    %1757 = vmatpush.msra.mxu0 0.0
    %1758 = vmatpush.msra.mxu0 0.0
    %v1759 = vand.u32 %v752, 4294901760
    %1760 = vmatpush.msra.mxu0 %v1759
    %v1761 = vand.u32 %v755, 4294901760
    %v1762 = vsub.f32 %v755, %v1761
    %v1763 = vand.u32 %v1762, 4294901760
    %1764 = vmatmul.f32.gmra.mxu0 %v1763
    %v1765 = vpop.f32.mrf.mxu0
    %v1766 = vadd.f32 %v1667, %v1765
    %v1767 = vand.u32 %v758, 4294901760
    %v1768 = vsub.f32 %v758, %v1767
    %v1769 = vand.u32 %v1768, 4294901760
    %1770 = vmatmul.f32.gmra.mxu0 %v1769
    %v1771 = vpop.f32.mrf.mxu0
    %v1772 = vadd.f32 %v1672, %v1771
    %v1773 = vand.u32 %v761, 4294901760
    %v1774 = vsub.f32 %v761, %v1773
    %v1775 = vand.u32 %v1774, 4294901760
    %1776 = vmatmul.f32.gmra.mxu0 %v1775
    %v1777 = vpop.f32.mrf.mxu0
    %v1778 = vadd.f32 %v1677, %v1777
    %v1779 = vand.u32 %v764, 4294901760
    %v1780 = vsub.f32 %v764, %v1779
    %v1781 = vand.u32 %v1780, 4294901760
    %1782 = vmatmul.f32.gmra.mxu0 %v1781
    %v1783 = vpop.f32.mrf.mxu0
    %v1784 = vadd.f32 %v1682, %v1783
    %v1785 = vand.u32 %v767, 4294901760
    %v1786 = vsub.f32 %v767, %v1785
    %v1787 = vand.u32 %v1786, 4294901760
    %1788 = vmatmul.f32.gmra.mxu0 %v1787
    %v1789 = vpop.f32.mrf.mxu0
    %v1790 = vadd.f32 %v1687, %v1789
    %v1791 = vand.u32 %v770, 4294901760
    %v1792 = vsub.f32 %v770, %v1791
    %v1793 = vand.u32 %v1792, 4294901760
    %1794 = vmatmul.f32.gmra.mxu0 %v1793
    %v1795 = vpop.f32.mrf.mxu0
    %v1796 = vadd.f32 %v1692, %v1795
    %v1797 = vand.u32 %v773, 4294901760
    %v1798 = vsub.f32 %v773, %v1797
    %v1799 = vand.u32 %v1798, 4294901760
    %1800 = vmatmul.f32.gmra.mxu0 %v1799
    %v1801 = vpop.f32.mrf.mxu0
    %v1802 = vadd.f32 %v1697, %v1801
    %v1803 = vand.u32 %v776, 4294901760
    %v1804 = vsub.f32 %v776, %v1803
    %v1805 = vand.u32 %v1804, 4294901760
    %1806 = vmatmul.f32.gmra.mxu0 %v1805
    %v1807 = vpop.f32.mrf.mxu0
    %v1808 = vadd.f32 %v1702, %v1807
    %v1809 = vand.u32 %v779, 4294901760
    %v1810 = vsub.f32 %v779, %v1809
    %v1811 = vand.u32 %v1810, 4294901760
    %1812 = vmatmul.f32.gmra.mxu0 %v1811
    %v1813 = vpop.f32.mrf.mxu0
    %v1814 = vadd.f32 %v1707, %v1813
    %v1815 = vand.u32 %v782, 4294901760
    %v1816 = vsub.f32 %v782, %v1815
    %v1817 = vand.u32 %v1816, 4294901760
    %1818 = vmatmul.f32.gmra.mxu0 %v1817
    %v1819 = vpop.f32.mrf.mxu0
    %v1820 = vadd.f32 %v1712, %v1819
    %v1821 = vand.u32 %v785, 4294901760
    %v1822 = vsub.f32 %v785, %v1821
    %v1823 = vand.u32 %v1822, 4294901760
    %1824 = vmatmul.f32.gmra.mxu0 %v1823
    %v1825 = vpop.f32.mrf.mxu0
    %v1826 = vadd.f32 %v1717, %v1825
    %v1827 = vand.u32 %v788, 4294901760
    %v1828 = vsub.f32 %v788, %v1827
    %v1829 = vand.u32 %v1828, 4294901760
    %1830 = vmatmul.f32.gmra.mxu0 %v1829
    %v1831 = vpop.f32.mrf.mxu0
    %v1832 = vadd.f32 %v1722, %v1831
    %v1833 = vand.u32 %v791, 4294901760
    %v1834 = vsub.f32 %v791, %v1833
    %v1835 = vand.u32 %v1834, 4294901760
    %1836 = vmatmul.f32.gmra.mxu0 %v1835
    %v1837 = vpop.f32.mrf.mxu0
    %v1838 = vadd.f32 %v1727, %v1837
    %v1839 = vand.u32 %v794, 4294901760
    %v1840 = vsub.f32 %v794, %v1839
    %v1841 = vand.u32 %v1840, 4294901760
    %1842 = vmatmul.f32.gmra.mxu0 %v1841
    %v1843 = vpop.f32.mrf.mxu0
    %v1844 = vadd.f32 %v1732, %v1843
    %v1845 = vand.u32 %v797, 4294901760
    %v1846 = vsub.f32 %v797, %v1845
    %v1847 = vand.u32 %v1846, 4294901760
    %1848 = vmatmul.f32.gmra.mxu0 %v1847
    %v1849 = vpop.f32.mrf.mxu0
    %v1850 = vadd.f32 %v1737, %v1849
    %v1851 = vand.u32 %v800, 4294901760
    %v1852 = vsub.f32 %v800, %v1851
    %v1853 = vand.u32 %v1852, 4294901760
    %1854 = vmatmul.f32.gmra.mxu0 %v1853
    %v1855 = vpop.f32.mrf.mxu0
    %v1856 = vadd.f32 %v1742, %v1855
    %1857 = vdwg.mxu0
    %1858 = vmatpush.msra.mxu0 0.0
    %1859 = vmatpush.msra.mxu0 0.0
    %1860 = vmatpush.msra.mxu0 0.0
    %1861 = vmatpush.msra.mxu0 0.0
    %1862 = vmatpush.msra.mxu0 0.0
    %1863 = vmatpush.msra.mxu0 0.0
    %1864 = vmatpush.msra.mxu0 0.0
    %1865 = vmatpush.msra.mxu0 0.0
    %1866 = vmatpush.msra.mxu0 0.0
    %1867 = vmatpush.msra.mxu0 0.0
    %1868 = vmatpush.msra.mxu0 0.0
    %1869 = vmatpush.msra.mxu0 0.0
    %1870 = vmatpush.msra.mxu0 0.0
    %1871 = vmatpush.msra.mxu0 0.0
    %1872 = vmatpush.msra.mxu0 0.0
    %v1873 = vand.u32 %v752, 4294901760
    %v1874 = vsub.f32 %v752, %v1873
    %v1875 = vand.u32 %v1874, 4294901760
    %1876 = vmatpush.msra.mxu0 %v1875
    %v1877 = vand.u32 %v755, 4294901760
    %1878 = vmatmul.f32.gmra.mxu0 %v1877
    %v1879 = vpop.f32.mrf.mxu0
    %v1880 = vadd.f32 %v1766, %v1879
    %v1881 = vand.u32 %v758, 4294901760
    %1882 = vmatmul.f32.gmra.mxu0 %v1881
    %v1883 = vpop.f32.mrf.mxu0
    %v1884 = vadd.f32 %v1772, %v1883
    %v1885 = vand.u32 %v761, 4294901760
    %1886 = vmatmul.f32.gmra.mxu0 %v1885
    %v1887 = vpop.f32.mrf.mxu0
    %v1888 = vadd.f32 %v1778, %v1887
    %v1889 = vand.u32 %v764, 4294901760
    %1890 = vmatmul.f32.gmra.mxu0 %v1889
    %v1891 = vpop.f32.mrf.mxu0
    %v1892 = vadd.f32 %v1784, %v1891
    %v1893 = vand.u32 %v767, 4294901760
    %1894 = vmatmul.f32.gmra.mxu0 %v1893
    %v1895 = vpop.f32.mrf.mxu0
    %v1896 = vadd.f32 %v1790, %v1895
    %v1897 = vand.u32 %v770, 4294901760
    %1898 = vmatmul.f32.gmra.mxu0 %v1897
    %v1899 = vpop.f32.mrf.mxu0
    %v1900 = vadd.f32 %v1796, %v1899
    %v1901 = vand.u32 %v773, 4294901760
    %1902 = vmatmul.f32.gmra.mxu0 %v1901
    %v1903 = vpop.f32.mrf.mxu0
    %v1904 = vadd.f32 %v1802, %v1903
    %v1905 = vand.u32 %v776, 4294901760
    %1906 = vmatmul.f32.gmra.mxu0 %v1905
    %v1907 = vpop.f32.mrf.mxu0
    %v1908 = vadd.f32 %v1808, %v1907
    %v1909 = vand.u32 %v779, 4294901760
    %1910 = vmatmul.f32.gmra.mxu0 %v1909
    %v1911 = vpop.f32.mrf.mxu0
    %v1912 = vadd.f32 %v1814, %v1911
    %v1913 = vand.u32 %v782, 4294901760
    %1914 = vmatmul.f32.gmra.mxu0 %v1913
    %v1915 = vpop.f32.mrf.mxu0
    %v1916 = vadd.f32 %v1820, %v1915
    %v1917 = vand.u32 %v785, 4294901760
    %1918 = vmatmul.f32.gmra.mxu0 %v1917
    %v1919 = vpop.f32.mrf.mxu0
    %v1920 = vadd.f32 %v1826, %v1919
    %v1921 = vand.u32 %v788, 4294901760
    %1922 = vmatmul.f32.gmra.mxu0 %v1921
    %v1923 = vpop.f32.mrf.mxu0
    %v1924 = vadd.f32 %v1832, %v1923
    %v1925 = vand.u32 %v791, 4294901760
    %1926 = vmatmul.f32.gmra.mxu0 %v1925
    %v1927 = vpop.f32.mrf.mxu0
    %v1928 = vadd.f32 %v1838, %v1927
    %v1929 = vand.u32 %v794, 4294901760
    %1930 = vmatmul.f32.gmra.mxu0 %v1929
    %v1931 = vpop.f32.mrf.mxu0
    %v1932 = vadd.f32 %v1844, %v1931
    %v1933 = vand.u32 %v797, 4294901760
    %1934 = vmatmul.f32.gmra.mxu0 %v1933
    %v1935 = vpop.f32.mrf.mxu0
    %v1936 = vadd.f32 %v1850, %v1935
    %v1937 = vand.u32 %v800, 4294901760
    %1938 = vmatmul.f32.gmra.mxu0 %v1937
    %v1939 = vpop.f32.mrf.mxu0
    %v1940 = vadd.f32 %v1856, %v1939
    %1941 = vdwg.mxu0
    %1942 = vmatpush.msra.mxu0 0.0
    %1943 = vmatpush.msra.mxu0 0.0
    %1944 = vmatpush.msra.mxu0 0.0
    %1945 = vmatpush.msra.mxu0 0.0
    %1946 = vmatpush.msra.mxu0 0.0
    %1947 = vmatpush.msra.mxu0 0.0
    %1948 = vmatpush.msra.mxu0 0.0
    %1949 = vmatpush.msra.mxu0 0.0
    %1950 = vmatpush.msra.mxu0 0.0
    %1951 = vmatpush.msra.mxu0 0.0
    %1952 = vmatpush.msra.mxu0 0.0
    %1953 = vmatpush.msra.mxu0 0.0
    %1954 = vmatpush.msra.mxu0 0.0
    %1955 = vmatpush.msra.mxu0 0.0
    %1956 = vmatpush.msra.mxu0 0.0
    %v1957 = vand.u32 %v752, 4294901760
    %1958 = vmatpush.msra.mxu0 %v1957
    %v1959 = vand.u32 %v755, 4294901760
    %1960 = vmatmul.f32.gmra.mxu0 %v1959
    %v1961 = vpop.f32.mrf.mxu0
    %v1962 = vadd.f32 %v1880, %v1961
    %v1963 = vand.u32 %v758, 4294901760
    %1964 = vmatmul.f32.gmra.mxu0 %v1963
    %v1965 = vpop.f32.mrf.mxu0
    %v1966 = vadd.f32 %v1884, %v1965
    %v1967 = vand.u32 %v761, 4294901760
    %1968 = vmatmul.f32.gmra.mxu0 %v1967
    %v1969 = vpop.f32.mrf.mxu0
    %v1970 = vadd.f32 %v1888, %v1969
    %v1971 = vand.u32 %v764, 4294901760
    %1972 = vmatmul.f32.gmra.mxu0 %v1971
    %v1973 = vpop.f32.mrf.mxu0
    %v1974 = vadd.f32 %v1892, %v1973
    %v1975 = vand.u32 %v767, 4294901760
    %1976 = vmatmul.f32.gmra.mxu0 %v1975
    %v1977 = vpop.f32.mrf.mxu0
    %v1978 = vadd.f32 %v1896, %v1977
    %v1979 = vand.u32 %v770, 4294901760
    %1980 = vmatmul.f32.gmra.mxu0 %v1979
    %v1981 = vpop.f32.mrf.mxu0
    %v1982 = vadd.f32 %v1900, %v1981
    %v1983 = vand.u32 %v773, 4294901760
    %1984 = vmatmul.f32.gmra.mxu0 %v1983
    %v1985 = vpop.f32.mrf.mxu0
    %v1986 = vadd.f32 %v1904, %v1985
    %v1987 = vand.u32 %v776, 4294901760
    %1988 = vmatmul.f32.gmra.mxu0 %v1987
    %v1989 = vpop.f32.mrf.mxu0
    %v1990 = vadd.f32 %v1908, %v1989
    %v1991 = vand.u32 %v779, 4294901760
    %1992 = vmatmul.f32.gmra.mxu0 %v1991
    %v1993 = vpop.f32.mrf.mxu0
    %v1994 = vadd.f32 %v1912, %v1993
    %v1995 = vand.u32 %v782, 4294901760
    %1996 = vmatmul.f32.gmra.mxu0 %v1995
    %v1997 = vpop.f32.mrf.mxu0
    %v1998 = vadd.f32 %v1916, %v1997
    %v1999 = vand.u32 %v785, 4294901760
    %2000 = vmatmul.f32.gmra.mxu0 %v1999
    %v2001 = vpop.f32.mrf.mxu0
    %v2002 = vadd.f32 %v1920, %v2001
    %v2003 = vand.u32 %v788, 4294901760
    %2004 = vmatmul.f32.gmra.mxu0 %v2003
    %v2005 = vpop.f32.mrf.mxu0
    %v2006 = vadd.f32 %v1924, %v2005
    %v2007 = vand.u32 %v791, 4294901760
    %2008 = vmatmul.f32.gmra.mxu0 %v2007
    %v2009 = vpop.f32.mrf.mxu0
    %v2010 = vadd.f32 %v1928, %v2009
    %v2011 = vand.u32 %v794, 4294901760
    %2012 = vmatmul.f32.gmra.mxu0 %v2011
    %v2013 = vpop.f32.mrf.mxu0
    %v2014 = vadd.f32 %v1932, %v2013
    %v2015 = vand.u32 %v797, 4294901760
    %2016 = vmatmul.f32.gmra.mxu0 %v2015
    %v2017 = vpop.f32.mrf.mxu0
    %v2018 = vadd.f32 %v1936, %v2017
    %v2019 = vand.u32 %v800, 4294901760
    %2020 = vmatmul.f32.gmra.mxu0 %v2019
    %v2021 = vpop.f32.mrf.mxu0
    %v2022 = vadd.f32 %v1940, %v2021
    %2023 = vdwg.mxu0
    %v2024 = vld [vmem:[%s4] sm:$0xff]
    %v2025 = vld [vmem:[%s4 + $0x8] sm:$0xff]
    %s2026 = scalar_lea.vmem %s4, 16
    %v2027 = vld [vmem:[%s2026] sm:$0xff]
    %v2028 = vld [vmem:[%s2026 + $0x8] sm:$0xff]
    %2037 = vrot.lane.b32.xlu0 %v1351, 112
    %v2038 = vpop.permute.xlu0 %2037
    %2039 = vrot.lane.b32.xlu0 %v1355, 112
    %v2040 = vpop.permute.xlu0 %2039
    %2041 = vrot.lane.b32.xlu0 %v1359, 112
    %v2042 = vpop.permute.xlu0 %2041
    %2043 = vrot.lane.b32.xlu0 %v1363, 112
    %v2044 = vpop.permute.xlu0 %2043
    %2045 = vrot.lane.b32.xlu0 %v1367, 112
    %v2046 = vpop.permute.xlu0 %2045
    %2047 = vrot.lane.b32.xlu0 %v1371, 112
    %v2048 = vpop.permute.xlu0 %2047
    %2049 = vrot.lane.b32.xlu0 %v1375, 112
    %v2050 = vpop.permute.xlu0 %2049
    %2051 = vrot.lane.b32.xlu0 %v1379, 112
    %v2052 = vpop.permute.xlu0 %2051
    %vm2061 = vcmask 523264
    %v2063 = vsel %vm2061, %v2027, 0
    %v2066 = vsel %vm2061, %v2028, 0
    %2068 = vmatpush.msra.mxu0 0.0
    %2069 = vmatpush.msra.mxu0 0.0
    %2070 = vmatpush.msra.mxu0 0.0
    %2071 = vmatpush.msra.mxu0 0.0
    %2072 = vmatpush.msra.mxu0 0.0
    %2073 = vmatpush.msra.mxu0 0.0
    %2074 = vmatpush.msra.mxu0 0.0
    %2075 = vmatpush.msra.mxu0 0.0
    %2076 = vmatpush.msra.mxu0 %v2052
    %2077 = vmatpush.msra.mxu0 %v2050
    %2078 = vmatpush.msra.mxu0 %v2048
    %2079 = vmatpush.msra.mxu0 %v2046
    %2080 = vmatpush.msra.mxu0 %v2044
    %2081 = vmatpush.msra.mxu0 %v2042
    %2082 = vmatpush.msra.mxu0 %v2040
    %2083 = vmatpush.msra.mxu0 %v2038
    %2084 = vmatmul.f32.gmra.mxu0 %v2063
    %v2085 = vpop.f32.mrf.mxu0
    %v2086 = vadd.f32 0.0, %v2085
    %2087 = vmatmul.f32.gmra.mxu0 %v2066
    %v2088 = vpop.f32.mrf.mxu0
    %v2089 = vadd.f32 0.0, %v2088
    %2090 = vdwg.mxu0
    %v2092 = vsel %vm2061, %v2024, 0
    %v2095 = vsel %vm2061, %v2025, 0
    %2097 = vmatpush.msra.mxu0 0.0
    %2098 = vmatpush.msra.mxu0 0.0
    %2099 = vmatpush.msra.mxu0 0.0
    %2100 = vmatpush.msra.mxu0 0.0
    %2101 = vmatpush.msra.mxu0 0.0
    %2102 = vmatpush.msra.mxu0 0.0
    %2103 = vmatpush.msra.mxu0 0.0
    %2104 = vmatpush.msra.mxu0 0.0
    %2105 = vmatpush.msra.mxu0 %v1379
    %2106 = vmatpush.msra.mxu0 %v1375
    %2107 = vmatpush.msra.mxu0 %v1371
    %2108 = vmatpush.msra.mxu0 %v1367
    %2109 = vmatpush.msra.mxu0 %v1363
    %2110 = vmatpush.msra.mxu0 %v1359
    %2111 = vmatpush.msra.mxu0 %v1355
    %2112 = vmatpush.msra.mxu0 %v1351
    %2113 = vmatmul.f32.gmra.mxu0 %v2092
    %v2114 = vpop.f32.mrf.mxu0
    %v2115 = vadd.f32 %v2086, %v2114
    %2116 = vmatmul.f32.gmra.mxu0 %v2095
    %v2117 = vpop.f32.mrf.mxu0
    %v2118 = vadd.f32 %v2089, %v2117
    %2119 = vdwg.mxu0
    %s2120 = scalar_lea.vmem %s4, 32
    %v2121 = vld [vmem:[%s2120] sm:$0xff]
    %v2122 = vld [vmem:[%s2120 + $0x8] sm:$0xff]
    %2123 = vrot.lane.b32.xlu0 %v1351, 96
    %v2124 = vpop.permute.xlu0 %2123
    %2125 = vrot.lane.b32.xlu0 %v1355, 96
    %v2126 = vpop.permute.xlu0 %2125
    %2127 = vrot.lane.b32.xlu0 %v1359, 96
    %v2128 = vpop.permute.xlu0 %2127
    %2129 = vrot.lane.b32.xlu0 %v1363, 96
    %v2130 = vpop.permute.xlu0 %2129
    %2131 = vrot.lane.b32.xlu0 %v1367, 96
    %v2132 = vpop.permute.xlu0 %2131
    %2133 = vrot.lane.b32.xlu0 %v1371, 96
    %v2134 = vpop.permute.xlu0 %2133
    %2135 = vrot.lane.b32.xlu0 %v1375, 96
    %v2136 = vpop.permute.xlu0 %2135
    %2137 = vrot.lane.b32.xlu0 %v1379, 96
    %v2138 = vpop.permute.xlu0 %2137
    %v2148 = vsel %vm2061, %v2121, 0
    %v2151 = vsel %vm2061, %v2122, 0
    %2153 = vmatpush.msra.mxu0 0.0
    %2154 = vmatpush.msra.mxu0 0.0
    %2155 = vmatpush.msra.mxu0 0.0
    %2156 = vmatpush.msra.mxu0 0.0
    %2157 = vmatpush.msra.mxu0 0.0
    %2158 = vmatpush.msra.mxu0 0.0
    %2159 = vmatpush.msra.mxu0 0.0
    %2160 = vmatpush.msra.mxu0 0.0
    %2161 = vmatpush.msra.mxu0 %v2138
    %2162 = vmatpush.msra.mxu0 %v2136
    %2163 = vmatpush.msra.mxu0 %v2134
    %2164 = vmatpush.msra.mxu0 %v2132
    %2165 = vmatpush.msra.mxu0 %v2130
    %2166 = vmatpush.msra.mxu0 %v2128
    %2167 = vmatpush.msra.mxu0 %v2126
    %2168 = vmatpush.msra.mxu0 %v2124
    %2169 = vmatmul.f32.gmra.mxu0 %v2148
    %v2170 = vpop.f32.mrf.mxu0
    %v2171 = vadd.f32 0.0, %v2170
    %2172 = vmatmul.f32.gmra.mxu0 %v2151
    %v2173 = vpop.f32.mrf.mxu0
    %v2174 = vadd.f32 0.0, %v2173
    %2175 = vdwg.mxu0
    %v2176 = vadd.f32 %v2115, %v2171
    %v2177 = vadd.f32 %v2118, %v2174
    %s2178 = scalar_lea.vmem %s4, 48
    %v2179 = vld [vmem:[%s2178] sm:$0xff]
    %v2180 = vld [vmem:[%s2178 + $0x8] sm:$0xff]
    %2181 = vrot.lane.b32.xlu0 %v1351, 80
    %v2182 = vpop.permute.xlu0 %2181
    %2183 = vrot.lane.b32.xlu0 %v1355, 80
    %v2184 = vpop.permute.xlu0 %2183
    %2185 = vrot.lane.b32.xlu0 %v1359, 80
    %v2186 = vpop.permute.xlu0 %2185
    %2187 = vrot.lane.b32.xlu0 %v1363, 80
    %v2188 = vpop.permute.xlu0 %2187
    %2189 = vrot.lane.b32.xlu0 %v1367, 80
    %v2190 = vpop.permute.xlu0 %2189
    %2191 = vrot.lane.b32.xlu0 %v1371, 80
    %v2192 = vpop.permute.xlu0 %2191
    %2193 = vrot.lane.b32.xlu0 %v1375, 80
    %v2194 = vpop.permute.xlu0 %2193
    %2195 = vrot.lane.b32.xlu0 %v1379, 80
    %v2196 = vpop.permute.xlu0 %2195
    %v2206 = vsel %vm2061, %v2179, 0
    %v2209 = vsel %vm2061, %v2180, 0
    %2211 = vmatpush.msra.mxu0 0.0
    %2212 = vmatpush.msra.mxu0 0.0
    %2213 = vmatpush.msra.mxu0 0.0
    %2214 = vmatpush.msra.mxu0 0.0
    %2215 = vmatpush.msra.mxu0 0.0
    %2216 = vmatpush.msra.mxu0 0.0
    %2217 = vmatpush.msra.mxu0 0.0
    %2218 = vmatpush.msra.mxu0 0.0
    %2219 = vmatpush.msra.mxu0 %v2196
    %2220 = vmatpush.msra.mxu0 %v2194
    %2221 = vmatpush.msra.mxu0 %v2192
    %2222 = vmatpush.msra.mxu0 %v2190
    %2223 = vmatpush.msra.mxu0 %v2188
    %2224 = vmatpush.msra.mxu0 %v2186
    %2225 = vmatpush.msra.mxu0 %v2184
    %2226 = vmatpush.msra.mxu0 %v2182
    %2227 = vmatmul.f32.gmra.mxu0 %v2206
    %v2228 = vpop.f32.mrf.mxu0
    %v2229 = vadd.f32 0.0, %v2228
    %2230 = vmatmul.f32.gmra.mxu0 %v2209
    %v2231 = vpop.f32.mrf.mxu0
    %v2232 = vadd.f32 0.0, %v2231
    %2233 = vdwg.mxu0
    %v2234 = vadd.f32 %v2176, %v2229
    %v2235 = vadd.f32 %v2177, %v2232
    %s2236 = scalar_lea.vmem %s4, 64
    %v2237 = vld [vmem:[%s2236] sm:$0xff]
    %v2238 = vld [vmem:[%s2236 + $0x8] sm:$0xff]
    %2239 = vrot.lane.b32.xlu0 %v1351, 64
    %v2240 = vpop.permute.xlu0 %2239
    %2241 = vrot.lane.b32.xlu0 %v1355, 64
    %v2242 = vpop.permute.xlu0 %2241
    %2243 = vrot.lane.b32.xlu0 %v1359, 64
    %v2244 = vpop.permute.xlu0 %2243
    %2245 = vrot.lane.b32.xlu0 %v1363, 64
    %v2246 = vpop.permute.xlu0 %2245
    %2247 = vrot.lane.b32.xlu0 %v1367, 64
    %v2248 = vpop.permute.xlu0 %2247
    %2249 = vrot.lane.b32.xlu0 %v1371, 64
    %v2250 = vpop.permute.xlu0 %2249
    %2251 = vrot.lane.b32.xlu0 %v1375, 64
    %v2252 = vpop.permute.xlu0 %2251
    %2253 = vrot.lane.b32.xlu0 %v1379, 64
    %v2254 = vpop.permute.xlu0 %2253
    %v2264 = vsel %vm2061, %v2237, 0
    %v2267 = vsel %vm2061, %v2238, 0
    %2269 = vmatpush.msra.mxu0 0.0
    %2270 = vmatpush.msra.mxu0 0.0
    %2271 = vmatpush.msra.mxu0 0.0
    %2272 = vmatpush.msra.mxu0 0.0
    %2273 = vmatpush.msra.mxu0 0.0
    %2274 = vmatpush.msra.mxu0 0.0
    %2275 = vmatpush.msra.mxu0 0.0
    %2276 = vmatpush.msra.mxu0 0.0
    %2277 = vmatpush.msra.mxu0 %v2254
    %2278 = vmatpush.msra.mxu0 %v2252
    %2279 = vmatpush.msra.mxu0 %v2250
    %2280 = vmatpush.msra.mxu0 %v2248
    %2281 = vmatpush.msra.mxu0 %v2246
    %2282 = vmatpush.msra.mxu0 %v2244
    %2283 = vmatpush.msra.mxu0 %v2242
    %2284 = vmatpush.msra.mxu0 %v2240
    %2285 = vmatmul.f32.gmra.mxu0 %v2264
    %v2286 = vpop.f32.mrf.mxu0
    %v2287 = vadd.f32 0.0, %v2286
    %2288 = vmatmul.f32.gmra.mxu0 %v2267
    %v2289 = vpop.f32.mrf.mxu0
    %v2290 = vadd.f32 0.0, %v2289
    %2291 = vdwg.mxu0
    %v2292 = vadd.f32 %v2234, %v2287
    %v2293 = vadd.f32 %v2235, %v2290
    %s2294 = scalar_lea.vmem %s4, 80
    %v2295 = vld [vmem:[%s2294] sm:$0xff]
    %v2296 = vld [vmem:[%s2294 + $0x8] sm:$0xff]
    %2297 = vrot.lane.b32.xlu0 %v1351, 48
    %v2298 = vpop.permute.xlu0 %2297
    %2299 = vrot.lane.b32.xlu0 %v1355, 48
    %v2300 = vpop.permute.xlu0 %2299
    %2301 = vrot.lane.b32.xlu0 %v1359, 48
    %v2302 = vpop.permute.xlu0 %2301
    %2303 = vrot.lane.b32.xlu0 %v1363, 48
    %v2304 = vpop.permute.xlu0 %2303
    %2305 = vrot.lane.b32.xlu0 %v1367, 48
    %v2306 = vpop.permute.xlu0 %2305
    %2307 = vrot.lane.b32.xlu0 %v1371, 48
    %v2308 = vpop.permute.xlu0 %2307
    %2309 = vrot.lane.b32.xlu0 %v1375, 48
    %v2310 = vpop.permute.xlu0 %2309
    %2311 = vrot.lane.b32.xlu0 %v1379, 48
    %v2312 = vpop.permute.xlu0 %2311
    %v2322 = vsel %vm2061, %v2295, 0
    %v2325 = vsel %vm2061, %v2296, 0
    %2327 = vmatpush.msra.mxu0 0.0
    %2328 = vmatpush.msra.mxu0 0.0
    %2329 = vmatpush.msra.mxu0 0.0
    %2330 = vmatpush.msra.mxu0 0.0
    %2331 = vmatpush.msra.mxu0 0.0
    %2332 = vmatpush.msra.mxu0 0.0
    %2333 = vmatpush.msra.mxu0 0.0
    %2334 = vmatpush.msra.mxu0 0.0
    %2335 = vmatpush.msra.mxu0 %v2312
    %2336 = vmatpush.msra.mxu0 %v2310
    %2337 = vmatpush.msra.mxu0 %v2308
    %2338 = vmatpush.msra.mxu0 %v2306
    %2339 = vmatpush.msra.mxu0 %v2304
    %2340 = vmatpush.msra.mxu0 %v2302
    %2341 = vmatpush.msra.mxu0 %v2300
    %2342 = vmatpush.msra.mxu0 %v2298
    %2343 = vmatmul.f32.gmra.mxu0 %v2322
    %v2344 = vpop.f32.mrf.mxu0
    %v2345 = vadd.f32 0.0, %v2344
    %2346 = vmatmul.f32.gmra.mxu0 %v2325
    %v2347 = vpop.f32.mrf.mxu0
    %v2348 = vadd.f32 0.0, %v2347
    %2349 = vdwg.mxu0
    %v2350 = vadd.f32 %v2292, %v2345
    %v2351 = vadd.f32 %v2293, %v2348
    %s2352 = scalar_lea.vmem %s4, 96
    %v2353 = vld [vmem:[%s2352] sm:$0xff]
    %v2354 = vld [vmem:[%s2352 + $0x8] sm:$0xff]
    %2355 = vrot.lane.b32.xlu0 %v1351, 32
    %v2356 = vpop.permute.xlu0 %2355
    %2357 = vrot.lane.b32.xlu0 %v1355, 32
    %v2358 = vpop.permute.xlu0 %2357
    %2359 = vrot.lane.b32.xlu0 %v1359, 32
    %v2360 = vpop.permute.xlu0 %2359
    %2361 = vrot.lane.b32.xlu0 %v1363, 32
    %v2362 = vpop.permute.xlu0 %2361
    %2363 = vrot.lane.b32.xlu0 %v1367, 32
    %v2364 = vpop.permute.xlu0 %2363
    %2365 = vrot.lane.b32.xlu0 %v1371, 32
    %v2366 = vpop.permute.xlu0 %2365
    %2367 = vrot.lane.b32.xlu0 %v1375, 32
    %v2368 = vpop.permute.xlu0 %2367
    %2369 = vrot.lane.b32.xlu0 %v1379, 32
    %v2370 = vpop.permute.xlu0 %2369
    %v2380 = vsel %vm2061, %v2353, 0
    %v2383 = vsel %vm2061, %v2354, 0
    %2385 = vmatpush.msra.mxu0 0.0
    %2386 = vmatpush.msra.mxu0 0.0
    %2387 = vmatpush.msra.mxu0 0.0
    %2388 = vmatpush.msra.mxu0 0.0
    %2389 = vmatpush.msra.mxu0 0.0
    %2390 = vmatpush.msra.mxu0 0.0
    %2391 = vmatpush.msra.mxu0 0.0
    %2392 = vmatpush.msra.mxu0 0.0
    %2393 = vmatpush.msra.mxu0 %v2370
    %2394 = vmatpush.msra.mxu0 %v2368
    %2395 = vmatpush.msra.mxu0 %v2366
    %2396 = vmatpush.msra.mxu0 %v2364
    %2397 = vmatpush.msra.mxu0 %v2362
    %2398 = vmatpush.msra.mxu0 %v2360
    %2399 = vmatpush.msra.mxu0 %v2358
    %2400 = vmatpush.msra.mxu0 %v2356
    %2401 = vmatmul.f32.gmra.mxu0 %v2380
    %v2402 = vpop.f32.mrf.mxu0
    %v2403 = vadd.f32 0.0, %v2402
    %2404 = vmatmul.f32.gmra.mxu0 %v2383
    %v2405 = vpop.f32.mrf.mxu0
    %v2406 = vadd.f32 0.0, %v2405
    %2407 = vdwg.mxu0
    %v2408 = vadd.f32 %v2350, %v2403
    %v2409 = vadd.f32 %v2351, %v2406
    %s2410 = scalar_lea.vmem %s4, 112
    %v2411 = vld [vmem:[%s2410] sm:$0xff]
    %v2412 = vld [vmem:[%s2410 + $0x8] sm:$0xff]
    %2413 = vrot.lane.b32.xlu0 %v1351, 16
    %v2414 = vpop.permute.xlu0 %2413
    %2415 = vrot.lane.b32.xlu0 %v1355, 16
    %v2416 = vpop.permute.xlu0 %2415
    %2417 = vrot.lane.b32.xlu0 %v1359, 16
    %v2418 = vpop.permute.xlu0 %2417
    %2419 = vrot.lane.b32.xlu0 %v1363, 16
    %v2420 = vpop.permute.xlu0 %2419
    %2421 = vrot.lane.b32.xlu0 %v1367, 16
    %v2422 = vpop.permute.xlu0 %2421
    %2423 = vrot.lane.b32.xlu0 %v1371, 16
    %v2424 = vpop.permute.xlu0 %2423
    %2425 = vrot.lane.b32.xlu0 %v1375, 16
    %v2426 = vpop.permute.xlu0 %2425
    %2427 = vrot.lane.b32.xlu0 %v1379, 16
    %v2428 = vpop.permute.xlu0 %2427
    %v2438 = vsel %vm2061, %v2411, 0
    %v2441 = vsel %vm2061, %v2412, 0
    %2443 = vmatpush.msra.mxu0 0.0
    %2444 = vmatpush.msra.mxu0 0.0
    %2445 = vmatpush.msra.mxu0 0.0
    %2446 = vmatpush.msra.mxu0 0.0
    %2447 = vmatpush.msra.mxu0 0.0
    %2448 = vmatpush.msra.mxu0 0.0
    %2449 = vmatpush.msra.mxu0 0.0
    %2450 = vmatpush.msra.mxu0 0.0
    %2451 = vmatpush.msra.mxu0 %v2428
    %2452 = vmatpush.msra.mxu0 %v2426
    %2453 = vmatpush.msra.mxu0 %v2424
    %2454 = vmatpush.msra.mxu0 %v2422
    %2455 = vmatpush.msra.mxu0 %v2420
    %2456 = vmatpush.msra.mxu0 %v2418
    %2457 = vmatpush.msra.mxu0 %v2416
    %2458 = vmatpush.msra.mxu0 %v2414
    %2459 = vmatmul.f32.gmra.mxu0 %v2438
    %v2460 = vpop.f32.mrf.mxu0
    %v2461 = vadd.f32 0.0, %v2460
    %2462 = vmatmul.f32.gmra.mxu0 %v2441
    %v2463 = vpop.f32.mrf.mxu0
    %v2464 = vadd.f32 0.0, %v2463
    %2465 = vdwg.mxu0
    %v2466 = vadd.f32 %v2408, %v2461
    %v2467 = vadd.f32 %v2409, %v2464
    %s2468 = scalar_lea.vmem %s4, 128
    %v2469 = vld [vmem:[%s2468] sm:$0xff]
    %v2470 = vld [vmem:[%s2468 + $0x8] sm:$0xff]
    %v2472 = vsel %vm2061, %v2469, 0
    %v2475 = vsel %vm2061, %v2470, 0
    %2477 = vmatpush.msra.mxu0 0.0
    %2478 = vmatpush.msra.mxu0 0.0
    %2479 = vmatpush.msra.mxu0 0.0
    %2480 = vmatpush.msra.mxu0 0.0
    %2481 = vmatpush.msra.mxu0 0.0
    %2482 = vmatpush.msra.mxu0 0.0
    %2483 = vmatpush.msra.mxu0 0.0
    %2484 = vmatpush.msra.mxu0 0.0
    %2485 = vmatpush.msra.mxu0 %v1990
    %2486 = vmatpush.msra.mxu0 %v1986
    %2487 = vmatpush.msra.mxu0 %v1982
    %2488 = vmatpush.msra.mxu0 %v1978
    %2489 = vmatpush.msra.mxu0 %v1974
    %2490 = vmatpush.msra.mxu0 %v1970
    %2491 = vmatpush.msra.mxu0 %v1966
    %2492 = vmatpush.msra.mxu0 %v1962
    %2493 = vmatmul.f32.gmra.mxu0 %v2472
    %v2494 = vpop.f32.mrf.mxu0
    %v2495 = vadd.f32 0.0, %v2494
    %2496 = vmatmul.f32.gmra.mxu0 %v2475
    %v2497 = vpop.f32.mrf.mxu0
    %v2498 = vadd.f32 0.0, %v2497
    %2499 = vdwg.mxu0
    %v2500 = vadd.f32 %v2466, %v2495
    %v2501 = vadd.f32 %v2467, %v2498
    %2510 = vrot.lane.b32.xlu0 %v1383, 112
    %v2511 = vpop.permute.xlu0 %2510
    %2512 = vrot.lane.b32.xlu0 %v1387, 112
    %v2513 = vpop.permute.xlu0 %2512
    %2514 = vrot.lane.b32.xlu0 %v1391, 112
    %v2515 = vpop.permute.xlu0 %2514
    %2516 = vrot.lane.b32.xlu0 %v1395, 112
    %v2517 = vpop.permute.xlu0 %2516
    %2518 = vrot.lane.b32.xlu0 %v1399, 112
    %v2519 = vpop.permute.xlu0 %2518
    %2520 = vrot.lane.b32.xlu0 %v1403, 112
    %v2521 = vpop.permute.xlu0 %2520
    %2522 = vrot.lane.b32.xlu0 %v1407, 112
    %v2523 = vpop.permute.xlu0 %2522
    %2524 = vrot.lane.b32.xlu0 %v1411, 112
    %v2525 = vpop.permute.xlu0 %2524
    %2534 = vmatpush.msra.mxu0 0.0
    %2535 = vmatpush.msra.mxu0 0.0
    %2536 = vmatpush.msra.mxu0 0.0
    %2537 = vmatpush.msra.mxu0 0.0
    %2538 = vmatpush.msra.mxu0 0.0
    %2539 = vmatpush.msra.mxu0 0.0
    %2540 = vmatpush.msra.mxu0 0.0
    %2541 = vmatpush.msra.mxu0 0.0
    %2542 = vmatpush.msra.mxu0 %v2525
    %2543 = vmatpush.msra.mxu0 %v2523
    %2544 = vmatpush.msra.mxu0 %v2521
    %2545 = vmatpush.msra.mxu0 %v2519
    %2546 = vmatpush.msra.mxu0 %v2517
    %2547 = vmatpush.msra.mxu0 %v2515
    %2548 = vmatpush.msra.mxu0 %v2513
    %2549 = vmatpush.msra.mxu0 %v2511
    %2550 = vmatmul.f32.gmra.mxu0 %v2063
    %v2551 = vpop.f32.mrf.mxu0
    %v2552 = vadd.f32 0.0, %v2551
    %2553 = vmatmul.f32.gmra.mxu0 %v2066
    %v2554 = vpop.f32.mrf.mxu0
    %v2555 = vadd.f32 0.0, %v2554
    %2556 = vdwg.mxu0
    %2557 = vmatpush.msra.mxu0 0.0
    %2558 = vmatpush.msra.mxu0 0.0
    %2559 = vmatpush.msra.mxu0 0.0
    %2560 = vmatpush.msra.mxu0 0.0
    %2561 = vmatpush.msra.mxu0 0.0
    %2562 = vmatpush.msra.mxu0 0.0
    %2563 = vmatpush.msra.mxu0 0.0
    %2564 = vmatpush.msra.mxu0 0.0
    %2565 = vmatpush.msra.mxu0 %v1411
    %2566 = vmatpush.msra.mxu0 %v1407
    %2567 = vmatpush.msra.mxu0 %v1403
    %2568 = vmatpush.msra.mxu0 %v1399
    %2569 = vmatpush.msra.mxu0 %v1395
    %2570 = vmatpush.msra.mxu0 %v1391
    %2571 = vmatpush.msra.mxu0 %v1387
    %2572 = vmatpush.msra.mxu0 %v1383
    %2573 = vmatmul.f32.gmra.mxu0 %v2092
    %v2574 = vpop.f32.mrf.mxu0
    %v2575 = vadd.f32 %v2552, %v2574
    %2576 = vmatmul.f32.gmra.mxu0 %v2095
    %v2577 = vpop.f32.mrf.mxu0
    %v2578 = vadd.f32 %v2555, %v2577
    %2579 = vdwg.mxu0
    %2580 = vrot.lane.b32.xlu0 %v1383, 96
    %v2581 = vpop.permute.xlu0 %2580
    %2582 = vrot.lane.b32.xlu0 %v1387, 96
    %v2583 = vpop.permute.xlu0 %2582
    %2584 = vrot.lane.b32.xlu0 %v1391, 96
    %v2585 = vpop.permute.xlu0 %2584
    %2586 = vrot.lane.b32.xlu0 %v1395, 96
    %v2587 = vpop.permute.xlu0 %2586
    %2588 = vrot.lane.b32.xlu0 %v1399, 96
    %v2589 = vpop.permute.xlu0 %2588
    %2590 = vrot.lane.b32.xlu0 %v1403, 96
    %v2591 = vpop.permute.xlu0 %2590
    %2592 = vrot.lane.b32.xlu0 %v1407, 96
    %v2593 = vpop.permute.xlu0 %2592
    %2594 = vrot.lane.b32.xlu0 %v1411, 96
    %v2595 = vpop.permute.xlu0 %2594
    %2604 = vmatpush.msra.mxu0 0.0
    %2605 = vmatpush.msra.mxu0 0.0
    %2606 = vmatpush.msra.mxu0 0.0
    %2607 = vmatpush.msra.mxu0 0.0
    %2608 = vmatpush.msra.mxu0 0.0
    %2609 = vmatpush.msra.mxu0 0.0
    %2610 = vmatpush.msra.mxu0 0.0
    %2611 = vmatpush.msra.mxu0 0.0
    %2612 = vmatpush.msra.mxu0 %v2595
    %2613 = vmatpush.msra.mxu0 %v2593
    %2614 = vmatpush.msra.mxu0 %v2591
    %2615 = vmatpush.msra.mxu0 %v2589
    %2616 = vmatpush.msra.mxu0 %v2587
    %2617 = vmatpush.msra.mxu0 %v2585
    %2618 = vmatpush.msra.mxu0 %v2583
    %2619 = vmatpush.msra.mxu0 %v2581
    %2620 = vmatmul.f32.gmra.mxu0 %v2148
    %v2621 = vpop.f32.mrf.mxu0
    %v2622 = vadd.f32 0.0, %v2621
    %2623 = vmatmul.f32.gmra.mxu0 %v2151
    %v2624 = vpop.f32.mrf.mxu0
    %v2625 = vadd.f32 0.0, %v2624
    %2626 = vdwg.mxu0
    %v2627 = vadd.f32 %v2575, %v2622
    %v2628 = vadd.f32 %v2578, %v2625
    %2629 = vrot.lane.b32.xlu0 %v1383, 80
    %v2630 = vpop.permute.xlu0 %2629
    %2631 = vrot.lane.b32.xlu0 %v1387, 80
    %v2632 = vpop.permute.xlu0 %2631
    %2633 = vrot.lane.b32.xlu0 %v1391, 80
    %v2634 = vpop.permute.xlu0 %2633
    %2635 = vrot.lane.b32.xlu0 %v1395, 80
    %v2636 = vpop.permute.xlu0 %2635
    %2637 = vrot.lane.b32.xlu0 %v1399, 80
    %v2638 = vpop.permute.xlu0 %2637
    %2639 = vrot.lane.b32.xlu0 %v1403, 80
    %v2640 = vpop.permute.xlu0 %2639
    %2641 = vrot.lane.b32.xlu0 %v1407, 80
    %v2642 = vpop.permute.xlu0 %2641
    %2643 = vrot.lane.b32.xlu0 %v1411, 80
    %v2644 = vpop.permute.xlu0 %2643
    %2653 = vmatpush.msra.mxu0 0.0
    %2654 = vmatpush.msra.mxu0 0.0
    %2655 = vmatpush.msra.mxu0 0.0
    %2656 = vmatpush.msra.mxu0 0.0
    %2657 = vmatpush.msra.mxu0 0.0
    %2658 = vmatpush.msra.mxu0 0.0
    %2659 = vmatpush.msra.mxu0 0.0
    %2660 = vmatpush.msra.mxu0 0.0
    %2661 = vmatpush.msra.mxu0 %v2644
    %2662 = vmatpush.msra.mxu0 %v2642
    %2663 = vmatpush.msra.mxu0 %v2640
    %2664 = vmatpush.msra.mxu0 %v2638
    %2665 = vmatpush.msra.mxu0 %v2636
    %2666 = vmatpush.msra.mxu0 %v2634
    %2667 = vmatpush.msra.mxu0 %v2632
    %2668 = vmatpush.msra.mxu0 %v2630
    %2669 = vmatmul.f32.gmra.mxu0 %v2206
    %v2670 = vpop.f32.mrf.mxu0
    %v2671 = vadd.f32 0.0, %v2670
    %2672 = vmatmul.f32.gmra.mxu0 %v2209
    %v2673 = vpop.f32.mrf.mxu0
    %v2674 = vadd.f32 0.0, %v2673
    %2675 = vdwg.mxu0
    %v2676 = vadd.f32 %v2627, %v2671
    %v2677 = vadd.f32 %v2628, %v2674
    %2678 = vrot.lane.b32.xlu0 %v1383, 64
    %v2679 = vpop.permute.xlu0 %2678
    %2680 = vrot.lane.b32.xlu0 %v1387, 64
    %v2681 = vpop.permute.xlu0 %2680
    %2682 = vrot.lane.b32.xlu0 %v1391, 64
    %v2683 = vpop.permute.xlu0 %2682
    %2684 = vrot.lane.b32.xlu0 %v1395, 64
    %v2685 = vpop.permute.xlu0 %2684
    %2686 = vrot.lane.b32.xlu0 %v1399, 64
    %v2687 = vpop.permute.xlu0 %2686
    %2688 = vrot.lane.b32.xlu0 %v1403, 64
    %v2689 = vpop.permute.xlu0 %2688
    %2690 = vrot.lane.b32.xlu0 %v1407, 64
    %v2691 = vpop.permute.xlu0 %2690
    %2692 = vrot.lane.b32.xlu0 %v1411, 64
    %v2693 = vpop.permute.xlu0 %2692
    %2702 = vmatpush.msra.mxu0 0.0
    %2703 = vmatpush.msra.mxu0 0.0
    %2704 = vmatpush.msra.mxu0 0.0
    %2705 = vmatpush.msra.mxu0 0.0
    %2706 = vmatpush.msra.mxu0 0.0
    %2707 = vmatpush.msra.mxu0 0.0
    %2708 = vmatpush.msra.mxu0 0.0
    %2709 = vmatpush.msra.mxu0 0.0
    %2710 = vmatpush.msra.mxu0 %v2693
    %2711 = vmatpush.msra.mxu0 %v2691
    %2712 = vmatpush.msra.mxu0 %v2689
    %2713 = vmatpush.msra.mxu0 %v2687
    %2714 = vmatpush.msra.mxu0 %v2685
    %2715 = vmatpush.msra.mxu0 %v2683
    %2716 = vmatpush.msra.mxu0 %v2681
    %2717 = vmatpush.msra.mxu0 %v2679
    %2718 = vmatmul.f32.gmra.mxu0 %v2264
    %v2719 = vpop.f32.mrf.mxu0
    %v2720 = vadd.f32 0.0, %v2719
    %2721 = vmatmul.f32.gmra.mxu0 %v2267
    %v2722 = vpop.f32.mrf.mxu0
    %v2723 = vadd.f32 0.0, %v2722
    %2724 = vdwg.mxu0
    %v2725 = vadd.f32 %v2676, %v2720
    %v2726 = vadd.f32 %v2677, %v2723
    %2727 = vrot.lane.b32.xlu0 %v1383, 48
    %v2728 = vpop.permute.xlu0 %2727
    %2729 = vrot.lane.b32.xlu0 %v1387, 48
    %v2730 = vpop.permute.xlu0 %2729
    %2731 = vrot.lane.b32.xlu0 %v1391, 48
    %v2732 = vpop.permute.xlu0 %2731
    %2733 = vrot.lane.b32.xlu0 %v1395, 48
    %v2734 = vpop.permute.xlu0 %2733
    %2735 = vrot.lane.b32.xlu0 %v1399, 48
    %v2736 = vpop.permute.xlu0 %2735
    %2737 = vrot.lane.b32.xlu0 %v1403, 48
    %v2738 = vpop.permute.xlu0 %2737
    %2739 = vrot.lane.b32.xlu0 %v1407, 48
    %v2740 = vpop.permute.xlu0 %2739
    %2741 = vrot.lane.b32.xlu0 %v1411, 48
    %v2742 = vpop.permute.xlu0 %2741
    %2751 = vmatpush.msra.mxu0 0.0
    %2752 = vmatpush.msra.mxu0 0.0
    %2753 = vmatpush.msra.mxu0 0.0
    %2754 = vmatpush.msra.mxu0 0.0
    %2755 = vmatpush.msra.mxu0 0.0
    %2756 = vmatpush.msra.mxu0 0.0
    %2757 = vmatpush.msra.mxu0 0.0
    %2758 = vmatpush.msra.mxu0 0.0
    %2759 = vmatpush.msra.mxu0 %v2742
    %2760 = vmatpush.msra.mxu0 %v2740
    %2761 = vmatpush.msra.mxu0 %v2738
    %2762 = vmatpush.msra.mxu0 %v2736
    %2763 = vmatpush.msra.mxu0 %v2734
    %2764 = vmatpush.msra.mxu0 %v2732
    %2765 = vmatpush.msra.mxu0 %v2730
    %2766 = vmatpush.msra.mxu0 %v2728
    %2767 = vmatmul.f32.gmra.mxu0 %v2322
    %v2768 = vpop.f32.mrf.mxu0
    %v2769 = vadd.f32 0.0, %v2768
    %2770 = vmatmul.f32.gmra.mxu0 %v2325
    %v2771 = vpop.f32.mrf.mxu0
    %v2772 = vadd.f32 0.0, %v2771
    %2773 = vdwg.mxu0
    %v2774 = vadd.f32 %v2725, %v2769
    %v2775 = vadd.f32 %v2726, %v2772
    %2776 = vrot.lane.b32.xlu0 %v1383, 32
    %v2777 = vpop.permute.xlu0 %2776
    %2778 = vrot.lane.b32.xlu0 %v1387, 32
    %v2779 = vpop.permute.xlu0 %2778
    %2780 = vrot.lane.b32.xlu0 %v1391, 32
    %v2781 = vpop.permute.xlu0 %2780
    %2782 = vrot.lane.b32.xlu0 %v1395, 32
    %v2783 = vpop.permute.xlu0 %2782
    %2784 = vrot.lane.b32.xlu0 %v1399, 32
    %v2785 = vpop.permute.xlu0 %2784
    %2786 = vrot.lane.b32.xlu0 %v1403, 32
    %v2787 = vpop.permute.xlu0 %2786
    %2788 = vrot.lane.b32.xlu0 %v1407, 32
    %v2789 = vpop.permute.xlu0 %2788
    %2790 = vrot.lane.b32.xlu0 %v1411, 32
    %v2791 = vpop.permute.xlu0 %2790
    %2800 = vmatpush.msra.mxu0 0.0
    %2801 = vmatpush.msra.mxu0 0.0
    %2802 = vmatpush.msra.mxu0 0.0
    %2803 = vmatpush.msra.mxu0 0.0
    %2804 = vmatpush.msra.mxu0 0.0
    %2805 = vmatpush.msra.mxu0 0.0
    %2806 = vmatpush.msra.mxu0 0.0
    %2807 = vmatpush.msra.mxu0 0.0
    %2808 = vmatpush.msra.mxu0 %v2791
    %2809 = vmatpush.msra.mxu0 %v2789
    %2810 = vmatpush.msra.mxu0 %v2787
    %2811 = vmatpush.msra.mxu0 %v2785
    %2812 = vmatpush.msra.mxu0 %v2783
    %2813 = vmatpush.msra.mxu0 %v2781
    %2814 = vmatpush.msra.mxu0 %v2779
    %2815 = vmatpush.msra.mxu0 %v2777
    %2816 = vmatmul.f32.gmra.mxu0 %v2380
    %v2817 = vpop.f32.mrf.mxu0
    %v2818 = vadd.f32 0.0, %v2817
    %2819 = vmatmul.f32.gmra.mxu0 %v2383
    %v2820 = vpop.f32.mrf.mxu0
    %v2821 = vadd.f32 0.0, %v2820
    %2822 = vdwg.mxu0
    %v2823 = vadd.f32 %v2774, %v2818
    %v2824 = vadd.f32 %v2775, %v2821
    %2825 = vrot.lane.b32.xlu0 %v1383, 16
    %v2826 = vpop.permute.xlu0 %2825
    %2827 = vrot.lane.b32.xlu0 %v1387, 16
    %v2828 = vpop.permute.xlu0 %2827
    %2829 = vrot.lane.b32.xlu0 %v1391, 16
    %v2830 = vpop.permute.xlu0 %2829
    %2831 = vrot.lane.b32.xlu0 %v1395, 16
    %v2832 = vpop.permute.xlu0 %2831
    %2833 = vrot.lane.b32.xlu0 %v1399, 16
    %v2834 = vpop.permute.xlu0 %2833
    %2835 = vrot.lane.b32.xlu0 %v1403, 16
    %v2836 = vpop.permute.xlu0 %2835
    %2837 = vrot.lane.b32.xlu0 %v1407, 16
    %v2838 = vpop.permute.xlu0 %2837
    %2839 = vrot.lane.b32.xlu0 %v1411, 16
    %v2840 = vpop.permute.xlu0 %2839
    %2849 = vmatpush.msra.mxu0 0.0
    %2850 = vmatpush.msra.mxu0 0.0
    %2851 = vmatpush.msra.mxu0 0.0
    %2852 = vmatpush.msra.mxu0 0.0
    %2853 = vmatpush.msra.mxu0 0.0
    %2854 = vmatpush.msra.mxu0 0.0
    %2855 = vmatpush.msra.mxu0 0.0
    %2856 = vmatpush.msra.mxu0 0.0
    %2857 = vmatpush.msra.mxu0 %v2840
    %2858 = vmatpush.msra.mxu0 %v2838
    %2859 = vmatpush.msra.mxu0 %v2836
    %2860 = vmatpush.msra.mxu0 %v2834
    %2861 = vmatpush.msra.mxu0 %v2832
    %2862 = vmatpush.msra.mxu0 %v2830
    %2863 = vmatpush.msra.mxu0 %v2828
    %2864 = vmatpush.msra.mxu0 %v2826
    %2865 = vmatmul.f32.gmra.mxu0 %v2438
    %v2866 = vpop.f32.mrf.mxu0
    %v2867 = vadd.f32 0.0, %v2866
    %2868 = vmatmul.f32.gmra.mxu0 %v2441
    %v2869 = vpop.f32.mrf.mxu0
    %v2870 = vadd.f32 0.0, %v2869
    %2871 = vdwg.mxu0
    %v2872 = vadd.f32 %v2823, %v2867
    %v2873 = vadd.f32 %v2824, %v2870
    %2874 = vmatpush.msra.mxu0 0.0
    %2875 = vmatpush.msra.mxu0 0.0
    %2876 = vmatpush.msra.mxu0 0.0
    %2877 = vmatpush.msra.mxu0 0.0
    %2878 = vmatpush.msra.mxu0 0.0
    %2879 = vmatpush.msra.mxu0 0.0
    %2880 = vmatpush.msra.mxu0 0.0
    %2881 = vmatpush.msra.mxu0 0.0
    %2882 = vmatpush.msra.mxu0 %v2022
    %2883 = vmatpush.msra.mxu0 %v2018
    %2884 = vmatpush.msra.mxu0 %v2014
    %2885 = vmatpush.msra.mxu0 %v2010
    %2886 = vmatpush.msra.mxu0 %v2006
    %2887 = vmatpush.msra.mxu0 %v2002
    %2888 = vmatpush.msra.mxu0 %v1998
    %2889 = vmatpush.msra.mxu0 %v1994
    %2890 = vmatmul.f32.gmra.mxu0 %v2472
    %v2891 = vpop.f32.mrf.mxu0
    %v2892 = vadd.f32 0.0, %v2891
    %2893 = vmatmul.f32.gmra.mxu0 %v2475
    %v2894 = vpop.f32.mrf.mxu0
    %v2895 = vadd.f32 0.0, %v2894
    %2896 = vdwg.mxu0
    %v2897 = vadd.f32 %v2872, %v2892
    %v2898 = vadd.f32 %v2873, %v2895
    %vm2899 = vcmask 130048
    %v2900 = vsel %vm2899, %v2500, 0.0
    %v2901 = vsel %vm2899, %v2501, 0.0
    %v2902 = vadd.f32 %v2900, %v2901
    %v2903 = vsel %vm2899, %v2897, 0.0
    %v2904 = vadd.f32 %v2902, %v2903
    %v2905 = vsel %vm2899, %v2898, 0.0
    %v2906 = vadd.f32 %v2904, %v2905
    %v2907 = vrot.slane %v2906, 4
    %v2908 = vadd.f32 %v2906, %v2907
    %v2909 = vrot.slane %v2908, 2
    %v2910 = vadd.f32 %v2908, %v2909
    %v2911 = vrot.slane %v2910, 1
    %v2912 = vadd.f32 %v2910, %v2911
    %v2913 = vrcp.pop 32.0
    %v2914 = vmul.f32 32.0, %v2913
    %v2915 = vsub.f32 1.0, %v2914
    %v2916 = vmul.f32 %v2913, %v2915
    %v2917 = vadd.f32 %v2913, %v2916
    %vm2918 = vweird.f32 %v2913
    %v2919 = vsel %vm2918, %v2913, %v2917
    %v2920 = vmul.f32 %v2912, %v2919
    %v2921 = vsub.f32 %v2500, %v2920
    %v2922 = vsub.f32 %v2501, %v2920
    %v2923 = vsub.f32 %v2897, %v2920
    %v2924 = vsub.f32 %v2898, %v2920
    %v2925 = vmul.f32 %v2921, %v2921
    %v2926 = vmul.f32 %v2922, %v2922
    %v2927 = vmul.f32 %v2923, %v2923
    %v2928 = vmul.f32 %v2924, %v2924
    %v2929 = vsel %vm2899, %v2925, 0.0
    %v2930 = vsel %vm2899, %v2926, 0.0
    %v2931 = vadd.f32 %v2929, %v2930
    %v2932 = vsel %vm2899, %v2927, 0.0
    %v2933 = vadd.f32 %v2931, %v2932
    %v2934 = vsel %vm2899, %v2928, 0.0
    %v2935 = vadd.f32 %v2933, %v2934
    %v2936 = vrot.slane %v2935, 4
    %v2937 = vadd.f32 %v2935, %v2936
    %v2938 = vrot.slane %v2937, 2
    %v2939 = vadd.f32 %v2937, %v2938
    %v2940 = vrot.slane %v2939, 1
    %v2941 = vadd.f32 %v2939, %v2940
    %v2942 = vmul.f32 %v2941, %v2919
    %v2943 = vld [vmem:[%s5] sm:$0x1]
    %v2944 = vadd.f32 %v2942, 1e-05
    %v2945 = vrsqrt.pop %v2944
    %v2946 = vmul.f32 %v2945, %v2944
    %v2947 = vmul.f32 %v2946, %v2945
    %v2948 = vmul.f32 0.5, %v2947
    %v2949 = vsub.f32 1.5, %v2948
    %v2950 = vmul.f32 %v2945, %v2949
    %vm2951 = vweird.f32 %v2944
    %vm2952 = vweird.f32 %v2945
    %vm2953 = vmor %vm2951, %vm2952
    %v2954 = vsel %vm2953, %v2945, %v2950
    %v2955 = vmul.f32 %v2943, %v2954
    %v2956 = vld [vmem:[%s6] sm:$0x1]
    %v2957 = vmul.f32 %v2920, %v2955
    %v2958 = vsub.f32 %v2956, %v2957
    %v2960 = vperm.slane %v2955, 0
    %v2962 = vmul.f32 %v2500, %v2960
    %v2963 = vmul.f32 %v2501, %v2960
    %v2964 = vmul.f32 %v2897, %v2960
    %v2965 = vmul.f32 %v2898, %v2960
    %v2967 = vperm.slane %v2958, 0
    %v2969 = vadd.f32 %v2962, %v2967
    %v2970 = vadd.f32 %v2963, %v2967
    %v2971 = vadd.f32 %v2964, %v2967
    %v2972 = vadd.f32 %v2965, %v2967
    %v2973 = vmax.f32 %v2969, 0.0
    %v2974 = vmax.f32 %v2970, 0.0
    %v2975 = vmax.f32 %v2971, 0.0
    %v2976 = vmax.f32 %v2972, 0.0
    %v2977 = vld [vmem:[%s7] sm:$0xff]
    %v2978 = vld [vmem:[%s7 + $0x8] sm:$0xff]
    %v2980 = vsel %vm2899, %v2973, 0
    %v2983 = vsel %vm2899, %v2974, 0
    %v2986 = vsel %vm2899, %v2975, 0
    %v2989 = vsel %vm2899, %v2976, 0
    %2991 = vmatpush.msra.mxu0 0.0
    %2992 = vmatpush.msra.mxu0 0.0
    %2993 = vmatpush.msra.mxu0 0.0
    %2994 = vmatpush.msra.mxu0 0.0
    %2995 = vmatpush.msra.mxu0 0.0
    %2996 = vmatpush.msra.mxu0 0.0
    %2997 = vmatpush.msra.mxu0 0.0
    %2998 = vmatpush.msra.mxu0 0.0
    %2999 = vmatpush.msra.mxu0 0.0
    %3000 = vmatpush.msra.mxu0 0.0
    %3001 = vmatpush.msra.mxu0 0.0
    %3002 = vmatpush.msra.mxu0 0.0
    %3003 = vmatpush.msra.mxu0 0.0
    %3004 = vmatpush.msra.mxu0 0.0
    %v3005 = vand.u32 %v2978, 4294901760
    %3006 = vmatpush.msra.mxu0 %v3005
    %v3007 = vand.u32 %v2977, 4294901760
    %3008 = vmatpush.msra.mxu0 %v3007
    %v3009 = vand.u32 %v2980, 4294901760
    %v3010 = vsub.f32 %v2980, %v3009
    %v3011 = vand.u32 %v3010, 4294901760
    %v3012 = vsub.f32 %v3010, %v3011
    %v3013 = vand.u32 %v3012, 4294901760
    %3014 = vmatmul.f32.gmra.mxu0 %v3013
    %v3015 = vpop.f32.mrf.mxu0
    %v3016 = vadd.f32 0.0, %v3015
    %v3017 = vand.u32 %v2983, 4294901760
    %v3018 = vsub.f32 %v2983, %v3017
    %v3019 = vand.u32 %v3018, 4294901760
    %v3020 = vsub.f32 %v3018, %v3019
    %v3021 = vand.u32 %v3020, 4294901760
    %3022 = vmatmul.f32.gmra.mxu0 %v3021
    %v3023 = vpop.f32.mrf.mxu0
    %v3024 = vadd.f32 0.0, %v3023
    %v3025 = vand.u32 %v2986, 4294901760
    %v3026 = vsub.f32 %v2986, %v3025
    %v3027 = vand.u32 %v3026, 4294901760
    %v3028 = vsub.f32 %v3026, %v3027
    %v3029 = vand.u32 %v3028, 4294901760
    %3030 = vmatmul.f32.gmra.mxu0 %v3029
    %v3031 = vpop.f32.mrf.mxu0
    %v3032 = vadd.f32 0.0, %v3031
    %v3033 = vand.u32 %v2989, 4294901760
    %v3034 = vsub.f32 %v2989, %v3033
    %v3035 = vand.u32 %v3034, 4294901760
    %v3036 = vsub.f32 %v3034, %v3035
    %v3037 = vand.u32 %v3036, 4294901760
    %3038 = vmatmul.f32.gmra.mxu0 %v3037
    %v3039 = vpop.f32.mrf.mxu0
    %v3040 = vadd.f32 0.0, %v3039
    %3041 = vdwg.mxu0
    %3042 = vmatpush.msra.mxu0 0.0
    %3043 = vmatpush.msra.mxu0 0.0
    %3044 = vmatpush.msra.mxu0 0.0
    %3045 = vmatpush.msra.mxu0 0.0
    %3046 = vmatpush.msra.mxu0 0.0
    %3047 = vmatpush.msra.mxu0 0.0
    %3048 = vmatpush.msra.mxu0 0.0
    %3049 = vmatpush.msra.mxu0 0.0
    %3050 = vmatpush.msra.mxu0 0.0
    %3051 = vmatpush.msra.mxu0 0.0
    %3052 = vmatpush.msra.mxu0 0.0
    %3053 = vmatpush.msra.mxu0 0.0
    %3054 = vmatpush.msra.mxu0 0.0
    %3055 = vmatpush.msra.mxu0 0.0
    %v3056 = vand.u32 %v2978, 4294901760
    %v3057 = vsub.f32 %v2978, %v3056
    %v3058 = vand.u32 %v3057, 4294901760
    %v3059 = vsub.f32 %v3057, %v3058
    %v3060 = vand.u32 %v3059, 4294901760
    %3061 = vmatpush.msra.mxu0 %v3060
    %v3062 = vand.u32 %v2977, 4294901760
    %v3063 = vsub.f32 %v2977, %v3062
    %v3064 = vand.u32 %v3063, 4294901760
    %v3065 = vsub.f32 %v3063, %v3064
    %v3066 = vand.u32 %v3065, 4294901760
    %3067 = vmatpush.msra.mxu0 %v3066
    %v3068 = vand.u32 %v2980, 4294901760
    %3069 = vmatmul.f32.gmra.mxu0 %v3068
    %v3070 = vpop.f32.mrf.mxu0
    %v3071 = vadd.f32 %v3016, %v3070
    %v3072 = vand.u32 %v2983, 4294901760
    %3073 = vmatmul.f32.gmra.mxu0 %v3072
    %v3074 = vpop.f32.mrf.mxu0
    %v3075 = vadd.f32 %v3024, %v3074
    %v3076 = vand.u32 %v2986, 4294901760
    %3077 = vmatmul.f32.gmra.mxu0 %v3076
    %v3078 = vpop.f32.mrf.mxu0
    %v3079 = vadd.f32 %v3032, %v3078
    %v3080 = vand.u32 %v2989, 4294901760
    %3081 = vmatmul.f32.gmra.mxu0 %v3080
    %v3082 = vpop.f32.mrf.mxu0
    %v3083 = vadd.f32 %v3040, %v3082
    %3084 = vdwg.mxu0
    %3085 = vmatpush.msra.mxu0 0.0
    %3086 = vmatpush.msra.mxu0 0.0
    %3087 = vmatpush.msra.mxu0 0.0
    %3088 = vmatpush.msra.mxu0 0.0
    %3089 = vmatpush.msra.mxu0 0.0
    %3090 = vmatpush.msra.mxu0 0.0
    %3091 = vmatpush.msra.mxu0 0.0
    %3092 = vmatpush.msra.mxu0 0.0
    %3093 = vmatpush.msra.mxu0 0.0
    %3094 = vmatpush.msra.mxu0 0.0
    %3095 = vmatpush.msra.mxu0 0.0
    %3096 = vmatpush.msra.mxu0 0.0
    %3097 = vmatpush.msra.mxu0 0.0
    %3098 = vmatpush.msra.mxu0 0.0
    %v3099 = vand.u32 %v2978, 4294901760
    %v3100 = vsub.f32 %v2978, %v3099
    %3101 = vmatpush.msra.mxu0 %v3100
    %v3102 = vand.u32 %v2977, 4294901760
    %v3103 = vsub.f32 %v2977, %v3102
    %3104 = vmatpush.msra.mxu0 %v3103
    %v3105 = vand.u32 %v2980, 4294901760
    %v3106 = vsub.f32 %v2980, %v3105
    %3107 = vmatmul.f32.gmra.mxu0 %v3106
    %v3108 = vpop.f32.mrf.mxu0
    %v3109 = vadd.f32 %v3071, %v3108
    %v3110 = vand.u32 %v2983, 4294901760
    %v3111 = vsub.f32 %v2983, %v3110
    %3112 = vmatmul.f32.gmra.mxu0 %v3111
    %v3113 = vpop.f32.mrf.mxu0
    %v3114 = vadd.f32 %v3075, %v3113
    %v3115 = vand.u32 %v2986, 4294901760
    %v3116 = vsub.f32 %v2986, %v3115
    %3117 = vmatmul.f32.gmra.mxu0 %v3116
    %v3118 = vpop.f32.mrf.mxu0
    %v3119 = vadd.f32 %v3079, %v3118
    %v3120 = vand.u32 %v2989, 4294901760
    %v3121 = vsub.f32 %v2989, %v3120
    %3122 = vmatmul.f32.gmra.mxu0 %v3121
    %v3123 = vpop.f32.mrf.mxu0
    %v3124 = vadd.f32 %v3083, %v3123
    %3125 = vdwg.mxu0
    %3126 = vmatpush.msra.mxu0 0.0
    %3127 = vmatpush.msra.mxu0 0.0
    %3128 = vmatpush.msra.mxu0 0.0
    %3129 = vmatpush.msra.mxu0 0.0
    %3130 = vmatpush.msra.mxu0 0.0
    %3131 = vmatpush.msra.mxu0 0.0
    %3132 = vmatpush.msra.mxu0 0.0
    %3133 = vmatpush.msra.mxu0 0.0
    %3134 = vmatpush.msra.mxu0 0.0
    %3135 = vmatpush.msra.mxu0 0.0
    %3136 = vmatpush.msra.mxu0 0.0
    %3137 = vmatpush.msra.mxu0 0.0
    %3138 = vmatpush.msra.mxu0 0.0
    %3139 = vmatpush.msra.mxu0 0.0
    %v3140 = vand.u32 %v2978, 4294901760
    %3141 = vmatpush.msra.mxu0 %v3140
    %v3142 = vand.u32 %v2977, 4294901760
    %3143 = vmatpush.msra.mxu0 %v3142
    %v3144 = vand.u32 %v2980, 4294901760
    %v3145 = vsub.f32 %v2980, %v3144
    %v3146 = vand.u32 %v3145, 4294901760
    %3147 = vmatmul.f32.gmra.mxu0 %v3146
    %v3148 = vpop.f32.mrf.mxu0
    %v3149 = vadd.f32 %v3109, %v3148
    %v3150 = vand.u32 %v2983, 4294901760
    %v3151 = vsub.f32 %v2983, %v3150
    %v3152 = vand.u32 %v3151, 4294901760
    %3153 = vmatmul.f32.gmra.mxu0 %v3152
    %v3154 = vpop.f32.mrf.mxu0
    %v3155 = vadd.f32 %v3114, %v3154
    %v3156 = vand.u32 %v2986, 4294901760
    %v3157 = vsub.f32 %v2986, %v3156
    %v3158 = vand.u32 %v3157, 4294901760
    %3159 = vmatmul.f32.gmra.mxu0 %v3158
    %v3160 = vpop.f32.mrf.mxu0
    %v3161 = vadd.f32 %v3119, %v3160
    %v3162 = vand.u32 %v2989, 4294901760
    %v3163 = vsub.f32 %v2989, %v3162
    %v3164 = vand.u32 %v3163, 4294901760
    %3165 = vmatmul.f32.gmra.mxu0 %v3164
    %v3166 = vpop.f32.mrf.mxu0
    %v3167 = vadd.f32 %v3124, %v3166
    %3168 = vdwg.mxu0
    %3169 = vmatpush.msra.mxu0 0.0
    %3170 = vmatpush.msra.mxu0 0.0
    %3171 = vmatpush.msra.mxu0 0.0
    %3172 = vmatpush.msra.mxu0 0.0
    %3173 = vmatpush.msra.mxu0 0.0
    %3174 = vmatpush.msra.mxu0 0.0
    %3175 = vmatpush.msra.mxu0 0.0
    %3176 = vmatpush.msra.mxu0 0.0
    %3177 = vmatpush.msra.mxu0 0.0
    %3178 = vmatpush.msra.mxu0 0.0
    %3179 = vmatpush.msra.mxu0 0.0
    %3180 = vmatpush.msra.mxu0 0.0
    %3181 = vmatpush.msra.mxu0 0.0
    %3182 = vmatpush.msra.mxu0 0.0
    %v3183 = vand.u32 %v2978, 4294901760
    %v3184 = vsub.f32 %v2978, %v3183
    %v3185 = vand.u32 %v3184, 4294901760
    %3186 = vmatpush.msra.mxu0 %v3185
    %v3187 = vand.u32 %v2977, 4294901760
    %v3188 = vsub.f32 %v2977, %v3187
    %v3189 = vand.u32 %v3188, 4294901760
    %3190 = vmatpush.msra.mxu0 %v3189
    %v3191 = vand.u32 %v2980, 4294901760
    %3192 = vmatmul.f32.gmra.mxu0 %v3191
    %v3193 = vpop.f32.mrf.mxu0
    %v3194 = vadd.f32 %v3149, %v3193
    %v3195 = vand.u32 %v2983, 4294901760
    %3196 = vmatmul.f32.gmra.mxu0 %v3195
    %v3197 = vpop.f32.mrf.mxu0
    %v3198 = vadd.f32 %v3155, %v3197
    %v3199 = vand.u32 %v2986, 4294901760
    %3200 = vmatmul.f32.gmra.mxu0 %v3199
    %v3201 = vpop.f32.mrf.mxu0
    %v3202 = vadd.f32 %v3161, %v3201
    %v3203 = vand.u32 %v2989, 4294901760
    %3204 = vmatmul.f32.gmra.mxu0 %v3203
    %v3205 = vpop.f32.mrf.mxu0
    %v3206 = vadd.f32 %v3167, %v3205
    %3207 = vdwg.mxu0
    %3208 = vmatpush.msra.mxu0 0.0
    %3209 = vmatpush.msra.mxu0 0.0
    %3210 = vmatpush.msra.mxu0 0.0
    %3211 = vmatpush.msra.mxu0 0.0
    %3212 = vmatpush.msra.mxu0 0.0
    %3213 = vmatpush.msra.mxu0 0.0
    %3214 = vmatpush.msra.mxu0 0.0
    %3215 = vmatpush.msra.mxu0 0.0
    %3216 = vmatpush.msra.mxu0 0.0
    %3217 = vmatpush.msra.mxu0 0.0
    %3218 = vmatpush.msra.mxu0 0.0
    %3219 = vmatpush.msra.mxu0 0.0
    %3220 = vmatpush.msra.mxu0 0.0
    %3221 = vmatpush.msra.mxu0 0.0
    %v3222 = vand.u32 %v2978, 4294901760
    %3223 = vmatpush.msra.mxu0 %v3222
    %v3224 = vand.u32 %v2977, 4294901760
    %3225 = vmatpush.msra.mxu0 %v3224
    %v3226 = vand.u32 %v2980, 4294901760
    %3227 = vmatmul.f32.gmra.mxu0 %v3226
    %v3228 = vpop.f32.mrf.mxu0
    %v3229 = vadd.f32 %v3194, %v3228
    %v3230 = vand.u32 %v2983, 4294901760
    %3231 = vmatmul.f32.gmra.mxu0 %v3230
    %v3232 = vpop.f32.mrf.mxu0
    %v3233 = vadd.f32 %v3198, %v3232
    %v3234 = vand.u32 %v2986, 4294901760
    %3235 = vmatmul.f32.gmra.mxu0 %v3234
    %v3236 = vpop.f32.mrf.mxu0
    %v3237 = vadd.f32 %v3202, %v3236
    %v3238 = vand.u32 %v2989, 4294901760
    %3239 = vmatmul.f32.gmra.mxu0 %v3238
    %v3240 = vpop.f32.mrf.mxu0
    %v3241 = vadd.f32 %v3206, %v3240
    %3242 = vdwg.mxu0
    %v3243 = vld [vmem:[%s8] sm:$0xf]
    %s3244 = scalar_lea.vmem %s8, 4
    %v3245 = vld [vmem:[%s3244] sm:$0xf]
    %3248 = vrot.lane.b32.xlu0 %v3229, 120
    %v3249 = vpop.permute.xlu0 %3248
    %3250 = vrot.lane.b32.xlu0 %v3233, 120
    %v3251 = vpop.permute.xlu0 %3250
    %v3255 = vsel %vm2899, %v3245, 0
    %3257 = vmatpush.msra.mxu0 0.0
    %3258 = vmatpush.msra.mxu0 0.0
    %3259 = vmatpush.msra.mxu0 0.0
    %3260 = vmatpush.msra.mxu0 0.0
    %3261 = vmatpush.msra.mxu0 0.0
    %3262 = vmatpush.msra.mxu0 0.0
    %3263 = vmatpush.msra.mxu0 0.0
    %3264 = vmatpush.msra.mxu0 0.0
    %3265 = vmatpush.msra.mxu0 0.0
    %3266 = vmatpush.msra.mxu0 0.0
    %3267 = vmatpush.msra.mxu0 0.0
    %3268 = vmatpush.msra.mxu0 0.0
    %3269 = vmatpush.msra.mxu0 0.0
    %3270 = vmatpush.msra.mxu0 0.0
    %3271 = vmatpush.msra.mxu0 %v3251
    %3272 = vmatpush.msra.mxu0 %v3249
    %3273 = vmatmul.f32.gmra.mxu0 %v3255
    %v3274 = vpop.f32.mrf.mxu0
    %v3275 = vadd.f32 0.0, %v3274
    %3276 = vdwg.mxu0
    %v3278 = vsel %vm2899, %v3243, 0
    %3280 = vmatpush.msra.mxu0 0.0
    %3281 = vmatpush.msra.mxu0 0.0
    %3282 = vmatpush.msra.mxu0 0.0
    %3283 = vmatpush.msra.mxu0 0.0
    %3284 = vmatpush.msra.mxu0 0.0
    %3285 = vmatpush.msra.mxu0 0.0
    %3286 = vmatpush.msra.mxu0 0.0
    %3287 = vmatpush.msra.mxu0 0.0
    %3288 = vmatpush.msra.mxu0 0.0
    %3289 = vmatpush.msra.mxu0 0.0
    %3290 = vmatpush.msra.mxu0 0.0
    %3291 = vmatpush.msra.mxu0 0.0
    %3292 = vmatpush.msra.mxu0 0.0
    %3293 = vmatpush.msra.mxu0 0.0
    %3294 = vmatpush.msra.mxu0 %v3233
    %3295 = vmatpush.msra.mxu0 %v3229
    %3296 = vmatmul.f32.gmra.mxu0 %v3278
    %v3297 = vpop.f32.mrf.mxu0
    %v3298 = vadd.f32 %v3275, %v3297
    %3299 = vdwg.mxu0
    %s3300 = scalar_lea.vmem %s8, 8
    %v3301 = vld [vmem:[%s3300] sm:$0xf]
    %3302 = vrot.lane.b32.xlu0 %v3229, 112
    %v3303 = vpop.permute.xlu0 %3302
    %3304 = vrot.lane.b32.xlu0 %v3233, 112
    %v3305 = vpop.permute.xlu0 %3304
    %v3309 = vsel %vm2899, %v3301, 0
    %3311 = vmatpush.msra.mxu0 0.0
    %3312 = vmatpush.msra.mxu0 0.0
    %3313 = vmatpush.msra.mxu0 0.0
    %3314 = vmatpush.msra.mxu0 0.0
    %3315 = vmatpush.msra.mxu0 0.0
    %3316 = vmatpush.msra.mxu0 0.0
    %3317 = vmatpush.msra.mxu0 0.0
    %3318 = vmatpush.msra.mxu0 0.0
    %3319 = vmatpush.msra.mxu0 0.0
    %3320 = vmatpush.msra.mxu0 0.0
    %3321 = vmatpush.msra.mxu0 0.0
    %3322 = vmatpush.msra.mxu0 0.0
    %3323 = vmatpush.msra.mxu0 0.0
    %3324 = vmatpush.msra.mxu0 0.0
    %3325 = vmatpush.msra.mxu0 %v3305
    %3326 = vmatpush.msra.mxu0 %v3303
    %3327 = vmatmul.f32.gmra.mxu0 %v3309
    %v3328 = vpop.f32.mrf.mxu0
    %v3329 = vadd.f32 0.0, %v3328
    %3330 = vdwg.mxu0
    %v3331 = vadd.f32 %v3298, %v3329
    %s3332 = scalar_lea.vmem %s8, 12
    %v3333 = vld [vmem:[%s3332] sm:$0xf]
    %3334 = vrot.lane.b32.xlu0 %v3229, 104
    %v3335 = vpop.permute.xlu0 %3334
    %3336 = vrot.lane.b32.xlu0 %v3233, 104
    %v3337 = vpop.permute.xlu0 %3336
    %v3341 = vsel %vm2899, %v3333, 0
    %3343 = vmatpush.msra.mxu0 0.0
    %3344 = vmatpush.msra.mxu0 0.0
    %3345 = vmatpush.msra.mxu0 0.0
    %3346 = vmatpush.msra.mxu0 0.0
    %3347 = vmatpush.msra.mxu0 0.0
    %3348 = vmatpush.msra.mxu0 0.0
    %3349 = vmatpush.msra.mxu0 0.0
    %3350 = vmatpush.msra.mxu0 0.0
    %3351 = vmatpush.msra.mxu0 0.0
    %3352 = vmatpush.msra.mxu0 0.0
    %3353 = vmatpush.msra.mxu0 0.0
    %3354 = vmatpush.msra.mxu0 0.0
    %3355 = vmatpush.msra.mxu0 0.0
    %3356 = vmatpush.msra.mxu0 0.0
    %3357 = vmatpush.msra.mxu0 %v3337
    %3358 = vmatpush.msra.mxu0 %v3335
    %3359 = vmatmul.f32.gmra.mxu0 %v3341
    %v3360 = vpop.f32.mrf.mxu0
    %v3361 = vadd.f32 0.0, %v3360
    %3362 = vdwg.mxu0
    %v3363 = vadd.f32 %v3331, %v3361
    %s3364 = scalar_lea.vmem %s8, 16
    %v3365 = vld [vmem:[%s3364] sm:$0xf]
    %3366 = vrot.lane.b32.xlu0 %v3229, 96
    %v3367 = vpop.permute.xlu0 %3366
    %3368 = vrot.lane.b32.xlu0 %v3233, 96
    %v3369 = vpop.permute.xlu0 %3368
    %v3373 = vsel %vm2899, %v3365, 0
    %3375 = vmatpush.msra.mxu0 0.0
    %3376 = vmatpush.msra.mxu0 0.0
    %3377 = vmatpush.msra.mxu0 0.0
    %3378 = vmatpush.msra.mxu0 0.0
    %3379 = vmatpush.msra.mxu0 0.0
    %3380 = vmatpush.msra.mxu0 0.0
    %3381 = vmatpush.msra.mxu0 0.0
    %3382 = vmatpush.msra.mxu0 0.0
    %3383 = vmatpush.msra.mxu0 0.0
    %3384 = vmatpush.msra.mxu0 0.0
    %3385 = vmatpush.msra.mxu0 0.0
    %3386 = vmatpush.msra.mxu0 0.0
    %3387 = vmatpush.msra.mxu0 0.0
    %3388 = vmatpush.msra.mxu0 0.0
    %3389 = vmatpush.msra.mxu0 %v3369
    %3390 = vmatpush.msra.mxu0 %v3367
    %3391 = vmatmul.f32.gmra.mxu0 %v3373
    %v3392 = vpop.f32.mrf.mxu0
    %v3393 = vadd.f32 0.0, %v3392
    %3394 = vdwg.mxu0
    %v3395 = vadd.f32 %v3363, %v3393
    %s3396 = scalar_lea.vmem %s8, 20
    %v3397 = vld [vmem:[%s3396] sm:$0xf]
    %3398 = vrot.lane.b32.xlu0 %v3229, 88
    %v3399 = vpop.permute.xlu0 %3398
    %3400 = vrot.lane.b32.xlu0 %v3233, 88
    %v3401 = vpop.permute.xlu0 %3400
    %v3405 = vsel %vm2899, %v3397, 0
    %3407 = vmatpush.msra.mxu0 0.0
    %3408 = vmatpush.msra.mxu0 0.0
    %3409 = vmatpush.msra.mxu0 0.0
    %3410 = vmatpush.msra.mxu0 0.0
    %3411 = vmatpush.msra.mxu0 0.0
    %3412 = vmatpush.msra.mxu0 0.0
    %3413 = vmatpush.msra.mxu0 0.0
    %3414 = vmatpush.msra.mxu0 0.0
    %3415 = vmatpush.msra.mxu0 0.0
    %3416 = vmatpush.msra.mxu0 0.0
    %3417 = vmatpush.msra.mxu0 0.0
    %3418 = vmatpush.msra.mxu0 0.0
    %3419 = vmatpush.msra.mxu0 0.0
    %3420 = vmatpush.msra.mxu0 0.0
    %3421 = vmatpush.msra.mxu0 %v3401
    %3422 = vmatpush.msra.mxu0 %v3399
    %3423 = vmatmul.f32.gmra.mxu0 %v3405
    %v3424 = vpop.f32.mrf.mxu0
    %v3425 = vadd.f32 0.0, %v3424
    %3426 = vdwg.mxu0
    %v3427 = vadd.f32 %v3395, %v3425
    %s3428 = scalar_lea.vmem %s8, 24
    %v3429 = vld [vmem:[%s3428] sm:$0xf]
    %3430 = vrot.lane.b32.xlu0 %v3229, 80
    %v3431 = vpop.permute.xlu0 %3430
    %3432 = vrot.lane.b32.xlu0 %v3233, 80
    %v3433 = vpop.permute.xlu0 %3432
    %v3437 = vsel %vm2899, %v3429, 0
    %3439 = vmatpush.msra.mxu0 0.0
    %3440 = vmatpush.msra.mxu0 0.0
    %3441 = vmatpush.msra.mxu0 0.0
    %3442 = vmatpush.msra.mxu0 0.0
    %3443 = vmatpush.msra.mxu0 0.0
    %3444 = vmatpush.msra.mxu0 0.0
    %3445 = vmatpush.msra.mxu0 0.0
    %3446 = vmatpush.msra.mxu0 0.0
    %3447 = vmatpush.msra.mxu0 0.0
    %3448 = vmatpush.msra.mxu0 0.0
    %3449 = vmatpush.msra.mxu0 0.0
    %3450 = vmatpush.msra.mxu0 0.0
    %3451 = vmatpush.msra.mxu0 0.0
    %3452 = vmatpush.msra.mxu0 0.0
    %3453 = vmatpush.msra.mxu0 %v3433
    %3454 = vmatpush.msra.mxu0 %v3431
    %3455 = vmatmul.f32.gmra.mxu0 %v3437
    %v3456 = vpop.f32.mrf.mxu0
    %v3457 = vadd.f32 0.0, %v3456
    %3458 = vdwg.mxu0
    %v3459 = vadd.f32 %v3427, %v3457
    %s3460 = scalar_lea.vmem %s8, 28
    %v3461 = vld [vmem:[%s3460] sm:$0xf]
    %3462 = vrot.lane.b32.xlu0 %v3229, 72
    %v3463 = vpop.permute.xlu0 %3462
    %3464 = vrot.lane.b32.xlu0 %v3233, 72
    %v3465 = vpop.permute.xlu0 %3464
    %v3469 = vsel %vm2899, %v3461, 0
    %3471 = vmatpush.msra.mxu0 0.0
    %3472 = vmatpush.msra.mxu0 0.0
    %3473 = vmatpush.msra.mxu0 0.0
    %3474 = vmatpush.msra.mxu0 0.0
    %3475 = vmatpush.msra.mxu0 0.0
    %3476 = vmatpush.msra.mxu0 0.0
    %3477 = vmatpush.msra.mxu0 0.0
    %3478 = vmatpush.msra.mxu0 0.0
    %3479 = vmatpush.msra.mxu0 0.0
    %3480 = vmatpush.msra.mxu0 0.0
    %3481 = vmatpush.msra.mxu0 0.0
    %3482 = vmatpush.msra.mxu0 0.0
    %3483 = vmatpush.msra.mxu0 0.0
    %3484 = vmatpush.msra.mxu0 0.0
    %3485 = vmatpush.msra.mxu0 %v3465
    %3486 = vmatpush.msra.mxu0 %v3463
    %3487 = vmatmul.f32.gmra.mxu0 %v3469
    %v3488 = vpop.f32.mrf.mxu0
    %v3489 = vadd.f32 0.0, %v3488
    %3490 = vdwg.mxu0
    %v3491 = vadd.f32 %v3459, %v3489
    %s3492 = scalar_lea.vmem %s8, 32
    %v3493 = vld [vmem:[%s3492] sm:$0xf]
    %3494 = vrot.lane.b32.xlu0 %v3229, 64
    %v3495 = vpop.permute.xlu0 %3494
    %3496 = vrot.lane.b32.xlu0 %v3233, 64
    %v3497 = vpop.permute.xlu0 %3496
    %v3501 = vsel %vm2899, %v3493, 0
    %3503 = vmatpush.msra.mxu0 0.0
    %3504 = vmatpush.msra.mxu0 0.0
    %3505 = vmatpush.msra.mxu0 0.0
    %3506 = vmatpush.msra.mxu0 0.0
    %3507 = vmatpush.msra.mxu0 0.0
    %3508 = vmatpush.msra.mxu0 0.0
    %3509 = vmatpush.msra.mxu0 0.0
    %3510 = vmatpush.msra.mxu0 0.0
    %3511 = vmatpush.msra.mxu0 0.0
    %3512 = vmatpush.msra.mxu0 0.0
    %3513 = vmatpush.msra.mxu0 0.0
    %3514 = vmatpush.msra.mxu0 0.0
    %3515 = vmatpush.msra.mxu0 0.0
    %3516 = vmatpush.msra.mxu0 0.0
    %3517 = vmatpush.msra.mxu0 %v3497
    %3518 = vmatpush.msra.mxu0 %v3495
    %3519 = vmatmul.f32.gmra.mxu0 %v3501
    %v3520 = vpop.f32.mrf.mxu0
    %v3521 = vadd.f32 0.0, %v3520
    %3522 = vdwg.mxu0
    %v3523 = vadd.f32 %v3491, %v3521
    %3526 = vrot.lane.b32.xlu0 %v3237, 120
    %v3527 = vpop.permute.xlu0 %3526
    %3528 = vrot.lane.b32.xlu0 %v3241, 120
    %v3529 = vpop.permute.xlu0 %3528
    %3532 = vmatpush.msra.mxu0 0.0
    %3533 = vmatpush.msra.mxu0 0.0
    %3534 = vmatpush.msra.mxu0 0.0
    %3535 = vmatpush.msra.mxu0 0.0
    %3536 = vmatpush.msra.mxu0 0.0
    %3537 = vmatpush.msra.mxu0 0.0
    %3538 = vmatpush.msra.mxu0 0.0
    %3539 = vmatpush.msra.mxu0 0.0
    %3540 = vmatpush.msra.mxu0 0.0
    %3541 = vmatpush.msra.mxu0 0.0
    %3542 = vmatpush.msra.mxu0 0.0
    %3543 = vmatpush.msra.mxu0 0.0
    %3544 = vmatpush.msra.mxu0 0.0
    %3545 = vmatpush.msra.mxu0 0.0
    %3546 = vmatpush.msra.mxu0 %v3529
    %3547 = vmatpush.msra.mxu0 %v3527
    %3548 = vmatmul.f32.gmra.mxu0 %v3255
    %v3549 = vpop.f32.mrf.mxu0
    %v3550 = vadd.f32 0.0, %v3549
    %3551 = vdwg.mxu0
    %3552 = vmatpush.msra.mxu0 0.0
    %3553 = vmatpush.msra.mxu0 0.0
    %3554 = vmatpush.msra.mxu0 0.0
    %3555 = vmatpush.msra.mxu0 0.0
    %3556 = vmatpush.msra.mxu0 0.0
    %3557 = vmatpush.msra.mxu0 0.0
    %3558 = vmatpush.msra.mxu0 0.0
    %3559 = vmatpush.msra.mxu0 0.0
    %3560 = vmatpush.msra.mxu0 0.0
    %3561 = vmatpush.msra.mxu0 0.0
    %3562 = vmatpush.msra.mxu0 0.0
    %3563 = vmatpush.msra.mxu0 0.0
    %3564 = vmatpush.msra.mxu0 0.0
    %3565 = vmatpush.msra.mxu0 0.0
    %3566 = vmatpush.msra.mxu0 %v3241
    %3567 = vmatpush.msra.mxu0 %v3237
    %3568 = vmatmul.f32.gmra.mxu0 %v3278
    %v3569 = vpop.f32.mrf.mxu0
    %v3570 = vadd.f32 %v3550, %v3569
    %3571 = vdwg.mxu0
    %3572 = vrot.lane.b32.xlu0 %v3237, 112
    %v3573 = vpop.permute.xlu0 %3572
    %3574 = vrot.lane.b32.xlu0 %v3241, 112
    %v3575 = vpop.permute.xlu0 %3574
    %3578 = vmatpush.msra.mxu0 0.0
    %3579 = vmatpush.msra.mxu0 0.0
    %3580 = vmatpush.msra.mxu0 0.0
    %3581 = vmatpush.msra.mxu0 0.0
    %3582 = vmatpush.msra.mxu0 0.0
    %3583 = vmatpush.msra.mxu0 0.0
    %3584 = vmatpush.msra.mxu0 0.0
    %3585 = vmatpush.msra.mxu0 0.0
    %3586 = vmatpush.msra.mxu0 0.0
    %3587 = vmatpush.msra.mxu0 0.0
    %3588 = vmatpush.msra.mxu0 0.0
    %3589 = vmatpush.msra.mxu0 0.0
    %3590 = vmatpush.msra.mxu0 0.0
    %3591 = vmatpush.msra.mxu0 0.0
    %3592 = vmatpush.msra.mxu0 %v3575
    %3593 = vmatpush.msra.mxu0 %v3573
    %3594 = vmatmul.f32.gmra.mxu0 %v3309
    %v3595 = vpop.f32.mrf.mxu0
    %v3596 = vadd.f32 0.0, %v3595
    %3597 = vdwg.mxu0
    %v3598 = vadd.f32 %v3570, %v3596
    %3599 = vrot.lane.b32.xlu0 %v3237, 104
    %v3600 = vpop.permute.xlu0 %3599
    %3601 = vrot.lane.b32.xlu0 %v3241, 104
    %v3602 = vpop.permute.xlu0 %3601
    %3605 = vmatpush.msra.mxu0 0.0
    %3606 = vmatpush.msra.mxu0 0.0
    %3607 = vmatpush.msra.mxu0 0.0
    %3608 = vmatpush.msra.mxu0 0.0
    %3609 = vmatpush.msra.mxu0 0.0
    %3610 = vmatpush.msra.mxu0 0.0
    %3611 = vmatpush.msra.mxu0 0.0
    %3612 = vmatpush.msra.mxu0 0.0
    %3613 = vmatpush.msra.mxu0 0.0
    %3614 = vmatpush.msra.mxu0 0.0
    %3615 = vmatpush.msra.mxu0 0.0
    %3616 = vmatpush.msra.mxu0 0.0
    %3617 = vmatpush.msra.mxu0 0.0
    %3618 = vmatpush.msra.mxu0 0.0
    %3619 = vmatpush.msra.mxu0 %v3602
    %3620 = vmatpush.msra.mxu0 %v3600
    %3621 = vmatmul.f32.gmra.mxu0 %v3341
    %v3622 = vpop.f32.mrf.mxu0
    %v3623 = vadd.f32 0.0, %v3622
    %3624 = vdwg.mxu0
    %v3625 = vadd.f32 %v3598, %v3623
    %3626 = vrot.lane.b32.xlu0 %v3237, 96
    %v3627 = vpop.permute.xlu0 %3626
    %3628 = vrot.lane.b32.xlu0 %v3241, 96
    %v3629 = vpop.permute.xlu0 %3628
    %3632 = vmatpush.msra.mxu0 0.0
    %3633 = vmatpush.msra.mxu0 0.0
    %3634 = vmatpush.msra.mxu0 0.0
    %3635 = vmatpush.msra.mxu0 0.0
    %3636 = vmatpush.msra.mxu0 0.0
    %3637 = vmatpush.msra.mxu0 0.0
    %3638 = vmatpush.msra.mxu0 0.0
    %3639 = vmatpush.msra.mxu0 0.0
    %3640 = vmatpush.msra.mxu0 0.0
    %3641 = vmatpush.msra.mxu0 0.0
    %3642 = vmatpush.msra.mxu0 0.0
    %3643 = vmatpush.msra.mxu0 0.0
    %3644 = vmatpush.msra.mxu0 0.0
    %3645 = vmatpush.msra.mxu0 0.0
    %3646 = vmatpush.msra.mxu0 %v3629
    %3647 = vmatpush.msra.mxu0 %v3627
    %3648 = vmatmul.f32.gmra.mxu0 %v3373
    %v3649 = vpop.f32.mrf.mxu0
    %v3650 = vadd.f32 0.0, %v3649
    %3651 = vdwg.mxu0
    %v3652 = vadd.f32 %v3625, %v3650
    %3653 = vrot.lane.b32.xlu0 %v3237, 88
    %v3654 = vpop.permute.xlu0 %3653
    %3655 = vrot.lane.b32.xlu0 %v3241, 88
    %v3656 = vpop.permute.xlu0 %3655
    %3659 = vmatpush.msra.mxu0 0.0
    %3660 = vmatpush.msra.mxu0 0.0
    %3661 = vmatpush.msra.mxu0 0.0
    %3662 = vmatpush.msra.mxu0 0.0
    %3663 = vmatpush.msra.mxu0 0.0
    %3664 = vmatpush.msra.mxu0 0.0
    %3665 = vmatpush.msra.mxu0 0.0
    %3666 = vmatpush.msra.mxu0 0.0
    %3667 = vmatpush.msra.mxu0 0.0
    %3668 = vmatpush.msra.mxu0 0.0
    %3669 = vmatpush.msra.mxu0 0.0
    %3670 = vmatpush.msra.mxu0 0.0
    %3671 = vmatpush.msra.mxu0 0.0
    %3672 = vmatpush.msra.mxu0 0.0
    %3673 = vmatpush.msra.mxu0 %v3656
    %3674 = vmatpush.msra.mxu0 %v3654
    %3675 = vmatmul.f32.gmra.mxu0 %v3405
    %v3676 = vpop.f32.mrf.mxu0
    %v3677 = vadd.f32 0.0, %v3676
    %3678 = vdwg.mxu0
    %v3679 = vadd.f32 %v3652, %v3677
    %3680 = vrot.lane.b32.xlu0 %v3237, 80
    %v3681 = vpop.permute.xlu0 %3680
    %3682 = vrot.lane.b32.xlu0 %v3241, 80
    %v3683 = vpop.permute.xlu0 %3682
    %3686 = vmatpush.msra.mxu0 0.0
    %3687 = vmatpush.msra.mxu0 0.0
    %3688 = vmatpush.msra.mxu0 0.0
    %3689 = vmatpush.msra.mxu0 0.0
    %3690 = vmatpush.msra.mxu0 0.0
    %3691 = vmatpush.msra.mxu0 0.0
    %3692 = vmatpush.msra.mxu0 0.0
    %3693 = vmatpush.msra.mxu0 0.0
    %3694 = vmatpush.msra.mxu0 0.0
    %3695 = vmatpush.msra.mxu0 0.0
    %3696 = vmatpush.msra.mxu0 0.0
    %3697 = vmatpush.msra.mxu0 0.0
    %3698 = vmatpush.msra.mxu0 0.0
    %3699 = vmatpush.msra.mxu0 0.0
    %3700 = vmatpush.msra.mxu0 %v3683
    %3701 = vmatpush.msra.mxu0 %v3681
    %3702 = vmatmul.f32.gmra.mxu0 %v3437
    %v3703 = vpop.f32.mrf.mxu0
    %v3704 = vadd.f32 0.0, %v3703
    %3705 = vdwg.mxu0
    %v3706 = vadd.f32 %v3679, %v3704
    %3707 = vrot.lane.b32.xlu0 %v3237, 72
    %v3708 = vpop.permute.xlu0 %3707
    %3709 = vrot.lane.b32.xlu0 %v3241, 72
    %v3710 = vpop.permute.xlu0 %3709
    %3713 = vmatpush.msra.mxu0 0.0
    %3714 = vmatpush.msra.mxu0 0.0
    %3715 = vmatpush.msra.mxu0 0.0
    %3716 = vmatpush.msra.mxu0 0.0
    %3717 = vmatpush.msra.mxu0 0.0
    %3718 = vmatpush.msra.mxu0 0.0
    %3719 = vmatpush.msra.mxu0 0.0
    %3720 = vmatpush.msra.mxu0 0.0
    %3721 = vmatpush.msra.mxu0 0.0
    %3722 = vmatpush.msra.mxu0 0.0
    %3723 = vmatpush.msra.mxu0 0.0
    %3724 = vmatpush.msra.mxu0 0.0
    %3725 = vmatpush.msra.mxu0 0.0
    %3726 = vmatpush.msra.mxu0 0.0
    %3727 = vmatpush.msra.mxu0 %v3710
    %3728 = vmatpush.msra.mxu0 %v3708
    %3729 = vmatmul.f32.gmra.mxu0 %v3469
    %v3730 = vpop.f32.mrf.mxu0
    %v3731 = vadd.f32 0.0, %v3730
    %3732 = vdwg.mxu0
    %v3733 = vadd.f32 %v3706, %v3731
    %3734 = vrot.lane.b32.xlu0 %v3237, 64
    %v3735 = vpop.permute.xlu0 %3734
    %3736 = vrot.lane.b32.xlu0 %v3241, 64
    %v3737 = vpop.permute.xlu0 %3736
    %3740 = vmatpush.msra.mxu0 0.0
    %3741 = vmatpush.msra.mxu0 0.0
    %3742 = vmatpush.msra.mxu0 0.0
    %3743 = vmatpush.msra.mxu0 0.0
    %3744 = vmatpush.msra.mxu0 0.0
    %3745 = vmatpush.msra.mxu0 0.0
    %3746 = vmatpush.msra.mxu0 0.0
    %3747 = vmatpush.msra.mxu0 0.0
    %3748 = vmatpush.msra.mxu0 0.0
    %3749 = vmatpush.msra.mxu0 0.0
    %3750 = vmatpush.msra.mxu0 0.0
    %3751 = vmatpush.msra.mxu0 0.0
    %3752 = vmatpush.msra.mxu0 0.0
    %3753 = vmatpush.msra.mxu0 0.0
    %3754 = vmatpush.msra.mxu0 %v3737
    %3755 = vmatpush.msra.mxu0 %v3735
    %3756 = vmatmul.f32.gmra.mxu0 %v3501
    %v3757 = vpop.f32.mrf.mxu0
    %v3758 = vadd.f32 0.0, %v3757
    %3759 = vdwg.mxu0
    %v3760 = vadd.f32 %v3733, %v3758
    %v3761 = vld [vmem:[%s9] sm:$0x1]
    %v3763 = vperm.slane %v3761, 0
    %v3765 = vadd.f32 %v3523, %v3763
    %v3766 = vmax.f32 %v3765, 0.0
    %vm3767 = vcmask 60416
    %3768 = vst.msk [vmem:[#allocation2] sm:$0xf] %vm3767, %v3766
    %v3769 = vld [vmem:[%s9] sm:$0x1]
    %v3771 = vperm.slane %v3769, 0
    %v3773 = vadd.f32 %v3760, %v3771
    %v3774 = vmax.f32 %v3773, 0.0
    %s3775 = scalar_lea.vmem [#allocation2], 4
    %3776 = vst.msk [vmem:[%s3775] sm:$0xf] %vm3767, %v3774
    // Predicated region
    $region42: #{proto_encoder_forward.1} parent=1 // pred_check
      _
    $region43: #{proto_encoder_forward.1} parent=1 // pred_check_branch
      %3778 = sbr.rel (0) target = $region45
    $region44: #{proto_encoder_forward.1} parent=1 // pred_region
      %3780 = vsyncadd [#allocation3], 0
      %s3781 = sshll.u32 [#allocation2], 4
      %s3782 = int_to_ptr.vmem [resolvable:$true] %s3781
      %s3783 = sshll.u32 %s10, 4
      %s3784 = int_to_ptr.hbm [resolvable:$true] %s3783
      %3789 = dma.vmem_to_hbm [thread:$0]  %s3782, 128, %s3784, [#allocation3], 64, 64, 4
    $region45: #{proto_encoder_forward.1} parent=1 // pred_fallthru
      _
    // Predicated region
    $region46: #{proto_encoder_forward.1} parent=1 // pred_check
      _
    $region47: #{proto_encoder_forward.1} parent=1 // pred_check_branch
      %3791 = sbr.rel (0) target = $region49
    $region48: #{proto_encoder_forward.1} parent=1 // pred_region
      %3793 = dma.done [#allocation3], 128
    $region49: #{proto_encoder_forward.1} parent=1 // pred_fallthru
      _
    %3794 = vsyncpa [#allocation3], 1

</llo_original>
